<compile_context>
chip_gen: v5e
topology: v5e:2x2
jax: 0.10.0
libtpu: 0.0.40
codegen_flags: <defaults>
</compile_context>

<pallas_src>
import functools

import jax
import jax.numpy as jnp
from jax.experimental import pallas as pl
from jax.experimental.pallas import tpu as pltpu


def _round_up(v, m):
    return ((v + m - 1) // m) * m


@functools.lru_cache(maxsize=None)
def _vmem_capacity_bytes():
    # Generation probe (v5e/v6e: 128 MiB VMEM, v7x: 64 MiB). Conservative
    # fallback if the query is unavailable.
    try:
        return int(pltpu.get_tpu_info().vmem_capacity_bytes)
    except Exception:
        return 64 * 1024 * 1024


@functools.lru_cache(maxsize=None)
def _vmem_budget():
    big = _vmem_capacity_bytes() >= 100 * 1024 * 1024
    # big VMEM (v5e/v6e): 64 MiB scoped limit, TM target 512 (review).
    # small VMEM (v7x):   40 MiB scoped limit, TM target 256 (review).
    return (64 * 1024 * 1024, 512) if big else (40 * 1024 * 1024, 256)


# ---------------------------------------------------------------------------
# Kernel A: fused (M,K)@(K,N) matmul + per-channel scale/bias (+residual)(+relu)
#           bf16 inputs, f32 accumulation, M x N tiled grid.
# ---------------------------------------------------------------------------
def _mm_bn_kernel(x_ref, w_ref, s_ref, b_ref, o_ref, *, relu):
    acc = jnp.dot(x_ref[...], w_ref[...], preferred_element_type=jnp.float32)
    out = acc * s_ref[...] + b_ref[...]
    if relu:
        out = jnp.maximum(out, 0.0)
    o_ref[...] = out.astype(o_ref.dtype)


def _mm_bn_res_kernel(x_ref, w_ref, s_ref, b_ref, r_ref, o_ref, *, relu):
    acc = jnp.dot(x_ref[...], w_ref[...], preferred_element_type=jnp.float32)
    out = acc * s_ref[...] + b_ref[...] + r_ref[...].astype(jnp.float32)
    if relu:
        out = jnp.maximum(out, 0.0)
    o_ref[...] = out.astype(o_ref.dtype)


def _pick_tm(M, target):
    # Prefer a tile that divides M exactly (avoids an extra XLA pad pass over
    # the activation / residual); all candidates are sublane-aligned (x8).
    for cand in (512, 448, 392, 384, 320, 256, 224, 128, 112, 64, 56, 32, 16, 8):
        if cand <= target and cand <= M and M % cand == 0:
            return cand, False
    if M >= target:
        return target, True
    return _round_up(M, 8), True


def fused_matmul_bn(x2d, w, scale, bias, residual=None, relu=False,
                    out_dtype=jnp.bfloat16):
    """out = [relu]((x2d @ w) * scale + bias [+ residual]), f32 accumulation."""
    M, K = x2d.shape
    Nout = w.shape[1]
    vmem_limit, tm_target = _vmem_budget()

    TM, needs_pad = _pick_tm(M, tm_target)
    Mp = _round_up(M, TM) if needs_pad else M

    if Nout % 512 == 0:
        TN = 512
    elif Nout % 256 == 0:
        TN = 256
    elif Nout % 128 == 0:
        TN = 128
    else:
        TN = Nout

    xb = x2d.astype(jnp.bfloat16)
    if Mp != M:
        xb = jnp.pad(xb, ((0, Mp - M), (0, 0)))
    wb = w.astype(jnp.bfloat16)

    # Grid order: keep the operand with the larger tile resident across the
    # inner axis so the refetched operand is the cheaper one (review item).
    swap = TN > TM
    if swap:
        grid = (Nout // TN, Mp // TM)
        x_map = lambda j, i: (i, 0)
        w_map = lambda j, i: (0, j)
        v_map = lambda j, i: (0, j)
        o_map = lambda j, i: (i, j)
    else:
        grid = (Mp // TM, Nout // TN)
        x_map = lambda i, j: (i, 0)
        w_map = lambda i, j: (0, j)
        v_map = lambda i, j: (0, j)
        o_map = lambda i, j: (i, j)

    in_specs = [
        pl.BlockSpec((TM, K), x_map),
        pl.BlockSpec((K, TN), w_map),
        pl.BlockSpec((1, TN), v_map),
        pl.BlockSpec((1, TN), v_map),
    ]
    args = [xb, wb, scale, bias]
    if residual is not None:
        rb = residual.astype(jnp.bfloat16)
        if Mp != M:
            rb = jnp.pad(rb, ((0, Mp - M), (0, 0)))
        in_specs.append(pl.BlockSpec((TM, TN), o_map))
        args.append(rb)
        kernel = functools.partial(_mm_bn_res_kernel, relu=relu)
    else:
        kernel = functools.partial(_mm_bn_kernel, relu=relu)

    out = pl.pallas_call(
        kernel,
        out_shape=jax.ShapeDtypeStruct((Mp, Nout), out_dtype),
        grid=grid,
        in_specs=in_specs,
        out_specs=pl.BlockSpec((TM, TN), o_map),
        compiler_params=pltpu.CompilerParams(
            dimension_semantics=("parallel", "parallel"),
            vmem_limit_bytes=vmem_limit,
        ),
    )(*args)
    return out[:M] if Mp != M else out


# ---------------------------------------------------------------------------
# Kernel B: 3x3 conv (stride 1, pad 1) + folded BN + ReLU.
#
# The padded image is flattened to ((H+2)*(W+2)+2, C) in glue. For output rows
# [t*TH, t*TH+TH) the kernel loads one sublane-aligned window of
# (TH+2)*(W+2)+2 rows; each tap is a contiguous static slice of that window:
# out_flat[h*Wp + w] = sum_taps window[dh*Wp + dw + h*Wp + w]. The output is
# stored in padded-width layout (N, H, Wp, D) with ONE aligned store per row
# tile; columns W, W+1 of each row are garbage and are dropped by the caller.
# ---------------------------------------------------------------------------
def _pick_th(H, Wp):
    # Row tile near 8 that divides H and keeps the flat (TH*Wp, D) output block
    # sublane-aligned; full-H fallback is always legal (block == full dim).
    for th in (8, 7, 6, 5, 4, 3, 2):
        if th <= H and H % th == 0 and (th * Wp) % 8 == 0:
            return th
    return H


def _conv3x3_bn_relu_kernel(xf_ref, w_ref, s_ref, b_ref, o_ref,
                            *, TH, Wp, C, D, fuse_taps):
    t = pl.program_id(1)
    rows = TH * Wp                         # flat padded-width output rows/tile
    win = rows + 2 * Wp + 2                # halo'd input window
    base = t * rows
    if rows % 8 == 0:
        base = pl.multiple_of(base, 8)     # aligned dynamic window load
    window = xf_ref[pl.ds(base, win), :]   # (win, C) bf16

    acc = None
    if fuse_taps:
        # 3 MXU calls with K=3C: keeps the 9-tap accumulation inside the MXU
        # instead of 9 read-modify-writes of the big f32 accumulator.
        for dh in range(3):
            off = dh * Wp
            x3 = jnp.concatenate(
                [window[off:off + rows],
                 window[off + 1:off + 1 + rows],
                 window[off + 2:off + 2 + rows]], axis=-1)          # (rows, 3C)
            d = jnp.dot(x3, w_ref[dh], preferred_element_type=jnp.float32)
            acc = d if acc is None else acc + d
    else:
        for dh in range(3):
            wdh = w_ref[dh]                                         # (3C, D)
            for dw in range(3):
                off = dh * Wp + dw
                d = jnp.dot(window[off:off + rows],
                            wdh[dw * C:(dw + 1) * C],
                            preferred_element_type=jnp.float32)
                acc = d if acc is None else acc + d

    out = jnp.maximum(acc * s_ref[...] + b_ref[...], 0.0)
    o_ref[...] = out.astype(o_ref.dtype)   # one aligned (rows, D) store


def conv3x3_bn_relu(x_nhwc, w_hwio, scale, bias, out_dtype=jnp.bfloat16):
    """3x3 / stride 1 / pad 1 conv + folded BN + ReLU.

    Returns the result in padded-width layout (N, H, W+2, D); the caller must
    drop the last two columns of each row (garbage from the flat layout).
    """
    N, H, W, C = x_nhwc.shape
    D = w_hwio.shape[-1]
    Hp, Wp = H + 2, W + 2
    TH = _pick_th(H, Wp)
    vmem_limit, _ = _vmem_budget()

    xp = jnp.pad(x_nhwc.astype(jnp.bfloat16), ((0, 0), (1, 1), (1, 1), (0, 0)))
    # Flatten spatial dims; +2 rows of slack for the (dh=2, dw=2) tap overrun.
    xf = jnp.pad(xp.reshape(N, Hp * Wp, C), ((0, 0), (0, 2), (0, 0)))
    L = Hp * Wp + 2
    # (3, 3C, D): per-dh weight with the three dw taps stacked along K.
    w2r = w_hwio.astype(jnp.bfloat16).reshape(3, 3 * C, D)

    # Lane-aligned channel counts use the fused K=3C path (3 MXU calls);
    # smaller channel counts keep the proven per-tap path.
    fuse_taps = (C % 128 == 0)

    kernel = functools.partial(_conv3x3_bn_relu_kernel, TH=TH, Wp=Wp, C=C, D=D,
                               fuse_taps=fuse_taps)
    yflat = pl.pallas_call(
        kernel,
        out_shape=jax.ShapeDtypeStruct((N, H * Wp, D), out_dtype),
        grid=(N, H // TH),
        in_specs=[
            # Full flat image per step; index map constant over the row axis,
            # so it is fetched once per image and re-used across row tiles.
            pl.BlockSpec((None, L, C), lambda n, t: (n, 0, 0)),
            pl.BlockSpec((3, 3 * C, D), lambda n, t: (0, 0, 0)),
            pl.BlockSpec((1, D), lambda n, t: (0, 0)),
            pl.BlockSpec((1, D), lambda n, t: (0, 0)),
        ],
        out_specs=pl.BlockSpec((None, TH * Wp, D), lambda n, t: (n, t, 0)),
        compiler_params=pltpu.CompilerParams(
            dimension_semantics=("parallel", "parallel"),
            vmem_limit_bytes=vmem_limit,
        ),
    )(xf, w2r, scale, bias)
    return yflat.reshape(N, H, Wp, D)


# ---------------------------------------------------------------------------
# BottleneckBlock forward (Pallas)
# ---------------------------------------------------------------------------
def fold_bn(gamma, beta, mean, var, eps=1e-5):
    scale = gamma / jnp.sqrt(var + eps)
    bias = beta - mean * scale
    return scale.reshape(1, -1), bias.reshape(1, -1)


def bottleneck_forward_nhwc(x_nhwc, p, stride=1):
    """NHWC-in / NHWC-out (bf16) variant (use when stacking blocks)."""
    N, H, W, Cin = x_nhwc.shape
    Cm = p["w1"].shape[-1]
    Cexp = p["w3"].shape[-1]
    xb = x_nhwc.astype(jnp.bfloat16)

    # conv1 (1x1) + bn1 + relu
    s1, b1 = fold_bn(*p["bn1"])
    y = fused_matmul_bn(xb.reshape(N * H * W, Cin), p["w1"][0, 0], s1, b1,
                        relu=True, out_dtype=jnp.bfloat16)
    y = y.reshape(N, H, W, Cm)

    # conv2 (3x3, pad 1, stride s) + bn2 + relu  -> padded-width layout
    s2, b2 = fold_bn(*p["bn2"])
    yp = conv3x3_bn_relu(y, p["w2"], s2, b2, out_dtype=jnp.bfloat16)
    # Drop the 2 padded-width garbage columns and apply the stride in one
    # fused slice.  TODO(synk): stride=2 still computed at stride 1 in-kernel.
    y2 = yp[:, ::stride, :W:stride, :]
    Ho, Wo = y2.shape[1], y2.shape[2]

    # downsample branch (1x1, stride s) + bn
    if p["wd"] is not None:
        xs = xb[:, ::stride, ::stride, :] if stride > 1 else xb
        sd, bd = fold_bn(*p["bnd"])
        identity = fused_matmul_bn(xs.reshape(N * Ho * Wo, Cin), p["wd"][0, 0],
                                   sd, bd, relu=False, out_dtype=jnp.bfloat16)
    else:
        identity = xb.reshape(N * Ho * Wo, Cexp)

    # conv3 (1x1) + bn3 + residual add + relu (fused), bf16 output
    s3, b3 = fold_bn(*p["bn3"])
    out = fused_matmul_bn(y2.reshape(N * Ho * Wo, Cm), p["w3"][0, 0], s3, b3,
                          residual=identity, relu=True, out_dtype=jnp.bfloat16)
    return out.reshape(N, Ho, Wo, Cexp)


@functools.partial(jax.jit, static_argnames=("stride",))
def bottleneck_forward(x_nchw, p, stride=1):
    x = jnp.transpose(x_nchw, (0, 2, 3, 1))          # NCHW -> NHWC
    out = bottleneck_forward_nhwc(x, p, stride)
    # cast fuses into the transpose; keeps the HBM write of `out` in bf16.
    return jnp.transpose(out, (0, 3, 1, 2)).astype(jnp.float32)


# ---------------------------------------------------------------------------
# Pure-JAX f32 reference mirroring the PyTorch forward (eval-mode BN)
# ---------------------------------------------------------------------------
def reference_forward(x_nchw, p, stride=1):
    eps = 1e-5

    def conv(x, w_hwio, s, pad):
        w_oihw = jnp.transpose(w_hwio, (3, 2, 0, 1))
        return jax.lax.conv_general_dilated(
            x, w_oihw, (s, s), [(pad, pad), (pad, pad)],
            dimension_numbers=("NCHW", "OIHW", "NCHW"),
            precision=jax.lax.Precision.HIGHEST)

    def bn(x, prm):
        g, b, m, v = prm
        inv = g / jnp.sqrt(v + eps)
        return x * inv[None, :, None, None] + (b - m * inv)[None, :, None, None]

    relu = lambda t: jnp.maximum(t, 0.0)
    out = relu(bn(conv(x_nchw, p["w1"], 1, 0), p["bn1"]))
    out = relu(bn(conv(out, p["w2"], stride, 1), p["bn2"]))
    out = bn(conv(out, p["w3"], 1, 0), p["bn3"])
    identity = x_nchw
    if p["wd"] is not None:
        identity = bn(conv(x_nchw, p["wd"], stride, 0), p["bnd"])
    return relu(out + identity)


# ---------------------------------------------------------------------------
# Deterministic parameter construction (shapes per BottleneckBlock.__init__)
# ---------------------------------------------------------------------------
def init_params(key, cin, cmid, stride, expansion=4):
    cexp = cmid * expansion
    ks = jax.random.split(key, 8)

    def conv_w(k, kh, kw, ci, co):
        fan_in = kh * kw * ci
        # stored as HWIO; PyTorch equivalent is OIHW = transpose(w, (3,2,0,1))
        return jax.random.normal(k, (kh, kw, ci, co), jnp.float32) / jnp.sqrt(fan_in)

    def bn_p(k, c):
        k1, k2, k3, k4 = jax.random.split(k, 4)
        gamma = 1.0 + 0.1 * jax.random.normal(k1, (c,), jnp.float32)
        beta = 0.1 * jax.random.normal(k2, (c,), jnp.float32)
        mean = 0.1 * jax.random.normal(k3, (c,), jnp.float32)
        var = jax.random.uniform(k4, (c,), jnp.float32, minval=0.5, maxval=1.5)
        return (gamma, beta, mean, var)

    p = {
        "w1": conv_w(ks[0], 1, 1, cin, cmid), "bn1": bn_p(ks[1], cmid),
        "w2": conv_w(ks[2], 3, 3, cmid, cmid), "bn2": bn_p(ks[3], cmid),
        "w3": conv_w(ks[4], 1, 1, cmid, cexp), "bn3": bn_p(ks[5], cexp),
    }
    if stride != 1 or cin != cexp:
        p["wd"] = conv_w(ks[6], 1, 1, cin, cexp)
        p["bnd"] = bn_p(ks[7], cexp)
    else:
        p["wd"] = None
        p["bnd"] = None
    return p


if __name__ == "__main__":
    key = jax.random.PRNGKey(0)
    k_x, k_p = jax.random.split(key)

    N, H, W = 2, 16, 16
    # (Cin, Cmid, stride): with/without downsample, with/without stride.
    configs = [(16, 8, 1), (16, 8, 2), (32, 8, 1)]

    for cin, cmid, stride in configs:
        x = jax.random.normal(k_x, (N, cin, H, W), jnp.float32)
        params = init_params(k_p, cin, cmid, stride)
        out = jax.block_until_ready(bottleneck_forward(x, params, stride=stride))
        ref = jax.block_until_ready(reference_forward(x, params, stride=stride))
        if out.shape != ref.shape:
            raise SystemExit(f"shape mismatch: {out.shape} vs {ref.shape}")
        # bf16 storage + f32 accumulation vs. pure-f32 reference.
        if not bool(jnp.allclose(out, ref, rtol=5e-2, atol=5e-2)):
            err = float(jnp.max(jnp.abs(out - ref)))
            raise SystemExit(
                f"numerical mismatch (cin={cin}, stride={stride}), max abs err={err}")

    print("KERNEL_OK")
</pallas_src>

<mosaic_0001>
module attributes {stable_mosaic.version = 11 : i64} {
  func.func @_mm_bn_kernel(%arg0: i32, %arg1: i32, %arg2: memref<256x16xbf16, #tpu.memory_space<vmem>>, %arg3: memref<16x8xbf16, #tpu.memory_space<vmem>>, %arg4: memref<1x8xf32, #tpu.memory_space<vmem>>, %arg5: memref<1x8xf32, #tpu.memory_space<vmem>>, %arg6: memref<256x8xbf16, #tpu.memory_space<vmem>>) attributes {dimension_semantics = [#tpu.dimension_semantics<parallel>, #tpu.dimension_semantics<parallel>], iteration_bounds = array<i64: 2, 1>, scalar_prefetch = 0 : i64, scratch_operands = 0 : i64, tpu.core_type = #tpu.core_type<tc>, window_params = [{transform_indices = @transform_0, window_bounds = array<i64: 256, 16>}, {transform_indices = @transform_1, window_bounds = array<i64: 16, 8>}, {transform_indices = @transform_2, window_bounds = array<i64: 1, 8>}, {transform_indices = @transform_3, window_bounds = array<i64: 1, 8>}, {transform_indices = @transform_4, window_bounds = array<i64: 256, 8>}]} {
    %c0 = arith.constant 0 : index
    %c0_0 = arith.constant 0 : index
    %0 = vector.load %arg2[%c0, %c0_0] : memref<256x16xbf16, #tpu.memory_space<vmem>>, vector<256x16xbf16>
    %c0_1 = arith.constant 0 : index
    %c0_2 = arith.constant 0 : index
    %1 = vector.load %arg3[%c0_1, %c0_2] : memref<16x8xbf16, #tpu.memory_space<vmem>>, vector<16x8xbf16>
    %cst = arith.constant dense<0.000000e+00> : vector<256x8xf32>
    %2 = tpu.matmul %0, %1, %cst {dimension_numbers = #tpu.dot_dimension_numbers<[1], [0], [0], [1], [0, 0, 1, 1], [], []>} : vector<256x16xbf16>, vector<16x8xbf16>, vector<256x8xf32> -> vector<256x8xf32>
    %c0_3 = arith.constant 0 : index
    %c0_4 = arith.constant 0 : index
    %3 = vector.load %arg4[%c0_3, %c0_4] : memref<1x8xf32, #tpu.memory_space<vmem>>, vector<1x8xf32>
    %4 = vector.broadcast %3 : vector<1x8xf32> to vector<256x8xf32>
    %5 = arith.mulf %2, %4 : vector<256x8xf32>
    %c0_5 = arith.constant 0 : index
    %c0_6 = arith.constant 0 : index
    %6 = vector.load %arg5[%c0_5, %c0_6] : memref<1x8xf32, #tpu.memory_space<vmem>>, vector<1x8xf32>
    %7 = vector.broadcast %6 : vector<1x8xf32> to vector<256x8xf32>
    %8 = arith.addf %5, %7 : vector<256x8xf32>
    %cst_7 = arith.constant 0.000000e+00 : f32
    %9 = vector.broadcast %cst_7 : f32 to vector<256x8xf32>
    %10 = arith.maximumf %8, %9 : vector<256x8xf32>
    %11 = arith.truncf %10 : vector<256x8xf32> to vector<256x8xbf16>
    %c0_8 = arith.constant 0 : index
    %c0_9 = arith.constant 0 : index
    %12 = vector.load %arg6[%c0_8, %c0_9] : memref<256x8xbf16, #tpu.memory_space<vmem>>, vector<256x8xbf16>
    tpu.vector_store %arg6[%c0_8, %c0_9], %11 {strides = array<i32>} : memref<256x8xbf16, #tpu.memory_space<vmem>>, vector<256x8xbf16>,
    return
  }
  func.func @transform_0(%arg0: i32, %arg1: i32) -> (i32, i32) {
    %c0_i32 = arith.constant 0 : i32
    %c0_i32_0 = arith.constant 0 : i32
    return %arg0, %c0_i32 : i32, i32
  }
  func.func @transform_1(%arg0: i32, %arg1: i32) -> (i32, i32) {
    %c0_i32 = arith.constant 0 : i32
    %c0_i32_0 = arith.constant 0 : i32
    return %c0_i32, %arg1 : i32, i32
  }
  func.func @transform_2(%arg0: i32, %arg1: i32) -> (i32, i32) {
    %c0_i32 = arith.constant 0 : i32
    %c0_i32_0 = arith.constant 0 : i32
    return %c0_i32, %arg1 : i32, i32
  }
  func.func @transform_3(%arg0: i32, %arg1: i32) -> (i32, i32) {
    %c0_i32 = arith.constant 0 : i32
    %c0_i32_0 = arith.constant 0 : i32
    return %c0_i32, %arg1 : i32, i32
  }
  func.func @transform_4(%arg0: i32, %arg1: i32) -> (i32, i32) {
    %c0_i32 = arith.constant 0 : i32
    return %arg0, %arg1 : i32, i32
  }
}

module attributes {stable_mosaic.version = 11 : i64} {
  func.func @_conv3x3_bn_relu_kernel(%arg0: i32, %arg1: i32, %arg2: memref<1x326x8xbf16, #tpu.memory_space<vmem>>, %arg3: memref<3x24x8xbf16, #tpu.memory_space<vmem>>, %arg4: memref<1x8xf32, #tpu.memory_space<vmem>>, %arg5: memref<1x8xf32, #tpu.memory_space<vmem>>, %arg6: memref<1x144x8xbf16, #tpu.memory_space<vmem>>) attributes {dimension_semantics = [#tpu.dimension_semantics<parallel>, #tpu.dimension_semantics<parallel>], iteration_bounds = array<i64: 2, 2>, scalar_prefetch = 0 : i64, scratch_operands = 0 : i64, tpu.core_type = #tpu.core_type<tc>, window_params = [{transform_indices = @transform_0, window_bounds = array<i64: 1, 326, 8>}, {pipeline_mode = #tpu.pipeline_mode<synchronous>, transform_indices = @transform_1, window_bounds = array<i64: 3, 24, 8>}, {pipeline_mode = #tpu.pipeline_mode<synchronous>, transform_indices = @transform_2, window_bounds = array<i64: 1, 8>}, {pipeline_mode = #tpu.pipeline_mode<synchronous>, transform_indices = @transform_3, window_bounds = array<i64: 1, 8>}, {transform_indices = @transform_4, window_bounds = array<i64: 1, 144, 8>}]} {
    %c144_i32 = arith.constant 144 : i32
    %0 = arith.muli %arg1, %c144_i32 : i32
    %1 = tpu.assume_multiple %0, 8 : i32
    %c0 = arith.constant 0 : index
    %2 = arith.index_cast %1 : i32 to index
    %c0_0 = arith.constant 0 : index
    %3 = vector.load %arg2[%c0, %2, %c0_0] : memref<1x326x8xbf16, #tpu.memory_space<vmem>>, vector<1x182x8xbf16>
    %4 = vector.shape_cast %3 : vector<1x182x8xbf16> to vector<182x8xbf16>
    %c0_1 = arith.constant 0 : index
    %c0_2 = arith.constant 0 : index
    %c0_3 = arith.constant 0 : index
    %5 = vector.load %arg3[%c0_1, %c0_2, %c0_3] : memref<3x24x8xbf16, #tpu.memory_space<vmem>>, vector<1x24x8xbf16>
    %6 = vector.shape_cast %5 : vector<1x24x8xbf16> to vector<24x8xbf16>
    %7 = vector.extract_strided_slice %4 {offsets = [0, 0], sizes = [144, 8], strides = [1, 1]} : vector<182x8xbf16> to vector<144x8xbf16>
    %8 = vector.extract_strided_slice %6 {offsets = [0, 0], sizes = [8, 8], strides = [1, 1]} : vector<24x8xbf16> to vector<8x8xbf16>
    %cst = arith.constant dense<0.000000e+00> : vector<144x8xf32>
    %9 = tpu.matmul %7, %8, %cst {dimension_numbers = #tpu.dot_dimension_numbers<[1], [0], [0], [1], [0, 0, 1, 1], [], []>} : vector<144x8xbf16>, vector<8x8xbf16>, vector<144x8xf32> -> vector<144x8xf32>
    %10 = vector.extract_strided_slice %4 {offsets = [1, 0], sizes = [144, 8], strides = [1, 1]} : vector<182x8xbf16> to vector<144x8xbf16>
    %11 = vector.extract_strided_slice %6 {offsets = [8, 0], sizes = [8, 8], strides = [1, 1]} : vector<24x8xbf16> to vector<8x8xbf16>
    %cst_4 = arith.constant dense<0.000000e+00> : vector<144x8xf32>
    %12 = tpu.matmul %10, %11, %cst_4 {dimension_numbers = #tpu.dot_dimension_numbers<[1], [0], [0], [1], [0, 0, 1, 1], [], []>} : vector<144x8xbf16>, vector<8x8xbf16>, vector<144x8xf32> -> vector<144x8xf32>
    %13 = arith.addf %9, %12 : vector<144x8xf32>
    %14 = vector.extract_strided_slice %4 {offsets = [2, 0], sizes = [144, 8], strides = [1, 1]} : vector<182x8xbf16> to vector<144x8xbf16>
    %15 = vector.extract_strided_slice %6 {offsets = [16, 0], sizes = [8, 8], strides = [1, 1]} : vector<24x8xbf16> to vector<8x8xbf16>
    %cst_5 = arith.constant dense<0.000000e+00> : vector<144x8xf32>
    %16 = tpu.matmul %14, %15, %cst_5 {dimension_numbers = #tpu.dot_dimension_numbers<[1], [0], [0], [1], [0, 0, 1, 1], [], []>} : vector<144x8xbf16>, vector<8x8xbf16>, vector<144x8xf32> -> vector<144x8xf32>
    %17 = arith.addf %13, %16 : vector<144x8xf32>
    %c1 = arith.constant 1 : index
    %c0_6 = arith.constant 0 : index
    %c0_7 = arith.constant 0 : index
    %18 = vector.load %arg3[%c1, %c0_6, %c0_7] : memref<3x24x8xbf16, #tpu.memory_space<vmem>>, vector<1x24x8xbf16>
    %19 = vector.shape_cast %18 : vector<1x24x8xbf16> to vector<24x8xbf16>
    %20 = vector.extract_strided_slice %4 {offsets = [18, 0], sizes = [144, 8], strides = [1, 1]} : vector<182x8xbf16> to vector<144x8xbf16>
    %21 = vector.extract_strided_slice %19 {offsets = [0, 0], sizes = [8, 8], strides = [1, 1]} : vector<24x8xbf16> to vector<8x8xbf16>
    %cst_8 = arith.constant dense<0.000000e+00> : vector<144x8xf32>
    %22 = tpu.matmul %20, %21, %cst_8 {dimension_numbers = #tpu.dot_dimension_numbers<[1], [0], [0], [1], [0, 0, 1, 1], [], []>} : vector<144x8xbf16>, vector<8x8xbf16>, vector<144x8xf32> -> vector<144x8xf32>
    %23 = arith.addf %17, %22 : vector<144x8xf32>
    %24 = vector.extract_strided_slice %4 {offsets = [19, 0], sizes = [144, 8], strides = [1, 1]} : vector<182x8xbf16> to vector<144x8xbf16>
    %25 = vector.extract_strided_slice %19 {offsets = [8, 0], sizes = [8, 8], strides = [1, 1]} : vector<24x8xbf16> to vector<8x8xbf16>
    %cst_9 = arith.constant dense<0.000000e+00> : vector<144x8xf32>
    %26 = tpu.matmul %24, %25, %cst_9 {dimension_numbers = #tpu.dot_dimension_numbers<[1], [0], [0], [1], [0, 0, 1, 1], [], []>} : vector<144x8xbf16>, vector<8x8xbf16>, vector<144x8xf32> -> vector<144x8xf32>
    %27 = arith.addf %23, %26 : vector<144x8xf32>
    %28 = vector.extract_strided_slice %4 {offsets = [20, 0], sizes = [144, 8], strides = [1, 1]} : vector<182x8xbf16> to vector<144x8xbf16>
    %29 = vector.extract_strided_slice %19 {offsets = [16, 0], sizes = [8, 8], strides = [1, 1]} : vector<24x8xbf16> to vector<8x8xbf16>
    %cst_10 = arith.constant dense<0.000000e+00> : vector<144x8xf32>
    %30 = tpu.matmul %28, %29, %cst_10 {dimension_numbers = #tpu.dot_dimension_numbers<[1], [0], [0], [1], [0, 0, 1, 1], [], []>} : vector<144x8xbf16>, vector<8x8xbf16>, vector<144x8xf32> -> vector<144x8xf32>
    %31 = arith.addf %27, %30 : vector<144x8xf32>
    %c2 = arith.constant 2 : index
    %c0_11 = arith.constant 0 : index
    %c0_12 = arith.constant 0 : index
    %32 = vector.load %arg3[%c2, %c0_11, %c0_12] : memref<3x24x8xbf16, #tpu.memory_space<vmem>>, vector<1x24x8xbf16>
    %33 = vector.shape_cast %32 : vector<1x24x8xbf16> to vector<24x8xbf16>
    %34 = vector.extract_strided_slice %4 {offsets = [36, 0], sizes = [144, 8], strides = [1, 1]} : vector<182x8xbf16> to vector<144x8xbf16>
    %35 = vector.extract_strided_slice %33 {offsets = [0, 0], sizes = [8, 8], strides = [1, 1]} : vector<24x8xbf16> to vector<8x8xbf16>
    %cst_13 = arith.constant dense<0.000000e+00> : vector<144x8xf32>
    %36 = tpu.matmul %34, %35, %cst_13 {dimension_numbers = #tpu.dot_dimension_numbers<[1], [0], [0], [1], [0, 0, 1, 1], [], []>} : vector<144x8xbf16>, vector<8x8xbf16>, vector<144x8xf32> -> vector<144x8xf32>
    %37 = arith.addf %31, %36 : vector<144x8xf32>
    %38 = vector.extract_strided_slice %4 {offsets = [37, 0], sizes = [144, 8], strides = [1, 1]} : vector<182x8xbf16> to vector<144x8xbf16>
    %39 = vector.extract_strided_slice %33 {offsets = [8, 0], sizes = [8, 8], strides = [1, 1]} : vector<24x8xbf16> to vector<8x8xbf16>
    %cst_14 = arith.constant dense<0.000000e+00> : vector<144x8xf32>
    %40 = tpu.matmul %38, %39, %cst_14 {dimension_numbers = #tpu.dot_dimension_numbers<[1], [0], [0], [1], [0, 0, 1, 1], [], []>} : vector<144x8xbf16>, vector<8x8xbf16>, vector<144x8xf32> -> vector<144x8xf32>
    %41 = arith.addf %37, %40 : vector<144x8xf32>
    %42 = vector.extract_strided_slice %4 {offsets = [38, 0], sizes = [144, 8], strides = [1, 1]} : vector<182x8xbf16> to vector<144x8xbf16>
    %43 = vector.extract_strided_slice %33 {offsets = [16, 0], sizes = [8, 8], strides = [1, 1]} : vector<24x8xbf16> to vector<8x8xbf16>
    %cst_15 = arith.constant dense<0.000000e+00> : vector<144x8xf32>
    %44 = tpu.matmul %42, %43, %cst_15 {dimension_numbers = #tpu.dot_dimension_numbers<[1], [0], [0], [1], [0, 0, 1, 1], [], []>} : vector<144x8xbf16>, vector<8x8xbf16>, vector<144x8xf32> -> vector<144x8xf32>
    %45 = arith.addf %41, %44 : vector<144x8xf32>
    %c0_16 = arith.constant 0 : index
    %c0_17 = arith.constant 0 : index
    %46 = vector.load %arg4[%c0_16, %c0_17] : memref<1x8xf32, #tpu.memory_space<vmem>>, vector<1x8xf32>
    %47 = vector.broadcast %46 : vector<1x8xf32> to vector<144x8xf32>
    %48 = arith.mulf %45, %47 : vector<144x8xf32>
    %c0_18 = arith.constant 0 : index
    %c0_19 = arith.constant 0 : index
    %49 = vector.load %arg5[%c0_18, %c0_19] : memref<1x8xf32, #tpu.memory_space<vmem>>, vector<1x8xf32>
    %50 = vector.broadcast %49 : vector<1x8xf32> to vector<144x8xf32>
    %51 = arith.addf %48, %50 : vector<144x8xf32>
    %cst_20 = arith.constant 0.000000e+00 : f32
    %52 = vector.broadcast %cst_20 : f32 to vector<144x8xf32>
    %53 = arith.maximumf %51, %52 : vector<144x8xf32>
    %54 = arith.truncf %53 : vector<144x8xf32> to vector<144x8xbf16>
    %c0_21 = arith.constant 0 : index
    %c0_22 = arith.constant 0 : index
    %c0_23 = arith.constant 0 : index
    %55 = vector.load %arg6[%c0_21, %c0_22, %c0_23] : memref<1x144x8xbf16, #tpu.memory_space<vmem>>, vector<1x144x8xbf16>
    %56 = vector.shape_cast %55 : vector<1x144x8xbf16> to vector<144x8xbf16>
    %57 = vector.shape_cast %54 : vector<144x8xbf16> to vector<1x144x8xbf16>
    tpu.vector_store %arg6[%c0_21, %c0_22, %c0_23], %57 {strides = array<i32>} : memref<1x144x8xbf16, #tpu.memory_space<vmem>>, vector<1x144x8xbf16>,
    return
  }
  func.func @transform_0(%arg0: i32, %arg1: i32) -> (i32, i32, i32) {
    %c0_i32 = arith.constant 0 : i32
    %c0_i32_0 = arith.constant 0 : i32
    %c0_i32_1 = arith.constant 0 : i32
    return %arg0, %c0_i32, %c0_i32_0 : i32, i32, i32
  }
  func.func @transform_1(%arg0: i32, %arg1: i32) -> (i32, i32, i32) {
    %c0_i32 = arith.constant 0 : i32
    %c0_i32_0 = arith.constant 0 : i32
    %c0_i32_1 = arith.constant 0 : i32
    %c0_i32_2 = arith.constant 0 : i32
    return %c0_i32, %c0_i32_0, %c0_i32_1 : i32, i32, i32
  }
  func.func @transform_2(%arg0: i32, %arg1: i32) -> (i32, i32) {
    %c0_i32 = arith.constant 0 : i32
    %c0_i32_0 = arith.constant 0 : i32
    %c0_i32_1 = arith.constant 0 : i32
    return %c0_i32, %c0_i32_0 : i32, i32
  }
  func.func @transform_3(%arg0: i32, %arg1: i32) -> (i32, i32) {
    %c0_i32 = arith.constant 0 : i32
    %c0_i32_0 = arith.constant 0 : i32
    %c0_i32_1 = arith.constant 0 : i32
    return %c0_i32, %c0_i32_0 : i32, i32
  }
  func.func @transform_4(%arg0: i32, %arg1: i32) -> (i32, i32, i32) {
    %c0_i32 = arith.constant 0 : i32
    %c0_i32_0 = arith.constant 0 : i32
    return %arg0, %arg1, %c0_i32 : i32, i32, i32
  }
}

module attributes {stable_mosaic.version = 11 : i64} {
  func.func @_mm_bn_kernel(%arg0: i32, %arg1: i32, %arg2: memref<256x16xbf16, #tpu.memory_space<vmem>>, %arg3: memref<16x32xbf16, #tpu.memory_space<vmem>>, %arg4: memref<1x32xf32, #tpu.memory_space<vmem>>, %arg5: memref<1x32xf32, #tpu.memory_space<vmem>>, %arg6: memref<256x32xbf16, #tpu.memory_space<vmem>>) attributes {dimension_semantics = [#tpu.dimension_semantics<parallel>, #tpu.dimension_semantics<parallel>], iteration_bounds = array<i64: 2, 1>, scalar_prefetch = 0 : i64, scratch_operands = 0 : i64, tpu.core_type = #tpu.core_type<tc>, window_params = [{transform_indices = @transform_0, window_bounds = array<i64: 256, 16>}, {transform_indices = @transform_1, window_bounds = array<i64: 16, 32>}, {transform_indices = @transform_2, window_bounds = array<i64: 1, 32>}, {transform_indices = @transform_3, window_bounds = array<i64: 1, 32>}, {transform_indices = @transform_4, window_bounds = array<i64: 256, 32>}]} {
    %c0 = arith.constant 0 : index
    %c0_0 = arith.constant 0 : index
    %0 = vector.load %arg2[%c0, %c0_0] : memref<256x16xbf16, #tpu.memory_space<vmem>>, vector<256x16xbf16>
    %c0_1 = arith.constant 0 : index
    %c0_2 = arith.constant 0 : index
    %1 = vector.load %arg3[%c0_1, %c0_2] : memref<16x32xbf16, #tpu.memory_space<vmem>>, vector<16x32xbf16>
    %cst = arith.constant dense<0.000000e+00> : vector<256x32xf32>
    %2 = tpu.matmul %0, %1, %cst {dimension_numbers = #tpu.dot_dimension_numbers<[1], [0], [0], [1], [0, 0, 1, 1], [], []>} : vector<256x16xbf16>, vector<16x32xbf16>, vector<256x32xf32> -> vector<256x32xf32>
    %c0_3 = arith.constant 0 : index
    %c0_4 = arith.constant 0 : index
    %3 = vector.load %arg4[%c0_3, %c0_4] : memref<1x32xf32, #tpu.memory_space<vmem>>, vector<1x32xf32>
    %4 = vector.broadcast %3 : vector<1x32xf32> to vector<256x32xf32>
    %5 = arith.mulf %2, %4 : vector<256x32xf32>
    %c0_5 = arith.constant 0 : index
    %c0_6 = arith.constant 0 : index
    %6 = vector.load %arg5[%c0_5, %c0_6] : memref<1x32xf32, #tpu.memory_space<vmem>>, vector<1x32xf32>
    %7 = vector.broadcast %6 : vector<1x32xf32> to vector<256x32xf32>
    %8 = arith.addf %5, %7 : vector<256x32xf32>
    %9 = arith.truncf %8 : vector<256x32xf32> to vector<256x32xbf16>
    %c0_7 = arith.constant 0 : index
    %c0_8 = arith.constant 0 : index
    %10 = vector.load %arg6[%c0_7, %c0_8] : memref<256x32xbf16, #tpu.memory_space<vmem>>, vector<256x32xbf16>
    tpu.vector_store %arg6[%c0_7, %c0_8], %9 {strides = array<i32>} : memref<256x32xbf16, #tpu.memory_space<vmem>>, vector<256x32xbf16>,
    return
  }
  func.func @transform_0(%arg0: i32, %arg1: i32) -> (i32, i32) {
    %c0_i32 = arith.constant 0 : i32
    %c0_i32_0 = arith.constant 0 : i32
    return %arg0, %c0_i32 : i32, i32
  }
  func.func @transform_1(%arg0: i32, %arg1: i32) -> (i32, i32) {
    %c0_i32 = arith.constant 0 : i32
    %c0_i32_0 = arith.constant 0 : i32
    return %c0_i32, %arg1 : i32, i32
  }
  func.func @transform_2(%arg0: i32, %arg1: i32) -> (i32, i32) {
    %c0_i32 = arith.constant 0 : i32
    %c0_i32_0 = arith.constant 0 : i32
    return %c0_i32, %arg1 : i32, i32
  }
  func.func @transform_3(%arg0: i32, %arg1: i32) -> (i32, i32) {
    %c0_i32 = arith.constant 0 : i32
    %c0_i32_0 = arith.constant 0 : i32
    return %c0_i32, %arg1 : i32, i32
  }
  func.func @transform_4(%arg0: i32, %arg1: i32) -> (i32, i32) {
    %c0_i32 = arith.constant 0 : i32
    return %arg0, %arg1 : i32, i32
  }
}

module attributes {stable_mosaic.version = 11 : i64} {
  func.func @_mm_bn_res_kernel(%arg0: i32, %arg1: i32, %arg2: memref<256x8xbf16, #tpu.memory_space<vmem>>, %arg3: memref<8x32xbf16, #tpu.memory_space<vmem>>, %arg4: memref<1x32xf32, #tpu.memory_space<vmem>>, %arg5: memref<1x32xf32, #tpu.memory_space<vmem>>, %arg6: memref<256x32xbf16, #tpu.memory_space<vmem>>, %arg7: memref<256x32xbf16, #tpu.memory_space<vmem>>) attributes {dimension_semantics = [#tpu.dimension_semantics<parallel>, #tpu.dimension_semantics<parallel>], iteration_bounds = array<i64: 2, 1>, scalar_prefetch = 0 : i64, scratch_operands = 0 : i64, tpu.core_type = #tpu.core_type<tc>, window_params = [{transform_indices = @transform_0, window_bounds = array<i64: 256, 8>}, {transform_indices = @transform_1, window_bounds = array<i64: 8, 32>}, {transform_indices = @transform_2, window_bounds = array<i64: 1, 32>}, {transform_indices = @transform_3, window_bounds = array<i64: 1, 32>}, {transform_indices = @transform_4, window_bounds = array<i64: 256, 32>}, {transform_indices = @transform_5, window_bounds = array<i64: 256, 32>}]} {
    %c0 = arith.constant 0 : index
    %c0_0 = arith.constant 0 : index
    %0 = vector.load %arg2[%c0, %c0_0] : memref<256x8xbf16, #tpu.memory_space<vmem>>, vector<256x8xbf16>
    %c0_1 = arith.constant 0 : index
    %c0_2 = arith.constant 0 : index
    %1 = vector.load %arg3[%c0_1, %c0_2] : memref<8x32xbf16, #tpu.memory_space<vmem>>, vector<8x32xbf16>
    %cst = arith.constant dense<0.000000e+00> : vector<256x32xf32>
    %2 = tpu.matmul %0, %1, %cst {dimension_numbers = #tpu.dot_dimension_numbers<[1], [0], [0], [1], [0, 0, 1, 1], [], []>} : vector<256x8xbf16>, vector<8x32xbf16>, vector<256x32xf32> -> vector<256x32xf32>
    %c0_3 = arith.constant 0 : index
    %c0_4 = arith.constant 0 : index
    %3 = vector.load %arg4[%c0_3, %c0_4] : memref<1x32xf32, #tpu.memory_space<vmem>>, vector<1x32xf32>
    %4 = vector.broadcast %3 : vector<1x32xf32> to vector<256x32xf32>
    %5 = arith.mulf %2, %4 : vector<256x32xf32>
    %c0_5 = arith.constant 0 : index
    %c0_6 = arith.constant 0 : index
    %6 = vector.load %arg5[%c0_5, %c0_6] : memref<1x32xf32, #tpu.memory_space<vmem>>, vector<1x32xf32>
    %7 = vector.broadcast %6 : vector<1x32xf32> to vector<256x32xf32>
    %8 = arith.addf %5, %7 : vector<256x32xf32>
    %c0_7 = arith.constant 0 : index
    %c0_8 = arith.constant 0 : index
    %9 = vector.load %arg6[%c0_7, %c0_8] : memref<256x32xbf16, #tpu.memory_space<vmem>>, vector<256x32xbf16>
    %10 = arith.extf %9 : vector<256x32xbf16> to vector<256x32xf32>
    %11 = arith.addf %8, %10 : vector<256x32xf32>
    %cst_9 = arith.constant 0.000000e+00 : f32
    %12 = vector.broadcast %cst_9 : f32 to vector<256x32xf32>
    %13 = arith.maximumf %11, %12 : vector<256x32xf32>
    %14 = arith.truncf %13 : vector<256x32xf32> to vector<256x32xbf16>
    %c0_10 = arith.constant 0 : index
    %c0_11 = arith.constant 0 : index
    %15 = vector.load %arg7[%c0_10, %c0_11] : memref<256x32xbf16, #tpu.memory_space<vmem>>, vector<256x32xbf16>
    tpu.vector_store %arg7[%c0_10, %c0_11], %14 {strides = array<i32>} : memref<256x32xbf16, #tpu.memory_space<vmem>>, vector<256x32xbf16>,
    return
  }
  func.func @transform_0(%arg0: i32, %arg1: i32) -> (i32, i32) {
    %c0_i32 = arith.constant 0 : i32
    %c0_i32_0 = arith.constant 0 : i32
    return %arg0, %c0_i32 : i32, i32
  }
  func.func @transform_1(%arg0: i32, %arg1: i32) -> (i32, i32) {
    %c0_i32 = arith.constant 0 : i32
    %c0_i32_0 = arith.constant 0 : i32
    return %c0_i32, %arg1 : i32, i32
  }
  func.func @transform_2(%arg0: i32, %arg1: i32) -> (i32, i32) {
    %c0_i32 = arith.constant 0 : i32
    %c0_i32_0 = arith.constant 0 : i32
    return %c0_i32, %arg1 : i32, i32
  }
  func.func @transform_3(%arg0: i32, %arg1: i32) -> (i32, i32) {
    %c0_i32 = arith.constant 0 : i32
    %c0_i32_0 = arith.constant 0 : i32
    return %c0_i32, %arg1 : i32, i32
  }
  func.func @transform_4(%arg0: i32, %arg1: i32) -> (i32, i32) {
    %c0_i32 = arith.constant 0 : i32
    return %arg0, %arg1 : i32, i32
  }
  func.func @transform_5(%arg0: i32, %arg1: i32) -> (i32, i32) {
    %c0_i32 = arith.constant 0 : i32
    return %arg0, %arg1 : i32, i32
  }
}

</mosaic_0001>

<llo_original>
// kernel: bottleneck_forward.4
$region0: #{bottleneck_forward.4}
  #allocation0 [shape = 'u32[]', space=smem, size = 0x4, offset = 0x4, fixed_abs, tag = 'smem constant byte address 0x4 - core index']
  #allocation1 [shape = 'u32[72,128]{1,0:T(1,128)}', space=vmem, size = 0x9000, scoped, tag = 'internal scratch']
  %s0 = inlined_call_operand.vmem [shape: bf16[512,16], index: 0, kind: input, shape index: {}]
  %s1 = inlined_call_operand.vmem [shape: bf16[16,8], index: 1, kind: input, shape index: {}]
  %s2 = inlined_call_operand.vmem [shape: f32[1,8], index: 2, kind: input, shape index: {}]
  %s3 = inlined_call_operand.vmem [shape: f32[1,8], index: 3, kind: input, shape index: {}]
  %s4 = inlined_call_operand.vmem [shape: bf16[512,8], index: 4, kind: output, shape index: {}]
  %s5 = sld [smem:[#allocation0]]
  $region49: #{bottleneck_forward.4} parent=0
    _
  %s7 = ssub.s32 1, %s5
  %s8 = scalar_select 0, %s7, %s5
  loop: start=0, step=1, limit=4
  $region2: #{bottleneck_forward.4} parent=0 // loop_pre_header
    _
  $region3: #{bottleneck_forward.4} parent=0 // loop_header
    %s10 = sphi 0, %s14
    %p11 = scmp.ge.s32.totalorder %s10, 4
    %s17 = sphi 0, %s29
    %s18 = sphi 0, %s25
    %s19 = sphi 0, %s17
    %s20 = sphi 0, %s18
    %s21 = sphi 0, %s19
    %s22 = sphi 0, %s20
    %s32 = sphi 0, %s34
    %s35 = sphi 0, %s32
    %s36 = sphi 0, %s35
    %s52 = sphi 0, %s36
    %s58 = sphi 0, %s60
    %s61 = sphi 0, %s58
    %s62 = sphi 0, %s61
    %s78 = sphi 0, %s62
    %s84 = sphi 0, %s86
    %s87 = sphi 0, %s84
    %s88 = sphi 0, %s87
    %s104 = sphi 0, %s88
    %s110 = sphi 0, %s112
    %s113 = sphi 0, %s110
    %s114 = sphi 0, %s113
    %s130 = sphi 0, %s114
    %s138 = sphi 0, %s140
    %s141 = sphi 0, %s138
    %s142 = sphi 0, %s141
    %s158 = sphi 0, %s142
  $region4: #{bottleneck_forward.4} parent=0 // loop_header_branch
    %13 = sbr.rel (%p11) target = $region8
  $region5: #{bottleneck_forward.4} parent=0 // loop_body
    %s15 = ssub.s32 %s10, 1
    %s16 = ssub.s32 %s10, 2
    %s23 = sadd.s32 1, %s18
    %p24 = scmp.ge.s32.totalorder %s23, 1
    %s25 = scalar_select %p24, 0, %s23
    %s26 = sadd.s32 1, %s17
    %s27 = scalar_select %p24, %s26, %s17
    %p28 = scmp.ge.s32.totalorder %s27, 2
    %s29 = scalar_select %p28, 0, %s27
    %s30 = ssub.s32 %s17, %s29
    %p31 = scmp.eq.s32.totalorder %s30, 0
    %s33 = sadd.s32 %s32, 1
    %s34 = scalar_select %p31, %s32, %s33
    %p37 = pneg %p31
    %p38 = scmp.eq.s32.totalorder %s10, 1
    %p39 = por %p37, %p38
    %p40 = scmp.ne.s32.totalorder %s32, %s35
    %p41 = scmp.eq.s32.totalorder %s10, 0
    %p42 = por %p40, %p41
    %p43 = scmp.ne.s32.totalorder %s32, %s35
    %p44 = scmp.eq.s32.totalorder %s15, 1
    %p45 = por %p43, %p44
    %p46 = scmp.ne.s32.totalorder %s35, %s36
    %p47 = scmp.eq.s32.totalorder %s15, 0
    %p48 = por %p46, %p47
    %p49 = scmp.ne.s32.totalorder %s35, %s36
    %p50 = scmp.eq.s32.totalorder %s16, 1
    %p51 = por %p49, %p50
    %p53 = scmp.ne.s32.totalorder %s36, %s52
    %p54 = scmp.eq.s32.totalorder %s16, 0
    %p55 = por %p53, %p54
    %s56 = ssub.s32 %s18, %s25
    %p57 = scmp.eq.s32.totalorder %s56, 0
    %s59 = sadd.s32 %s58, 1
    %s60 = scalar_select %p57, %s58, %s59
    %p63 = pneg %p57
    %p64 = scmp.eq.s32.totalorder %s10, 1
    %p65 = por %p63, %p64
    %p66 = scmp.ne.s32.totalorder %s58, %s61
    %p67 = scmp.eq.s32.totalorder %s10, 0
    %p68 = por %p66, %p67
    %p69 = scmp.ne.s32.totalorder %s58, %s61
    %p70 = scmp.eq.s32.totalorder %s15, 1
    %p71 = por %p69, %p70
    %p72 = scmp.ne.s32.totalorder %s61, %s62
    %p73 = scmp.eq.s32.totalorder %s15, 0
    %p74 = por %p72, %p73
    %p75 = scmp.ne.s32.totalorder %s61, %s62
    %p76 = scmp.eq.s32.totalorder %s16, 1
    %p77 = por %p75, %p76
    %p79 = scmp.ne.s32.totalorder %s62, %s78
    %p80 = scmp.eq.s32.totalorder %s16, 0
    %p81 = por %p79, %p80
    %s82 = ssub.s32 %s18, %s25
    %p83 = scmp.eq.s32.totalorder %s82, 0
    %s85 = sadd.s32 %s84, 1
    %s86 = scalar_select %p83, %s84, %s85
    %p89 = pneg %p83
    %p90 = scmp.eq.s32.totalorder %s10, 1
    %p91 = por %p89, %p90
    %p92 = scmp.ne.s32.totalorder %s84, %s87
    %p93 = scmp.eq.s32.totalorder %s10, 0
    %p94 = por %p92, %p93
    %p95 = scmp.ne.s32.totalorder %s84, %s87
    %p96 = scmp.eq.s32.totalorder %s15, 1
    %p97 = por %p95, %p96
    %p98 = scmp.ne.s32.totalorder %s87, %s88
    %p99 = scmp.eq.s32.totalorder %s15, 0
    %p100 = por %p98, %p99
    %p101 = scmp.ne.s32.totalorder %s87, %s88
    %p102 = scmp.eq.s32.totalorder %s16, 1
    %p103 = por %p101, %p102
    %p105 = scmp.ne.s32.totalorder %s88, %s104
    %p106 = scmp.eq.s32.totalorder %s16, 0
    %p107 = por %p105, %p106
    %s108 = ssub.s32 %s18, %s25
    %p109 = scmp.eq.s32.totalorder %s108, 0
    %s111 = sadd.s32 %s110, 1
    %s112 = scalar_select %p109, %s110, %s111
    %p115 = pneg %p109
    %p116 = scmp.eq.s32.totalorder %s10, 1
    %p117 = por %p115, %p116
    %p118 = scmp.ne.s32.totalorder %s110, %s113
    %p119 = scmp.eq.s32.totalorder %s10, 0
    %p120 = por %p118, %p119
    %p121 = scmp.ne.s32.totalorder %s110, %s113
    %p122 = scmp.eq.s32.totalorder %s15, 1
    %p123 = por %p121, %p122
    %p124 = scmp.ne.s32.totalorder %s113, %s114
    %p125 = scmp.eq.s32.totalorder %s15, 0
    %p126 = por %p124, %p125
    %p127 = scmp.ne.s32.totalorder %s113, %s114
    %p128 = scmp.eq.s32.totalorder %s16, 1
    %p129 = por %p127, %p128
    %p131 = scmp.ne.s32.totalorder %s114, %s130
    %p132 = scmp.eq.s32.totalorder %s16, 0
    %p133 = por %p131, %p132
    %s134 = ssub.s32 %s17, %s29
    %s135 = ssub.s32 %s18, %s25
    %s136 = sor.u32 %s134, %s135
    %p137 = scmp.eq.s32.totalorder %s136, 0
    %s139 = sadd.s32 %s138, 1
    %s140 = scalar_select %p137, %s138, %s139
    %p143 = pneg %p137
    %p144 = scmp.eq.s32.totalorder %s10, 1
    %p145 = por %p143, %p144
    %p146 = scmp.ne.s32.totalorder %s138, %s141
    %p147 = scmp.eq.s32.totalorder %s10, 0
    %p148 = por %p146, %p147
    %p149 = scmp.ne.s32.totalorder %s138, %s141
    %p150 = scmp.eq.s32.totalorder %s15, 1
    %p151 = por %p149, %p150
    %p152 = scmp.ne.s32.totalorder %s141, %s142
    %p153 = scmp.eq.s32.totalorder %s15, 0
    %p154 = por %p152, %p153
    %p155 = scmp.ne.s32.totalorder %s141, %s142
    %p156 = scmp.eq.s32.totalorder %s16, 1
    %p157 = por %p155, %p156
    %p159 = scmp.ne.s32.totalorder %s142, %s158
    %p160 = scmp.eq.s32.totalorder %s16, 0
    %p161 = por %p159, %p160
    %p162 = scmp.le.s32.totalorder 1, %s10
    %p163 = scmp.lt.s32.totalorder %s10, 3
    %p164 = pnand %p162, %p163
    %p165 = pneg %p164
    // Predicated region
    $region9: #{bottleneck_forward.4} parent=5 // pred_check
      _
    $region10: #{bottleneck_forward.4} parent=5 // pred_check_branch
      %167 = sbr.rel (%p164) target = $region12
    $region11: #{bottleneck_forward.4} parent=5 // pred_region
      %s168 = ssub.s32 %s10, 1
      // Predicated region
      $region13: #{bottleneck_forward.4} parent=11 // pred_check
        %p169 = pneg %p74
      $region14: #{bottleneck_forward.4} parent=11 // pred_check_branch
        %171 = sbr.rel (%p169) target = $region16
      $region15: #{bottleneck_forward.4} parent=11 // pred_region
        %p172 = scmp.lt.s32.totalorder %s20, 0
        %s173 = scalar_select %p172, %s20, 0
        %s174 = smul.addr %s173, 4
        %s175 = scalar_lea.vmem %s1, %s174
      $region16: #{bottleneck_forward.4} parent=11 // pred_fallthru
        _
      // Predicated region
      $region17: #{bottleneck_forward.4} parent=11 // pred_check
        %p176 = pneg %p100
      $region18: #{bottleneck_forward.4} parent=11 // pred_check_branch
        %178 = sbr.rel (%p176) target = $region20
      $region19: #{bottleneck_forward.4} parent=11 // pred_region
        %p179 = scmp.lt.s32.totalorder %s20, 0
        %s180 = scalar_select %p179, %s20, 0
        %s181 = scalar_lea.vmem %s2, %s180
      $region20: #{bottleneck_forward.4} parent=11 // pred_fallthru
        _
      // Predicated region
      $region21: #{bottleneck_forward.4} parent=11 // pred_check
        %p182 = pneg %p126
      $region22: #{bottleneck_forward.4} parent=11 // pred_check_branch
        %184 = sbr.rel (%p182) target = $region24
      $region23: #{bottleneck_forward.4} parent=11 // pred_region
        %p185 = scmp.lt.s32.totalorder %s20, 0
        %s186 = scalar_select %p185, %s20, 0
        %s187 = scalar_lea.vmem %s3, %s186
      $region24: #{bottleneck_forward.4} parent=11 // pred_fallthru
        _
    $region12: #{bottleneck_forward.4} parent=5 // pred_fallthru
      _
    %p188 = scmp.lt.s32.totalorder %s10, 2
    // Predicated region
    $region25: #{bottleneck_forward.4} parent=5 // pred_check
      %p189 = pneg %p188
    $region26: #{bottleneck_forward.4} parent=5 // pred_check_branch
      %191 = sbr.rel (%p189) target = $region28
    $region27: #{bottleneck_forward.4} parent=5 // pred_region
      // Predicated region
      $region29: #{bottleneck_forward.4} parent=27 // pred_check
        %p192 = pneg %p42
      $region30: #{bottleneck_forward.4} parent=27 // pred_check_branch
        %194 = sbr.rel (%p192) target = $region32
      $region31: #{bottleneck_forward.4} parent=27 // pred_region
        %s195 = smul.u32 32, %s17
        %p196 = scmp.lt.s32.totalorder %s195, 63
        %s197 = scalar_select %p196, %s195, 63
        %s198 = smul.addr %s197, 4
        %s199 = scalar_lea.vmem %s0, %s198
        %s200 = smul.u32 32, %s17
      $region32: #{bottleneck_forward.4} parent=27 // pred_fallthru
        _
    $region28: #{bottleneck_forward.4} parent=5 // pred_fallthru
      _
    %p201 = scmp.le.s32.totalorder 1, %s10
    %p202 = scmp.lt.s32.totalorder %s10, 3
    %p203 = pnand %p201, %p202
    %p204 = pneg %p203
    // Predicated region
    $region33: #{bottleneck_forward.4} parent=5 // pred_check
      _
    $region34: #{bottleneck_forward.4} parent=5 // pred_check_branch
      %206 = sbr.rel (%p203) target = $region36
    $region35: #{bottleneck_forward.4} parent=5 // pred_region
      %s207 = ssub.s32 %s10, 1
      %s208 = smul.u32 32, %s19
      %p209 = scmp.lt.s32.totalorder %s208, 63
      %s210 = scalar_select %p209, %s208, 63
      %s211 = smul.addr %s210, 4
      %s212 = scalar_lea.vmem %s0, %s211
      %p213 = pneg %p48
      %p214 = pneg %p45
      %p215 = scmp.lt.s32.totalorder %s20, 0
      %s216 = scalar_select %p215, %s20, 0
      %s217 = smul.addr %s216, 4
      %s218 = scalar_lea.vmem %s1, %s217
      %p219 = pneg %p74
      %p220 = pneg %p71
      %p221 = scmp.lt.s32.totalorder %s20, 0
      %s222 = scalar_select %p221, %s20, 0
      %s223 = scalar_lea.vmem %s2, %s222
      %p224 = pneg %p100
      %p225 = pneg %p97
      %p226 = scmp.lt.s32.totalorder %s20, 0
      %s227 = scalar_select %p226, %s20, 0
      %s228 = scalar_lea.vmem %s3, %s227
      %p229 = pneg %p126
      %p230 = pneg %p123
      %p231 = pneg %p154
      %p232 = pneg %p151
      %s233 = smul.u32 32, %s19
      %p234 = scmp.lt.s32.totalorder %s233, 63
      %s235 = scalar_select %p234, %s233, 63
      %p236 = scmp.lt.s32.totalorder %s20, 0
      %s237 = scalar_select %p236, %s20, 0
      %s238 = sadd.s32 %s237, %s235
      %s239 = smul.addr %s238, 4
      %s240 = scalar_lea.vmem %s4, %s239
      %s241 = smul.u32 32, %s19
      %p242 = scmp.lt.s32.totalorder %s241, 63
      %s243 = scalar_select %p242, %s241, 63
      %s244 = smul.addr %s243, 4
      %s245 = scalar_lea.vmem %s0, %s244
      %s246 = smul.u32 32, %s19
      %p247 = scmp.lt.s32.totalorder %s20, 0
      %s248 = scalar_select %p247, %s20, 0
      %s249 = smul.addr %s248, 4
      %s250 = scalar_lea.vmem %s1, %s249
      %p251 = scmp.lt.s32.totalorder %s20, 0
      %s252 = scalar_select %p251, %s20, 0
      %s253 = scalar_lea.vmem %s2, %s252
      %p254 = scmp.lt.s32.totalorder %s20, 0
      %s255 = scalar_select %p254, %s20, 0
      %s256 = scalar_lea.vmem %s3, %s255
      %s257 = smul.u32 32, %s19
      %p258 = scmp.lt.s32.totalorder %s257, 63
      %s259 = scalar_select %p258, %s257, 63
      %p260 = scmp.lt.s32.totalorder %s20, 0
      %s261 = scalar_select %p260, %s20, 0
      %s262 = sadd.s32 %s261, %s259
      %s263 = smul.addr %s262, 4
      %s264 = scalar_lea.vmem %s4, %s263
      %s265 = smul.u32 32, %s19
      %v267 = vld [vmem:[%s245] sm:$0xf]
      %v268 = vld [vmem:[%s245 + $0x4] sm:$0xf]
      %v269 = vld [vmem:[%s245 + $0x8] sm:$0xf]
      %v270 = vld [vmem:[%s245 + $0xc] sm:$0xf]
      %v271 = vld [vmem:[%s245 + $0x10] sm:$0xf]
      %v272 = vld [vmem:[%s245 + $0x14] sm:$0xf]
      %v273 = vld [vmem:[%s245 + $0x18] sm:$0xf]
      %v274 = vld [vmem:[%s245 + $0x1c] sm:$0xf]
      %v275 = vld [vmem:[%s245 + $0x20] sm:$0xf]
      %v276 = vld [vmem:[%s245 + $0x24] sm:$0xf]
      %v277 = vld [vmem:[%s245 + $0x28] sm:$0xf]
      %v278 = vld [vmem:[%s245 + $0x2c] sm:$0xf]
      %v279 = vld [vmem:[%s245 + $0x30] sm:$0xf]
      %v280 = vld [vmem:[%s245 + $0x34] sm:$0xf]
      %v281 = vld [vmem:[%s245 + $0x38] sm:$0xf]
      %v282 = vld [vmem:[%s245 + $0x3c] sm:$0xf]
      %v283 = vld [vmem:[%s245 + $0x40] sm:$0xf]
      %v284 = vld [vmem:[%s245 + $0x44] sm:$0xf]
      %v285 = vld [vmem:[%s245 + $0x48] sm:$0xf]
      %v286 = vld [vmem:[%s245 + $0x4c] sm:$0xf]
      %v287 = vld [vmem:[%s245 + $0x50] sm:$0xf]
      %v288 = vld [vmem:[%s245 + $0x54] sm:$0xf]
      %v289 = vld [vmem:[%s245 + $0x58] sm:$0xf]
      %v290 = vld [vmem:[%s245 + $0x5c] sm:$0xf]
      %v291 = vld [vmem:[%s245 + $0x60] sm:$0xf]
      %v292 = vld [vmem:[%s245 + $0x64] sm:$0xf]
      %v293 = vld [vmem:[%s245 + $0x68] sm:$0xf]
      %v294 = vld [vmem:[%s245 + $0x6c] sm:$0xf]
      %v295 = vld [vmem:[%s245 + $0x70] sm:$0xf]
      %v296 = vld [vmem:[%s245 + $0x74] sm:$0xf]
      %v297 = vld [vmem:[%s245 + $0x78] sm:$0xf]
      %v298 = vld [vmem:[%s245 + $0x7c] sm:$0xf]
      %v299 = vld [vmem:[%s250] sm:$0xf]
      %v300 = vld [vmem:[%s250 + $0x4] sm:$0xf]
      %v333 = vunpack.c.l.b16 %v267
      %v334 = vunpack.c.l.b16 %v268
      %v335 = vunpack.c.l.b16 %v269
      %v336 = vunpack.c.l.b16 %v270
      %v337 = vunpack.c.l.b16 %v271
      %v338 = vunpack.c.l.b16 %v272
      %v339 = vunpack.c.l.b16 %v273
      %v340 = vunpack.c.l.b16 %v274
      %v341 = vunpack.c.l.b16 %v275
      %v342 = vunpack.c.l.b16 %v276
      %v343 = vunpack.c.l.b16 %v277
      %v344 = vunpack.c.l.b16 %v278
      %v345 = vunpack.c.l.b16 %v279
      %v346 = vunpack.c.l.b16 %v280
      %v347 = vunpack.c.l.b16 %v281
      %v348 = vunpack.c.l.b16 %v282
      %v349 = vunpack.c.l.b16 %v283
      %v350 = vunpack.c.l.b16 %v284
      %v351 = vunpack.c.l.b16 %v285
      %v352 = vunpack.c.l.b16 %v286
      %v353 = vunpack.c.l.b16 %v287
      %v354 = vunpack.c.l.b16 %v288
      %v355 = vunpack.c.l.b16 %v289
      %v356 = vunpack.c.l.b16 %v290
      %v357 = vunpack.c.l.b16 %v291
      %v358 = vunpack.c.l.b16 %v292
      %v359 = vunpack.c.l.b16 %v293
      %v360 = vunpack.c.l.b16 %v294
      %v361 = vunpack.c.l.b16 %v295
      %v362 = vunpack.c.l.b16 %v296
      %v363 = vunpack.c.l.b16 %v297
      %v364 = vunpack.c.l.b16 %v298
      %v365 = vpack.c.b16 %v334, %v333
      %v366 = vpack.c.b16 %v336, %v335
      %v367 = vpack.c.b16 %v338, %v337
      %v368 = vpack.c.b16 %v340, %v339
      %v369 = vpack.c.b16 %v342, %v341
      %v370 = vpack.c.b16 %v344, %v343
      %v371 = vpack.c.b16 %v346, %v345
      %v372 = vpack.c.b16 %v348, %v347
      %v373 = vpack.c.b16 %v350, %v349
      %v374 = vpack.c.b16 %v352, %v351
      %v375 = vpack.c.b16 %v354, %v353
      %v376 = vpack.c.b16 %v356, %v355
      %v377 = vpack.c.b16 %v358, %v357
      %v378 = vpack.c.b16 %v360, %v359
      %v379 = vpack.c.b16 %v362, %v361
      %v380 = vpack.c.b16 %v364, %v363
      %v383 = vunpack.c.l.b16 %v299
      %v384 = vunpack.c.l.b16 %v300
      %v385 = vpack.c.b16 %v384, %v383
      %vm387 = vcmask 130048
      %v389 = vsel %vm387, %v365, 0
      %v392 = vsel %vm387, %v366, 0
      %v395 = vsel %vm387, %v367, 0
      %v398 = vsel %vm387, %v368, 0
      %v401 = vsel %vm387, %v369, 0
      %v404 = vsel %vm387, %v370, 0
      %v407 = vsel %vm387, %v371, 0
      %v410 = vsel %vm387, %v372, 0
      %v413 = vsel %vm387, %v373, 0
      %v416 = vsel %vm387, %v374, 0
      %v419 = vsel %vm387, %v375, 0
      %v422 = vsel %vm387, %v376, 0
      %v425 = vsel %vm387, %v377, 0
      %v428 = vsel %vm387, %v378, 0
      %v431 = vsel %vm387, %v379, 0
      %v434 = vsel %vm387, %v380, 0
      %436 = vmatpush.bf16.msra.mxu0 0
      %437 = vmatpush.bf16.msra.mxu0 0
      %438 = vmatpush.bf16.msra.mxu0 0
      %439 = vmatpush.bf16.msra.mxu0 0
      %440 = vmatpush.bf16.msra.mxu0 0
      %441 = vmatpush.bf16.msra.mxu0 0
      %442 = vmatpush.bf16.msra.mxu0 0
      %443 = vmatpush.bf16.msra.mxu0 %v385
      %444 = vmatmul.bf16.gmra.mxu0 %v389
      %v445 = vpop.f32.mrf.mxu0
      %v446 = vadd.f32 0.0, %v445
      %v447 = vpop.f32.mrf.mxu0
      %v448 = vadd.f32 0.0, %v447
      %449 = vmatmul.bf16.gmra.mxu0 %v392
      %v450 = vpop.f32.mrf.mxu0
      %v451 = vadd.f32 0.0, %v450
      %v452 = vpop.f32.mrf.mxu0
      %v453 = vadd.f32 0.0, %v452
      %454 = vmatmul.bf16.gmra.mxu0 %v395
      %v455 = vpop.f32.mrf.mxu0
      %v456 = vadd.f32 0.0, %v455
      %v457 = vpop.f32.mrf.mxu0
      %v458 = vadd.f32 0.0, %v457
      %459 = vmatmul.bf16.gmra.mxu0 %v398
      %v460 = vpop.f32.mrf.mxu0
      %v461 = vadd.f32 0.0, %v460
      %v462 = vpop.f32.mrf.mxu0
      %v463 = vadd.f32 0.0, %v462
      %464 = vmatmul.bf16.gmra.mxu0 %v401
      %v465 = vpop.f32.mrf.mxu0
      %v466 = vadd.f32 0.0, %v465
      %v467 = vpop.f32.mrf.mxu0
      %v468 = vadd.f32 0.0, %v467
      %469 = vmatmul.bf16.gmra.mxu0 %v404
      %v470 = vpop.f32.mrf.mxu0
      %v471 = vadd.f32 0.0, %v470
      %v472 = vpop.f32.mrf.mxu0
      %v473 = vadd.f32 0.0, %v472
      %474 = vmatmul.bf16.gmra.mxu0 %v407
      %v475 = vpop.f32.mrf.mxu0
      %v476 = vadd.f32 0.0, %v475
      %v477 = vpop.f32.mrf.mxu0
      %v478 = vadd.f32 0.0, %v477
      %479 = vmatmul.bf16.gmra.mxu0 %v410
      %v480 = vpop.f32.mrf.mxu0
      %v481 = vadd.f32 0.0, %v480
      %v482 = vpop.f32.mrf.mxu0
      %v483 = vadd.f32 0.0, %v482
      %484 = vmatmul.bf16.gmra.mxu0 %v413
      %v485 = vpop.f32.mrf.mxu0
      %v486 = vadd.f32 0.0, %v485
      %v487 = vpop.f32.mrf.mxu0
      %v488 = vadd.f32 0.0, %v487
      %489 = vmatmul.bf16.gmra.mxu0 %v416
      %v490 = vpop.f32.mrf.mxu0
      %v491 = vadd.f32 0.0, %v490
      %v492 = vpop.f32.mrf.mxu0
      %v493 = vadd.f32 0.0, %v492
      %494 = vmatmul.bf16.gmra.mxu0 %v419
      %v495 = vpop.f32.mrf.mxu0
      %v496 = vadd.f32 0.0, %v495
      %v497 = vpop.f32.mrf.mxu0
      %v498 = vadd.f32 0.0, %v497
      %499 = vmatmul.bf16.gmra.mxu0 %v422
      %v500 = vpop.f32.mrf.mxu0
      %v501 = vadd.f32 0.0, %v500
      %v502 = vpop.f32.mrf.mxu0
      %v503 = vadd.f32 0.0, %v502
      %504 = vmatmul.bf16.gmra.mxu0 %v425
      %v505 = vpop.f32.mrf.mxu0
      %v506 = vadd.f32 0.0, %v505
      %v507 = vpop.f32.mrf.mxu0
      %v508 = vadd.f32 0.0, %v507
      %509 = vmatmul.bf16.gmra.mxu0 %v428
      %v510 = vpop.f32.mrf.mxu0
      %v511 = vadd.f32 0.0, %v510
      %v512 = vpop.f32.mrf.mxu0
      %v513 = vadd.f32 0.0, %v512
      %514 = vmatmul.bf16.gmra.mxu0 %v431
      %v515 = vpop.f32.mrf.mxu0
      %v516 = vadd.f32 0.0, %v515
      %v517 = vpop.f32.mrf.mxu0
      %v518 = vadd.f32 0.0, %v517
      %519 = vmatmul.bf16.gmra.mxu0 %v434
      %v520 = vpop.f32.mrf.mxu0
      %v521 = vadd.f32 0.0, %v520
      %v522 = vpop.f32.mrf.mxu0
      %v523 = vadd.f32 0.0, %v522
      %524 = vdwg.mxu0
      %v525 = vld [vmem:[%s253] sm:$0x1]
      %v527 = vperm.slane %v525, 0
      %v529 = vmul.f32 %v446, %v527
      %v530 = vmul.f32 %v448, %v527
      %v531 = vmul.f32 %v451, %v527
      %v532 = vmul.f32 %v453, %v527
      %v533 = vmul.f32 %v456, %v527
      %v534 = vmul.f32 %v458, %v527
      %v535 = vmul.f32 %v461, %v527
      %v536 = vmul.f32 %v463, %v527
      %v537 = vmul.f32 %v466, %v527
      %v538 = vmul.f32 %v468, %v527
      %v539 = vmul.f32 %v471, %v527
      %v540 = vmul.f32 %v473, %v527
      %v541 = vmul.f32 %v476, %v527
      %v542 = vmul.f32 %v478, %v527
      %v543 = vmul.f32 %v481, %v527
      %v544 = vmul.f32 %v483, %v527
      %v545 = vmul.f32 %v486, %v527
      %v546 = vmul.f32 %v488, %v527
      %v547 = vmul.f32 %v491, %v527
      %v548 = vmul.f32 %v493, %v527
      %v549 = vmul.f32 %v496, %v527
      %v550 = vmul.f32 %v498, %v527
      %v551 = vmul.f32 %v501, %v527
      %v552 = vmul.f32 %v503, %v527
      %v553 = vmul.f32 %v506, %v527
      %v554 = vmul.f32 %v508, %v527
      %v555 = vmul.f32 %v511, %v527
      %v556 = vmul.f32 %v513, %v527
      %v557 = vmul.f32 %v516, %v527
      %v558 = vmul.f32 %v518, %v527
      %v559 = vmul.f32 %v521, %v527
      %v560 = vmul.f32 %v523, %v527
      %v561 = vld [vmem:[%s256] sm:$0x1]
      %v563 = vperm.slane %v561, 0
      %v565 = vadd.f32 %v529, %v563
      %v566 = vadd.f32 %v530, %v563
      %v567 = vadd.f32 %v531, %v563
      %v568 = vadd.f32 %v532, %v563
      %v569 = vadd.f32 %v533, %v563
      %v570 = vadd.f32 %v534, %v563
      %v571 = vadd.f32 %v535, %v563
      %v572 = vadd.f32 %v536, %v563
      %v573 = vadd.f32 %v537, %v563
      %v574 = vadd.f32 %v538, %v563
      %v575 = vadd.f32 %v539, %v563
      %v576 = vadd.f32 %v540, %v563
      %v577 = vadd.f32 %v541, %v563
      %v578 = vadd.f32 %v542, %v563
      %v579 = vadd.f32 %v543, %v563
      %v580 = vadd.f32 %v544, %v563
      %v581 = vadd.f32 %v545, %v563
      %v582 = vadd.f32 %v546, %v563
      %v583 = vadd.f32 %v547, %v563
      %v584 = vadd.f32 %v548, %v563
      %v585 = vadd.f32 %v549, %v563
      %v586 = vadd.f32 %v550, %v563
      %v587 = vadd.f32 %v551, %v563
      %v588 = vadd.f32 %v552, %v563
      %v589 = vadd.f32 %v553, %v563
      %v590 = vadd.f32 %v554, %v563
      %v591 = vadd.f32 %v555, %v563
      %v592 = vadd.f32 %v556, %v563
      %v593 = vadd.f32 %v557, %v563
      %v594 = vadd.f32 %v558, %v563
      %v595 = vadd.f32 %v559, %v563
      %v596 = vadd.f32 %v560, %v563
      %v597 = vmax.f32 %v565, 0.0
      %v598 = vmax.f32 %v566, 0.0
      %v599 = vmax.f32 %v567, 0.0
      %v600 = vmax.f32 %v568, 0.0
      %v601 = vmax.f32 %v569, 0.0
      %v602 = vmax.f32 %v570, 0.0
      %v603 = vmax.f32 %v571, 0.0
      %v604 = vmax.f32 %v572, 0.0
      %v605 = vmax.f32 %v573, 0.0
      %v606 = vmax.f32 %v574, 0.0
      %v607 = vmax.f32 %v575, 0.0
      %v608 = vmax.f32 %v576, 0.0
      %v609 = vmax.f32 %v577, 0.0
      %v610 = vmax.f32 %v578, 0.0
      %v611 = vmax.f32 %v579, 0.0
      %v612 = vmax.f32 %v580, 0.0
      %v613 = vmax.f32 %v581, 0.0
      %v614 = vmax.f32 %v582, 0.0
      %v615 = vmax.f32 %v583, 0.0
      %v616 = vmax.f32 %v584, 0.0
      %v617 = vmax.f32 %v585, 0.0
      %v618 = vmax.f32 %v586, 0.0
      %v619 = vmax.f32 %v587, 0.0
      %v620 = vmax.f32 %v588, 0.0
      %v621 = vmax.f32 %v589, 0.0
      %v622 = vmax.f32 %v590, 0.0
      %v623 = vmax.f32 %v591, 0.0
      %v624 = vmax.f32 %v592, 0.0
      %v625 = vmax.f32 %v593, 0.0
      %v626 = vmax.f32 %v594, 0.0
      %v627 = vmax.f32 %v595, 0.0
      %v628 = vmax.f32 %v596, 0.0
      %v629 = vpack.c.bf16 %v597, %v597
      %v630 = vpack.c.bf16 %v598, %v598
      %v631 = vpack.c.bf16 %v599, %v599
      %v632 = vpack.c.bf16 %v600, %v600
      %v633 = vpack.c.bf16 %v601, %v601
      %v634 = vpack.c.bf16 %v602, %v602
      %v635 = vpack.c.bf16 %v603, %v603
      %v636 = vpack.c.bf16 %v604, %v604
      %v637 = vpack.c.bf16 %v605, %v605
      %v638 = vpack.c.bf16 %v606, %v606
      %v639 = vpack.c.bf16 %v607, %v607
      %v640 = vpack.c.bf16 %v608, %v608
      %v641 = vpack.c.bf16 %v609, %v609
      %v642 = vpack.c.bf16 %v610, %v610
      %v643 = vpack.c.bf16 %v611, %v611
      %v644 = vpack.c.bf16 %v612, %v612
      %v645 = vpack.c.bf16 %v613, %v613
      %v646 = vpack.c.bf16 %v614, %v614
      %v647 = vpack.c.bf16 %v615, %v615
      %v648 = vpack.c.bf16 %v616, %v616
      %v649 = vpack.c.bf16 %v617, %v617
      %v650 = vpack.c.bf16 %v618, %v618
      %v651 = vpack.c.bf16 %v619, %v619
      %v652 = vpack.c.bf16 %v620, %v620
      %v653 = vpack.c.bf16 %v621, %v621
      %v654 = vpack.c.bf16 %v622, %v622
      %v655 = vpack.c.bf16 %v623, %v623
      %v656 = vpack.c.bf16 %v624, %v624
      %v657 = vpack.c.bf16 %v625, %v625
      %v658 = vpack.c.bf16 %v626, %v626
      %v659 = vpack.c.bf16 %v627, %v627
      %v660 = vpack.c.bf16 %v628, %v628
      %vm661 = vcmask 60416
      %662 = vst.msk [vmem:[%s264] sm:$0xf] %vm661, %v629
      %663 = vst.msk [vmem:[%s264 + $0x4] sm:$0xf] %vm661, %v630
      %664 = vst.msk [vmem:[%s264 + $0x8] sm:$0xf] %vm661, %v631
      %665 = vst.msk [vmem:[%s264 + $0xc] sm:$0xf] %vm661, %v632
      %666 = vst.msk [vmem:[%s264 + $0x10] sm:$0xf] %vm661, %v633
      %667 = vst.msk [vmem:[%s264 + $0x14] sm:$0xf] %vm661, %v634
      %668 = vst.msk [vmem:[%s264 + $0x18] sm:$0xf] %vm661, %v635
      %669 = vst.msk [vmem:[%s264 + $0x1c] sm:$0xf] %vm661, %v636
      %670 = vst.msk [vmem:[%s264 + $0x20] sm:$0xf] %vm661, %v637
      %671 = vst.msk [vmem:[%s264 + $0x24] sm:$0xf] %vm661, %v638
      %672 = vst.msk [vmem:[%s264 + $0x28] sm:$0xf] %vm661, %v639
      %673 = vst.msk [vmem:[%s264 + $0x2c] sm:$0xf] %vm661, %v640
      %674 = vst.msk [vmem:[%s264 + $0x30] sm:$0xf] %vm661, %v641
      %675 = vst.msk [vmem:[%s264 + $0x34] sm:$0xf] %vm661, %v642
      %676 = vst.msk [vmem:[%s264 + $0x38] sm:$0xf] %vm661, %v643
      %677 = vst.msk [vmem:[%s264 + $0x3c] sm:$0xf] %vm661, %v644
      %678 = vst.msk [vmem:[%s264 + $0x40] sm:$0xf] %vm661, %v645
      %679 = vst.msk [vmem:[%s264 + $0x44] sm:$0xf] %vm661, %v646
      %680 = vst.msk [vmem:[%s264 + $0x48] sm:$0xf] %vm661, %v647
      %681 = vst.msk [vmem:[%s264 + $0x4c] sm:$0xf] %vm661, %v648
      %682 = vst.msk [vmem:[%s264 + $0x50] sm:$0xf] %vm661, %v649
      %683 = vst.msk [vmem:[%s264 + $0x54] sm:$0xf] %vm661, %v650
      %684 = vst.msk [vmem:[%s264 + $0x58] sm:$0xf] %vm661, %v651
      %685 = vst.msk [vmem:[%s264 + $0x5c] sm:$0xf] %vm661, %v652
      %686 = vst.msk [vmem:[%s264 + $0x60] sm:$0xf] %vm661, %v653
      %687 = vst.msk [vmem:[%s264 + $0x64] sm:$0xf] %vm661, %v654
      %688 = vst.msk [vmem:[%s264 + $0x68] sm:$0xf] %vm661, %v655
      %689 = vst.msk [vmem:[%s264 + $0x6c] sm:$0xf] %vm661, %v656
      %690 = vst.msk [vmem:[%s264 + $0x70] sm:$0xf] %vm661, %v657
      %691 = vst.msk [vmem:[%s264 + $0x74] sm:$0xf] %vm661, %v658
      %692 = vst.msk [vmem:[%s264 + $0x78] sm:$0xf] %vm661, %v659
      %693 = vst.msk [vmem:[%s264 + $0x7c] sm:$0xf] %vm661, %v660
      %s694 = smul.u32 32, %s19
      %p695 = scmp.lt.s32.totalorder %s694, 63
      %s696 = scalar_select %p695, %s694, 63
      %p697 = scmp.lt.s32.totalorder %s20, 0
      %s698 = scalar_select %p697, %s20, 0
      %s699 = sadd.s32 %s698, %s696
      %s700 = smul.addr %s699, 4
      %s701 = scalar_lea.vmem %s4, %s700
      // Predicated region
      $region37: #{bottleneck_forward.4} parent=35 // pred_check
        %p702 = pneg %p151
      $region38: #{bottleneck_forward.4} parent=35 // pred_check_branch
        %704 = sbr.rel (%p702) target = $region40
      $region39: #{bottleneck_forward.4} parent=35 // pred_region
        %s705 = smul.u32 32, %s19
      $region40: #{bottleneck_forward.4} parent=35 // pred_fallthru
        _
    $region36: #{bottleneck_forward.4} parent=5 // pred_fallthru
      _
    %p706 = scmp.le.s32.totalorder 2, %s10
    // Predicated region
    $region41: #{bottleneck_forward.4} parent=5 // pred_check
      %p707 = pneg %p706
    $region42: #{bottleneck_forward.4} parent=5 // pred_check_branch
      %709 = sbr.rel (%p707) target = $region44
    $region43: #{bottleneck_forward.4} parent=5 // pred_region
      %s710 = ssub.s32 %s10, 2
      // Predicated region
      $region45: #{bottleneck_forward.4} parent=43 // pred_check
        %p711 = pneg %p157
      $region46: #{bottleneck_forward.4} parent=43 // pred_check_branch
        %713 = sbr.rel (%p711) target = $region48
      $region47: #{bottleneck_forward.4} parent=43 // pred_region
        %s714 = smul.u32 32, %s21
        %p715 = scmp.lt.s32.totalorder %s714, 63
        %s716 = scalar_select %p715, %s714, 63
        %p717 = scmp.lt.s32.totalorder %s22, 0
        %s718 = scalar_select %p717, %s22, 0
        %s719 = sadd.s32 %s718, %s716
        %s720 = smul.addr %s719, 4
        %s721 = scalar_lea.vmem %s4, %s720
      $region48: #{bottleneck_forward.4} parent=43 // pred_fallthru
        _
    $region44: #{bottleneck_forward.4} parent=5 // pred_fallthru
      _
  $region6: #{bottleneck_forward.4} parent=0 // loop_footer
    %s14 = sadd.s32 1, %s10
  $region7: #{bottleneck_forward.4} parent=0 // loop_footer_branch
    %9 = sbr.rel target = $region3
  $region8: #{bottleneck_forward.4} parent=0 // loop_exit
    _

// kernel: bottleneck_forward.6
$region0: #{bottleneck_forward.6}
  #allocation0 [shape = 'u32[]', space=smem, size = 0x4, offset = 0x4, fixed_abs, tag = 'smem constant byte address 0x4 - core index']
  #allocation1 [shape = 'u32[72,128]{1,0:T(1,128)}', space=vmem, size = 0x9000, scoped, tag = 'internal scratch']
  %s0 = inlined_call_operand.vmem [shape: bf16[512,16], index: 0, kind: input, shape index: {}]
  %s1 = inlined_call_operand.vmem [shape: bf16[16,32], index: 1, kind: input, shape index: {}]
  %s2 = inlined_call_operand.vmem [shape: f32[1,32], index: 2, kind: input, shape index: {}]
  %s3 = inlined_call_operand.vmem [shape: f32[1,32], index: 3, kind: input, shape index: {}]
  %s4 = inlined_call_operand.vmem [shape: bf16[512,32], index: 4, kind: output, shape index: {}]
  %s5 = sld [smem:[#allocation0]]
  $region49: #{bottleneck_forward.6} parent=0
    _
  %s7 = ssub.s32 1, %s5
  %s8 = scalar_select 0, %s7, %s5
  loop: start=0, step=1, limit=4
  $region2: #{bottleneck_forward.6} parent=0 // loop_pre_header
    _
  $region3: #{bottleneck_forward.6} parent=0 // loop_header
    %s10 = sphi 0, %s14
    %p11 = scmp.ge.s32.totalorder %s10, 4
    %s17 = sphi 0, %s29
    %s18 = sphi 0, %s25
    %s19 = sphi 0, %s17
    %s20 = sphi 0, %s18
    %s21 = sphi 0, %s19
    %s22 = sphi 0, %s20
    %s32 = sphi 0, %s34
    %s35 = sphi 0, %s32
    %s36 = sphi 0, %s35
    %s52 = sphi 0, %s36
    %s58 = sphi 0, %s60
    %s61 = sphi 0, %s58
    %s62 = sphi 0, %s61
    %s78 = sphi 0, %s62
    %s84 = sphi 0, %s86
    %s87 = sphi 0, %s84
    %s88 = sphi 0, %s87
    %s104 = sphi 0, %s88
    %s110 = sphi 0, %s112
    %s113 = sphi 0, %s110
    %s114 = sphi 0, %s113
    %s130 = sphi 0, %s114
    %s138 = sphi 0, %s140
    %s141 = sphi 0, %s138
    %s142 = sphi 0, %s141
    %s158 = sphi 0, %s142
  $region4: #{bottleneck_forward.6} parent=0 // loop_header_branch
    %13 = sbr.rel (%p11) target = $region8
  $region5: #{bottleneck_forward.6} parent=0 // loop_body
    %s15 = ssub.s32 %s10, 1
    %s16 = ssub.s32 %s10, 2
    %s23 = sadd.s32 1, %s18
    %p24 = scmp.ge.s32.totalorder %s23, 1
    %s25 = scalar_select %p24, 0, %s23
    %s26 = sadd.s32 1, %s17
    %s27 = scalar_select %p24, %s26, %s17
    %p28 = scmp.ge.s32.totalorder %s27, 2
    %s29 = scalar_select %p28, 0, %s27
    %s30 = ssub.s32 %s17, %s29
    %p31 = scmp.eq.s32.totalorder %s30, 0
    %s33 = sadd.s32 %s32, 1
    %s34 = scalar_select %p31, %s32, %s33
    %p37 = pneg %p31
    %p38 = scmp.eq.s32.totalorder %s10, 1
    %p39 = por %p37, %p38
    %p40 = scmp.ne.s32.totalorder %s32, %s35
    %p41 = scmp.eq.s32.totalorder %s10, 0
    %p42 = por %p40, %p41
    %p43 = scmp.ne.s32.totalorder %s32, %s35
    %p44 = scmp.eq.s32.totalorder %s15, 1
    %p45 = por %p43, %p44
    %p46 = scmp.ne.s32.totalorder %s35, %s36
    %p47 = scmp.eq.s32.totalorder %s15, 0
    %p48 = por %p46, %p47
    %p49 = scmp.ne.s32.totalorder %s35, %s36
    %p50 = scmp.eq.s32.totalorder %s16, 1
    %p51 = por %p49, %p50
    %p53 = scmp.ne.s32.totalorder %s36, %s52
    %p54 = scmp.eq.s32.totalorder %s16, 0
    %p55 = por %p53, %p54
    %s56 = ssub.s32 %s18, %s25
    %p57 = scmp.eq.s32.totalorder %s56, 0
    %s59 = sadd.s32 %s58, 1
    %s60 = scalar_select %p57, %s58, %s59
    %p63 = pneg %p57
    %p64 = scmp.eq.s32.totalorder %s10, 1
    %p65 = por %p63, %p64
    %p66 = scmp.ne.s32.totalorder %s58, %s61
    %p67 = scmp.eq.s32.totalorder %s10, 0
    %p68 = por %p66, %p67
    %p69 = scmp.ne.s32.totalorder %s58, %s61
    %p70 = scmp.eq.s32.totalorder %s15, 1
    %p71 = por %p69, %p70
    %p72 = scmp.ne.s32.totalorder %s61, %s62
    %p73 = scmp.eq.s32.totalorder %s15, 0
    %p74 = por %p72, %p73
    %p75 = scmp.ne.s32.totalorder %s61, %s62
    %p76 = scmp.eq.s32.totalorder %s16, 1
    %p77 = por %p75, %p76
    %p79 = scmp.ne.s32.totalorder %s62, %s78
    %p80 = scmp.eq.s32.totalorder %s16, 0
    %p81 = por %p79, %p80
    %s82 = ssub.s32 %s18, %s25
    %p83 = scmp.eq.s32.totalorder %s82, 0
    %s85 = sadd.s32 %s84, 1
    %s86 = scalar_select %p83, %s84, %s85
    %p89 = pneg %p83
    %p90 = scmp.eq.s32.totalorder %s10, 1
    %p91 = por %p89, %p90
    %p92 = scmp.ne.s32.totalorder %s84, %s87
    %p93 = scmp.eq.s32.totalorder %s10, 0
    %p94 = por %p92, %p93
    %p95 = scmp.ne.s32.totalorder %s84, %s87
    %p96 = scmp.eq.s32.totalorder %s15, 1
    %p97 = por %p95, %p96
    %p98 = scmp.ne.s32.totalorder %s87, %s88
    %p99 = scmp.eq.s32.totalorder %s15, 0
    %p100 = por %p98, %p99
    %p101 = scmp.ne.s32.totalorder %s87, %s88
    %p102 = scmp.eq.s32.totalorder %s16, 1
    %p103 = por %p101, %p102
    %p105 = scmp.ne.s32.totalorder %s88, %s104
    %p106 = scmp.eq.s32.totalorder %s16, 0
    %p107 = por %p105, %p106
    %s108 = ssub.s32 %s18, %s25
    %p109 = scmp.eq.s32.totalorder %s108, 0
    %s111 = sadd.s32 %s110, 1
    %s112 = scalar_select %p109, %s110, %s111
    %p115 = pneg %p109
    %p116 = scmp.eq.s32.totalorder %s10, 1
    %p117 = por %p115, %p116
    %p118 = scmp.ne.s32.totalorder %s110, %s113
    %p119 = scmp.eq.s32.totalorder %s10, 0
    %p120 = por %p118, %p119
    %p121 = scmp.ne.s32.totalorder %s110, %s113
    %p122 = scmp.eq.s32.totalorder %s15, 1
    %p123 = por %p121, %p122
    %p124 = scmp.ne.s32.totalorder %s113, %s114
    %p125 = scmp.eq.s32.totalorder %s15, 0
    %p126 = por %p124, %p125
    %p127 = scmp.ne.s32.totalorder %s113, %s114
    %p128 = scmp.eq.s32.totalorder %s16, 1
    %p129 = por %p127, %p128
    %p131 = scmp.ne.s32.totalorder %s114, %s130
    %p132 = scmp.eq.s32.totalorder %s16, 0
    %p133 = por %p131, %p132
    %s134 = ssub.s32 %s17, %s29
    %s135 = ssub.s32 %s18, %s25
    %s136 = sor.u32 %s134, %s135
    %p137 = scmp.eq.s32.totalorder %s136, 0
    %s139 = sadd.s32 %s138, 1
    %s140 = scalar_select %p137, %s138, %s139
    %p143 = pneg %p137
    %p144 = scmp.eq.s32.totalorder %s10, 1
    %p145 = por %p143, %p144
    %p146 = scmp.ne.s32.totalorder %s138, %s141
    %p147 = scmp.eq.s32.totalorder %s10, 0
    %p148 = por %p146, %p147
    %p149 = scmp.ne.s32.totalorder %s138, %s141
    %p150 = scmp.eq.s32.totalorder %s15, 1
    %p151 = por %p149, %p150
    %p152 = scmp.ne.s32.totalorder %s141, %s142
    %p153 = scmp.eq.s32.totalorder %s15, 0
    %p154 = por %p152, %p153
    %p155 = scmp.ne.s32.totalorder %s141, %s142
    %p156 = scmp.eq.s32.totalorder %s16, 1
    %p157 = por %p155, %p156
    %p159 = scmp.ne.s32.totalorder %s142, %s158
    %p160 = scmp.eq.s32.totalorder %s16, 0
    %p161 = por %p159, %p160
    %p162 = scmp.le.s32.totalorder 1, %s10
    %p163 = scmp.lt.s32.totalorder %s10, 3
    %p164 = pnand %p162, %p163
    %p165 = pneg %p164
    // Predicated region
    $region9: #{bottleneck_forward.6} parent=5 // pred_check
      _
    $region10: #{bottleneck_forward.6} parent=5 // pred_check_branch
      %167 = sbr.rel (%p164) target = $region12
    $region11: #{bottleneck_forward.6} parent=5 // pred_region
      %s168 = ssub.s32 %s10, 1
      // Predicated region
      $region13: #{bottleneck_forward.6} parent=11 // pred_check
        %p169 = pneg %p74
      $region14: #{bottleneck_forward.6} parent=11 // pred_check_branch
        %171 = sbr.rel (%p169) target = $region16
      $region15: #{bottleneck_forward.6} parent=11 // pred_region
        %p172 = scmp.lt.s32.totalorder %s20, 0
        %s173 = scalar_select %p172, %s20, 0
        %s174 = smul.addr %s173, 4
        %s175 = scalar_lea.vmem %s1, %s174
      $region16: #{bottleneck_forward.6} parent=11 // pred_fallthru
        _
      // Predicated region
      $region17: #{bottleneck_forward.6} parent=11 // pred_check
        %p176 = pneg %p100
      $region18: #{bottleneck_forward.6} parent=11 // pred_check_branch
        %178 = sbr.rel (%p176) target = $region20
      $region19: #{bottleneck_forward.6} parent=11 // pred_region
        %p179 = scmp.lt.s32.totalorder %s20, 0
        %s180 = scalar_select %p179, %s20, 0
        %s181 = scalar_lea.vmem %s2, %s180
      $region20: #{bottleneck_forward.6} parent=11 // pred_fallthru
        _
      // Predicated region
      $region21: #{bottleneck_forward.6} parent=11 // pred_check
        %p182 = pneg %p126
      $region22: #{bottleneck_forward.6} parent=11 // pred_check_branch
        %184 = sbr.rel (%p182) target = $region24
      $region23: #{bottleneck_forward.6} parent=11 // pred_region
        %p185 = scmp.lt.s32.totalorder %s20, 0
        %s186 = scalar_select %p185, %s20, 0
        %s187 = scalar_lea.vmem %s3, %s186
      $region24: #{bottleneck_forward.6} parent=11 // pred_fallthru
        _
    $region12: #{bottleneck_forward.6} parent=5 // pred_fallthru
      _
    %p188 = scmp.lt.s32.totalorder %s10, 2
    // Predicated region
    $region25: #{bottleneck_forward.6} parent=5 // pred_check
      %p189 = pneg %p188
    $region26: #{bottleneck_forward.6} parent=5 // pred_check_branch
      %191 = sbr.rel (%p189) target = $region28
    $region27: #{bottleneck_forward.6} parent=5 // pred_region
      // Predicated region
      $region29: #{bottleneck_forward.6} parent=27 // pred_check
        %p192 = pneg %p42
      $region30: #{bottleneck_forward.6} parent=27 // pred_check_branch
        %194 = sbr.rel (%p192) target = $region32
      $region31: #{bottleneck_forward.6} parent=27 // pred_region
        %s195 = smul.u32 32, %s17
        %p196 = scmp.lt.s32.totalorder %s195, 63
        %s197 = scalar_select %p196, %s195, 63
        %s198 = smul.addr %s197, 4
        %s199 = scalar_lea.vmem %s0, %s198
        %s200 = smul.u32 32, %s17
      $region32: #{bottleneck_forward.6} parent=27 // pred_fallthru
        _
    $region28: #{bottleneck_forward.6} parent=5 // pred_fallthru
      _
    %p201 = scmp.le.s32.totalorder 1, %s10
    %p202 = scmp.lt.s32.totalorder %s10, 3
    %p203 = pnand %p201, %p202
    %p204 = pneg %p203
    // Predicated region
    $region33: #{bottleneck_forward.6} parent=5 // pred_check
      _
    $region34: #{bottleneck_forward.6} parent=5 // pred_check_branch
      %206 = sbr.rel (%p203) target = $region36
    $region35: #{bottleneck_forward.6} parent=5 // pred_region
      %s207 = ssub.s32 %s10, 1
      %s208 = smul.u32 32, %s19
      %p209 = scmp.lt.s32.totalorder %s208, 63
      %s210 = scalar_select %p209, %s208, 63
      %s211 = smul.addr %s210, 4
      %s212 = scalar_lea.vmem %s0, %s211
      %p213 = pneg %p48
      %p214 = pneg %p45
      %p215 = scmp.lt.s32.totalorder %s20, 0
      %s216 = scalar_select %p215, %s20, 0
      %s217 = smul.addr %s216, 4
      %s218 = scalar_lea.vmem %s1, %s217
      %p219 = pneg %p74
      %p220 = pneg %p71
      %p221 = scmp.lt.s32.totalorder %s20, 0
      %s222 = scalar_select %p221, %s20, 0
      %s223 = scalar_lea.vmem %s2, %s222
      %p224 = pneg %p100
      %p225 = pneg %p97
      %p226 = scmp.lt.s32.totalorder %s20, 0
      %s227 = scalar_select %p226, %s20, 0
      %s228 = scalar_lea.vmem %s3, %s227
      %p229 = pneg %p126
      %p230 = pneg %p123
      %p231 = pneg %p154
      %p232 = pneg %p151
      %s233 = smul.u32 32, %s19
      %p234 = scmp.lt.s32.totalorder %s233, 63
      %s235 = scalar_select %p234, %s233, 63
      %p236 = scmp.lt.s32.totalorder %s20, 0
      %s237 = scalar_select %p236, %s20, 0
      %s238 = sadd.s32 %s237, %s235
      %s239 = smul.addr %s238, 4
      %s240 = scalar_lea.vmem %s4, %s239
      %s241 = smul.u32 32, %s19
      %p242 = scmp.lt.s32.totalorder %s241, 63
      %s243 = scalar_select %p242, %s241, 63
      %s244 = smul.addr %s243, 4
      %s245 = scalar_lea.vmem %s0, %s244
      %s246 = smul.u32 32, %s19
      %p247 = scmp.lt.s32.totalorder %s20, 0
      %s248 = scalar_select %p247, %s20, 0
      %s249 = smul.addr %s248, 4
      %s250 = scalar_lea.vmem %s1, %s249
      %p251 = scmp.lt.s32.totalorder %s20, 0
      %s252 = scalar_select %p251, %s20, 0
      %s253 = scalar_lea.vmem %s2, %s252
      %p254 = scmp.lt.s32.totalorder %s20, 0
      %s255 = scalar_select %p254, %s20, 0
      %s256 = scalar_lea.vmem %s3, %s255
      %s257 = smul.u32 32, %s19
      %p258 = scmp.lt.s32.totalorder %s257, 63
      %s259 = scalar_select %p258, %s257, 63
      %p260 = scmp.lt.s32.totalorder %s20, 0
      %s261 = scalar_select %p260, %s20, 0
      %s262 = sadd.s32 %s261, %s259
      %s263 = smul.addr %s262, 4
      %s264 = scalar_lea.vmem %s4, %s263
      %s265 = smul.u32 32, %s19
      %v267 = vld [vmem:[%s245] sm:$0xf]
      %v268 = vld [vmem:[%s245 + $0x4] sm:$0xf]
      %v269 = vld [vmem:[%s245 + $0x8] sm:$0xf]
      %v270 = vld [vmem:[%s245 + $0xc] sm:$0xf]
      %v271 = vld [vmem:[%s245 + $0x10] sm:$0xf]
      %v272 = vld [vmem:[%s245 + $0x14] sm:$0xf]
      %v273 = vld [vmem:[%s245 + $0x18] sm:$0xf]
      %v274 = vld [vmem:[%s245 + $0x1c] sm:$0xf]
      %v275 = vld [vmem:[%s245 + $0x20] sm:$0xf]
      %v276 = vld [vmem:[%s245 + $0x24] sm:$0xf]
      %v277 = vld [vmem:[%s245 + $0x28] sm:$0xf]
      %v278 = vld [vmem:[%s245 + $0x2c] sm:$0xf]
      %v279 = vld [vmem:[%s245 + $0x30] sm:$0xf]
      %v280 = vld [vmem:[%s245 + $0x34] sm:$0xf]
      %v281 = vld [vmem:[%s245 + $0x38] sm:$0xf]
      %v282 = vld [vmem:[%s245 + $0x3c] sm:$0xf]
      %v283 = vld [vmem:[%s245 + $0x40] sm:$0xf]
      %v284 = vld [vmem:[%s245 + $0x44] sm:$0xf]
      %v285 = vld [vmem:[%s245 + $0x48] sm:$0xf]
      %v286 = vld [vmem:[%s245 + $0x4c] sm:$0xf]
      %v287 = vld [vmem:[%s245 + $0x50] sm:$0xf]
      %v288 = vld [vmem:[%s245 + $0x54] sm:$0xf]
      %v289 = vld [vmem:[%s245 + $0x58] sm:$0xf]
      %v290 = vld [vmem:[%s245 + $0x5c] sm:$0xf]
      %v291 = vld [vmem:[%s245 + $0x60] sm:$0xf]
      %v292 = vld [vmem:[%s245 + $0x64] sm:$0xf]
      %v293 = vld [vmem:[%s245 + $0x68] sm:$0xf]
      %v294 = vld [vmem:[%s245 + $0x6c] sm:$0xf]
      %v295 = vld [vmem:[%s245 + $0x70] sm:$0xf]
      %v296 = vld [vmem:[%s245 + $0x74] sm:$0xf]
      %v297 = vld [vmem:[%s245 + $0x78] sm:$0xf]
      %v298 = vld [vmem:[%s245 + $0x7c] sm:$0xf]
      %v299 = vld [vmem:[%s250] sm:$0xf]
      %v300 = vld [vmem:[%s250 + $0x4] sm:$0xf]
      %v333 = vunpack.c.l.b16 %v267
      %v334 = vunpack.c.l.b16 %v268
      %v335 = vunpack.c.l.b16 %v269
      %v336 = vunpack.c.l.b16 %v270
      %v337 = vunpack.c.l.b16 %v271
      %v338 = vunpack.c.l.b16 %v272
      %v339 = vunpack.c.l.b16 %v273
      %v340 = vunpack.c.l.b16 %v274
      %v341 = vunpack.c.l.b16 %v275
      %v342 = vunpack.c.l.b16 %v276
      %v343 = vunpack.c.l.b16 %v277
      %v344 = vunpack.c.l.b16 %v278
      %v345 = vunpack.c.l.b16 %v279
      %v346 = vunpack.c.l.b16 %v280
      %v347 = vunpack.c.l.b16 %v281
      %v348 = vunpack.c.l.b16 %v282
      %v349 = vunpack.c.l.b16 %v283
      %v350 = vunpack.c.l.b16 %v284
      %v351 = vunpack.c.l.b16 %v285
      %v352 = vunpack.c.l.b16 %v286
      %v353 = vunpack.c.l.b16 %v287
      %v354 = vunpack.c.l.b16 %v288
      %v355 = vunpack.c.l.b16 %v289
      %v356 = vunpack.c.l.b16 %v290
      %v357 = vunpack.c.l.b16 %v291
      %v358 = vunpack.c.l.b16 %v292
      %v359 = vunpack.c.l.b16 %v293
      %v360 = vunpack.c.l.b16 %v294
      %v361 = vunpack.c.l.b16 %v295
      %v362 = vunpack.c.l.b16 %v296
      %v363 = vunpack.c.l.b16 %v297
      %v364 = vunpack.c.l.b16 %v298
      %v365 = vpack.c.b16 %v334, %v333
      %v366 = vpack.c.b16 %v336, %v335
      %v367 = vpack.c.b16 %v338, %v337
      %v368 = vpack.c.b16 %v340, %v339
      %v369 = vpack.c.b16 %v342, %v341
      %v370 = vpack.c.b16 %v344, %v343
      %v371 = vpack.c.b16 %v346, %v345
      %v372 = vpack.c.b16 %v348, %v347
      %v373 = vpack.c.b16 %v350, %v349
      %v374 = vpack.c.b16 %v352, %v351
      %v375 = vpack.c.b16 %v354, %v353
      %v376 = vpack.c.b16 %v356, %v355
      %v377 = vpack.c.b16 %v358, %v357
      %v378 = vpack.c.b16 %v360, %v359
      %v379 = vpack.c.b16 %v362, %v361
      %v380 = vpack.c.b16 %v364, %v363
      %v383 = vunpack.c.l.b16 %v299
      %v384 = vunpack.c.l.b16 %v300
      %v385 = vpack.c.b16 %v384, %v383
      %vm387 = vcmask 130048
      %v389 = vsel %vm387, %v365, 0
      %v392 = vsel %vm387, %v366, 0
      %v395 = vsel %vm387, %v367, 0
      %v398 = vsel %vm387, %v368, 0
      %v401 = vsel %vm387, %v369, 0
      %v404 = vsel %vm387, %v370, 0
      %v407 = vsel %vm387, %v371, 0
      %v410 = vsel %vm387, %v372, 0
      %v413 = vsel %vm387, %v373, 0
      %v416 = vsel %vm387, %v374, 0
      %v419 = vsel %vm387, %v375, 0
      %v422 = vsel %vm387, %v376, 0
      %v425 = vsel %vm387, %v377, 0
      %v428 = vsel %vm387, %v378, 0
      %v431 = vsel %vm387, %v379, 0
      %v434 = vsel %vm387, %v380, 0
      %436 = vmatpush.bf16.msra.mxu0 0
      %437 = vmatpush.bf16.msra.mxu0 0
      %438 = vmatpush.bf16.msra.mxu0 0
      %439 = vmatpush.bf16.msra.mxu0 0
      %440 = vmatpush.bf16.msra.mxu0 0
      %441 = vmatpush.bf16.msra.mxu0 0
      %442 = vmatpush.bf16.msra.mxu0 0
      %443 = vmatpush.bf16.msra.mxu0 %v385
      %444 = vmatmul.bf16.gmra.mxu0 %v389
      %v445 = vpop.f32.mrf.mxu0
      %v446 = vadd.f32 0.0, %v445
      %v447 = vpop.f32.mrf.mxu0
      %v448 = vadd.f32 0.0, %v447
      %449 = vmatmul.bf16.gmra.mxu0 %v392
      %v450 = vpop.f32.mrf.mxu0
      %v451 = vadd.f32 0.0, %v450
      %v452 = vpop.f32.mrf.mxu0
      %v453 = vadd.f32 0.0, %v452
      %454 = vmatmul.bf16.gmra.mxu0 %v395
      %v455 = vpop.f32.mrf.mxu0
      %v456 = vadd.f32 0.0, %v455
      %v457 = vpop.f32.mrf.mxu0
      %v458 = vadd.f32 0.0, %v457
      %459 = vmatmul.bf16.gmra.mxu0 %v398
      %v460 = vpop.f32.mrf.mxu0
      %v461 = vadd.f32 0.0, %v460
      %v462 = vpop.f32.mrf.mxu0
      %v463 = vadd.f32 0.0, %v462
      %464 = vmatmul.bf16.gmra.mxu0 %v401
      %v465 = vpop.f32.mrf.mxu0
      %v466 = vadd.f32 0.0, %v465
      %v467 = vpop.f32.mrf.mxu0
      %v468 = vadd.f32 0.0, %v467
      %469 = vmatmul.bf16.gmra.mxu0 %v404
      %v470 = vpop.f32.mrf.mxu0
      %v471 = vadd.f32 0.0, %v470
      %v472 = vpop.f32.mrf.mxu0
      %v473 = vadd.f32 0.0, %v472
      %474 = vmatmul.bf16.gmra.mxu0 %v407
      %v475 = vpop.f32.mrf.mxu0
      %v476 = vadd.f32 0.0, %v475
      %v477 = vpop.f32.mrf.mxu0
      %v478 = vadd.f32 0.0, %v477
      %479 = vmatmul.bf16.gmra.mxu0 %v410
      %v480 = vpop.f32.mrf.mxu0
      %v481 = vadd.f32 0.0, %v480
      %v482 = vpop.f32.mrf.mxu0
      %v483 = vadd.f32 0.0, %v482
      %484 = vmatmul.bf16.gmra.mxu0 %v413
      %v485 = vpop.f32.mrf.mxu0
      %v486 = vadd.f32 0.0, %v485
      %v487 = vpop.f32.mrf.mxu0
      %v488 = vadd.f32 0.0, %v487
      %489 = vmatmul.bf16.gmra.mxu0 %v416
      %v490 = vpop.f32.mrf.mxu0
      %v491 = vadd.f32 0.0, %v490
      %v492 = vpop.f32.mrf.mxu0
      %v493 = vadd.f32 0.0, %v492
      %494 = vmatmul.bf16.gmra.mxu0 %v419
      %v495 = vpop.f32.mrf.mxu0
      %v496 = vadd.f32 0.0, %v495
      %v497 = vpop.f32.mrf.mxu0
      %v498 = vadd.f32 0.0, %v497
      %499 = vmatmul.bf16.gmra.mxu0 %v422
      %v500 = vpop.f32.mrf.mxu0
      %v501 = vadd.f32 0.0, %v500
      %v502 = vpop.f32.mrf.mxu0
      %v503 = vadd.f32 0.0, %v502
      %504 = vmatmul.bf16.gmra.mxu0 %v425
      %v505 = vpop.f32.mrf.mxu0
      %v506 = vadd.f32 0.0, %v505
      %v507 = vpop.f32.mrf.mxu0
      %v508 = vadd.f32 0.0, %v507
      %509 = vmatmul.bf16.gmra.mxu0 %v428
      %v510 = vpop.f32.mrf.mxu0
      %v511 = vadd.f32 0.0, %v510
      %v512 = vpop.f32.mrf.mxu0
      %v513 = vadd.f32 0.0, %v512
      %514 = vmatmul.bf16.gmra.mxu0 %v431
      %v515 = vpop.f32.mrf.mxu0
      %v516 = vadd.f32 0.0, %v515
      %v517 = vpop.f32.mrf.mxu0
      %v518 = vadd.f32 0.0, %v517
      %519 = vmatmul.bf16.gmra.mxu0 %v434
      %v520 = vpop.f32.mrf.mxu0
      %v521 = vadd.f32 0.0, %v520
      %v522 = vpop.f32.mrf.mxu0
      %v523 = vadd.f32 0.0, %v522
      %524 = vdwg.mxu0
      %v525 = vld [vmem:[%s253] sm:$0x1]
      %v527 = vperm.slane %v525, 0
      %v529 = vmul.f32 %v446, %v527
      %v530 = vmul.f32 %v448, %v527
      %v531 = vmul.f32 %v451, %v527
      %v532 = vmul.f32 %v453, %v527
      %v533 = vmul.f32 %v456, %v527
      %v534 = vmul.f32 %v458, %v527
      %v535 = vmul.f32 %v461, %v527
      %v536 = vmul.f32 %v463, %v527
      %v537 = vmul.f32 %v466, %v527
      %v538 = vmul.f32 %v468, %v527
      %v539 = vmul.f32 %v471, %v527
      %v540 = vmul.f32 %v473, %v527
      %v541 = vmul.f32 %v476, %v527
      %v542 = vmul.f32 %v478, %v527
      %v543 = vmul.f32 %v481, %v527
      %v544 = vmul.f32 %v483, %v527
      %v545 = vmul.f32 %v486, %v527
      %v546 = vmul.f32 %v488, %v527
      %v547 = vmul.f32 %v491, %v527
      %v548 = vmul.f32 %v493, %v527
      %v549 = vmul.f32 %v496, %v527
      %v550 = vmul.f32 %v498, %v527
      %v551 = vmul.f32 %v501, %v527
      %v552 = vmul.f32 %v503, %v527
      %v553 = vmul.f32 %v506, %v527
      %v554 = vmul.f32 %v508, %v527
      %v555 = vmul.f32 %v511, %v527
      %v556 = vmul.f32 %v513, %v527
      %v557 = vmul.f32 %v516, %v527
      %v558 = vmul.f32 %v518, %v527
      %v559 = vmul.f32 %v521, %v527
      %v560 = vmul.f32 %v523, %v527
      %v561 = vld [vmem:[%s256] sm:$0x1]
      %v563 = vperm.slane %v561, 0
      %v565 = vadd.f32 %v529, %v563
      %v566 = vadd.f32 %v530, %v563
      %v567 = vadd.f32 %v531, %v563
      %v568 = vadd.f32 %v532, %v563
      %v569 = vadd.f32 %v533, %v563
      %v570 = vadd.f32 %v534, %v563
      %v571 = vadd.f32 %v535, %v563
      %v572 = vadd.f32 %v536, %v563
      %v573 = vadd.f32 %v537, %v563
      %v574 = vadd.f32 %v538, %v563
      %v575 = vadd.f32 %v539, %v563
      %v576 = vadd.f32 %v540, %v563
      %v577 = vadd.f32 %v541, %v563
      %v578 = vadd.f32 %v542, %v563
      %v579 = vadd.f32 %v543, %v563
      %v580 = vadd.f32 %v544, %v563
      %v581 = vadd.f32 %v545, %v563
      %v582 = vadd.f32 %v546, %v563
      %v583 = vadd.f32 %v547, %v563
      %v584 = vadd.f32 %v548, %v563
      %v585 = vadd.f32 %v549, %v563
      %v586 = vadd.f32 %v550, %v563
      %v587 = vadd.f32 %v551, %v563
      %v588 = vadd.f32 %v552, %v563
      %v589 = vadd.f32 %v553, %v563
      %v590 = vadd.f32 %v554, %v563
      %v591 = vadd.f32 %v555, %v563
      %v592 = vadd.f32 %v556, %v563
      %v593 = vadd.f32 %v557, %v563
      %v594 = vadd.f32 %v558, %v563
      %v595 = vadd.f32 %v559, %v563
      %v596 = vadd.f32 %v560, %v563
      %v597 = vpack.c.bf16 %v565, %v565
      %v598 = vpack.c.bf16 %v566, %v566
      %v599 = vpack.c.bf16 %v567, %v567
      %v600 = vpack.c.bf16 %v568, %v568
      %v601 = vpack.c.bf16 %v569, %v569
      %v602 = vpack.c.bf16 %v570, %v570
      %v603 = vpack.c.bf16 %v571, %v571
      %v604 = vpack.c.bf16 %v572, %v572
      %v605 = vpack.c.bf16 %v573, %v573
      %v606 = vpack.c.bf16 %v574, %v574
      %v607 = vpack.c.bf16 %v575, %v575
      %v608 = vpack.c.bf16 %v576, %v576
      %v609 = vpack.c.bf16 %v577, %v577
      %v610 = vpack.c.bf16 %v578, %v578
      %v611 = vpack.c.bf16 %v579, %v579
      %v612 = vpack.c.bf16 %v580, %v580
      %v613 = vpack.c.bf16 %v581, %v581
      %v614 = vpack.c.bf16 %v582, %v582
      %v615 = vpack.c.bf16 %v583, %v583
      %v616 = vpack.c.bf16 %v584, %v584
      %v617 = vpack.c.bf16 %v585, %v585
      %v618 = vpack.c.bf16 %v586, %v586
      %v619 = vpack.c.bf16 %v587, %v587
      %v620 = vpack.c.bf16 %v588, %v588
      %v621 = vpack.c.bf16 %v589, %v589
      %v622 = vpack.c.bf16 %v590, %v590
      %v623 = vpack.c.bf16 %v591, %v591
      %v624 = vpack.c.bf16 %v592, %v592
      %v625 = vpack.c.bf16 %v593, %v593
      %v626 = vpack.c.bf16 %v594, %v594
      %v627 = vpack.c.bf16 %v595, %v595
      %v628 = vpack.c.bf16 %v596, %v596
      %vm629 = vcmask 257024
      %630 = vst.msk [vmem:[%s264] sm:$0xf] %vm629, %v597
      %631 = vst.msk [vmem:[%s264 + $0x4] sm:$0xf] %vm629, %v598
      %632 = vst.msk [vmem:[%s264 + $0x8] sm:$0xf] %vm629, %v599
      %633 = vst.msk [vmem:[%s264 + $0xc] sm:$0xf] %vm629, %v600
      %634 = vst.msk [vmem:[%s264 + $0x10] sm:$0xf] %vm629, %v601
      %635 = vst.msk [vmem:[%s264 + $0x14] sm:$0xf] %vm629, %v602
      %636 = vst.msk [vmem:[%s264 + $0x18] sm:$0xf] %vm629, %v603
      %637 = vst.msk [vmem:[%s264 + $0x1c] sm:$0xf] %vm629, %v604
      %638 = vst.msk [vmem:[%s264 + $0x20] sm:$0xf] %vm629, %v605
      %639 = vst.msk [vmem:[%s264 + $0x24] sm:$0xf] %vm629, %v606
      %640 = vst.msk [vmem:[%s264 + $0x28] sm:$0xf] %vm629, %v607
      %641 = vst.msk [vmem:[%s264 + $0x2c] sm:$0xf] %vm629, %v608
      %642 = vst.msk [vmem:[%s264 + $0x30] sm:$0xf] %vm629, %v609
      %643 = vst.msk [vmem:[%s264 + $0x34] sm:$0xf] %vm629, %v610
      %644 = vst.msk [vmem:[%s264 + $0x38] sm:$0xf] %vm629, %v611
      %645 = vst.msk [vmem:[%s264 + $0x3c] sm:$0xf] %vm629, %v612
      %646 = vst.msk [vmem:[%s264 + $0x40] sm:$0xf] %vm629, %v613
      %647 = vst.msk [vmem:[%s264 + $0x44] sm:$0xf] %vm629, %v614
      %648 = vst.msk [vmem:[%s264 + $0x48] sm:$0xf] %vm629, %v615
      %649 = vst.msk [vmem:[%s264 + $0x4c] sm:$0xf] %vm629, %v616
      %650 = vst.msk [vmem:[%s264 + $0x50] sm:$0xf] %vm629, %v617
      %651 = vst.msk [vmem:[%s264 + $0x54] sm:$0xf] %vm629, %v618
      %652 = vst.msk [vmem:[%s264 + $0x58] sm:$0xf] %vm629, %v619
      %653 = vst.msk [vmem:[%s264 + $0x5c] sm:$0xf] %vm629, %v620
      %654 = vst.msk [vmem:[%s264 + $0x60] sm:$0xf] %vm629, %v621
      %655 = vst.msk [vmem:[%s264 + $0x64] sm:$0xf] %vm629, %v622
      %656 = vst.msk [vmem:[%s264 + $0x68] sm:$0xf] %vm629, %v623
      %657 = vst.msk [vmem:[%s264 + $0x6c] sm:$0xf] %vm629, %v624
      %658 = vst.msk [vmem:[%s264 + $0x70] sm:$0xf] %vm629, %v625
      %659 = vst.msk [vmem:[%s264 + $0x74] sm:$0xf] %vm629, %v626
      %660 = vst.msk [vmem:[%s264 + $0x78] sm:$0xf] %vm629, %v627
      %661 = vst.msk [vmem:[%s264 + $0x7c] sm:$0xf] %vm629, %v628
      %s662 = smul.u32 32, %s19
      %p663 = scmp.lt.s32.totalorder %s662, 63
      %s664 = scalar_select %p663, %s662, 63
      %p665 = scmp.lt.s32.totalorder %s20, 0
      %s666 = scalar_select %p665, %s20, 0
      %s667 = sadd.s32 %s666, %s664
      %s668 = smul.addr %s667, 4
      %s669 = scalar_lea.vmem %s4, %s668
      // Predicated region
      $region37: #{bottleneck_forward.6} parent=35 // pred_check
        %p670 = pneg %p151
      $region38: #{bottleneck_forward.6} parent=35 // pred_check_branch
        %672 = sbr.rel (%p670) target = $region40
      $region39: #{bottleneck_forward.6} parent=35 // pred_region
        %s673 = smul.u32 32, %s19
      $region40: #{bottleneck_forward.6} parent=35 // pred_fallthru
        _
    $region36: #{bottleneck_forward.6} parent=5 // pred_fallthru
      _
    %p674 = scmp.le.s32.totalorder 2, %s10
    // Predicated region
    $region41: #{bottleneck_forward.6} parent=5 // pred_check
      %p675 = pneg %p674
    $region42: #{bottleneck_forward.6} parent=5 // pred_check_branch
      %677 = sbr.rel (%p675) target = $region44
    $region43: #{bottleneck_forward.6} parent=5 // pred_region
      %s678 = ssub.s32 %s10, 2
      // Predicated region
      $region45: #{bottleneck_forward.6} parent=43 // pred_check
        %p679 = pneg %p157
      $region46: #{bottleneck_forward.6} parent=43 // pred_check_branch
        %681 = sbr.rel (%p679) target = $region48
      $region47: #{bottleneck_forward.6} parent=43 // pred_region
        %s682 = smul.u32 32, %s21
        %p683 = scmp.lt.s32.totalorder %s682, 63
        %s684 = scalar_select %p683, %s682, 63
        %p685 = scmp.lt.s32.totalorder %s22, 0
        %s686 = scalar_select %p685, %s22, 0
        %s687 = sadd.s32 %s686, %s684
        %s688 = smul.addr %s687, 4
        %s689 = scalar_lea.vmem %s4, %s688
      $region48: #{bottleneck_forward.6} parent=43 // pred_fallthru
        _
    $region44: #{bottleneck_forward.6} parent=5 // pred_fallthru
      _
  $region6: #{bottleneck_forward.6} parent=0 // loop_footer
    %s14 = sadd.s32 1, %s10
  $region7: #{bottleneck_forward.6} parent=0 // loop_footer_branch
    %9 = sbr.rel target = $region3
  $region8: #{bottleneck_forward.6} parent=0 // loop_exit
    _

// kernel: bottleneck_forward.5
$region0: #{bottleneck_forward.5}
  #allocation0 [shape = 'u32[]', space=smem, size = 0x4, offset = 0x4, fixed_abs, tag = 'smem constant byte address 0x4 - core index']
  #allocation1 [shape = 'u32[72,128]{1,0:T(1,128)}', space=vmem, size = 0x9000, scoped, tag = 'internal scratch']
  %s0 = inlined_call_operand.vmem [shape: bf16[2,326,8], index: 0, kind: input, shape index: {}]
  %s1 = inlined_call_operand.vmem [shape: bf16[3,24,8], index: 1, kind: input, shape index: {}]
  %s2 = inlined_call_operand.vmem [shape: f32[1,8], index: 2, kind: input, shape index: {}]
  %s3 = inlined_call_operand.vmem [shape: f32[1,8], index: 3, kind: input, shape index: {}]
  %s4 = inlined_call_operand.vmem [shape: bf16[2,288,8], index: 4, kind: output, shape index: {}]
  %s5 = sld [smem:[#allocation0]]
  $region49: #{bottleneck_forward.5} parent=0
    _
  %s7 = ssub.s32 1, %s5
  %s8 = scalar_select 0, %s7, %s5
  loop: start=0, step=1, limit=6
  $region2: #{bottleneck_forward.5} parent=0 // loop_pre_header
    _
  $region3: #{bottleneck_forward.5} parent=0 // loop_header
    %s10 = sphi 0, %s14
    %p11 = scmp.ge.s32.totalorder %s10, 6
    %s17 = sphi 0, %s29
    %s18 = sphi 0, %s25
    %s19 = sphi 0, %s17
    %s20 = sphi 0, %s18
    %s21 = sphi 0, %s19
    %s22 = sphi 0, %s20
    %s32 = sphi 0, %s34
    %s35 = sphi 0, %s32
    %s36 = sphi 0, %s35
    %s52 = sphi 0, %s36
    %s56 = sphi 0, %s56
    %s58 = sphi 0, %s56
    %s59 = sphi 0, %s58
    %s73 = sphi 0, %s59
    %s77 = sphi 0, %s77
    %s79 = sphi 0, %s77
    %s80 = sphi 0, %s79
    %s94 = sphi 0, %s80
    %s98 = sphi 0, %s98
    %s100 = sphi 0, %s98
    %s101 = sphi 0, %s100
    %s115 = sphi 0, %s101
    %s123 = sphi 0, %s125
    %s126 = sphi 0, %s123
    %s127 = sphi 0, %s126
    %s143 = sphi 0, %s127
  $region4: #{bottleneck_forward.5} parent=0 // loop_header_branch
    %13 = sbr.rel (%p11) target = $region8
  $region5: #{bottleneck_forward.5} parent=0 // loop_body
    %s15 = ssub.s32 %s10, 1
    %s16 = ssub.s32 %s10, 2
    %s23 = sadd.s32 1, %s18
    %p24 = scmp.ge.s32.totalorder %s23, 2
    %s25 = scalar_select %p24, 0, %s23
    %s26 = sadd.s32 1, %s17
    %s27 = scalar_select %p24, %s26, %s17
    %p28 = scmp.ge.s32.totalorder %s27, 2
    %s29 = scalar_select %p28, 0, %s27
    %s30 = ssub.s32 %s17, %s29
    %p31 = scmp.eq.s32.totalorder %s30, 0
    %s33 = sadd.s32 %s32, 1
    %s34 = scalar_select %p31, %s32, %s33
    %p37 = pneg %p31
    %p38 = scmp.eq.s32.totalorder %s10, 3
    %p39 = por %p37, %p38
    %p40 = scmp.ne.s32.totalorder %s32, %s35
    %p41 = scmp.eq.s32.totalorder %s10, 0
    %p42 = por %p40, %p41
    %p43 = scmp.ne.s32.totalorder %s32, %s35
    %p44 = scmp.eq.s32.totalorder %s15, 3
    %p45 = por %p43, %p44
    %p46 = scmp.ne.s32.totalorder %s35, %s36
    %p47 = scmp.eq.s32.totalorder %s15, 0
    %p48 = por %p46, %p47
    %p49 = scmp.ne.s32.totalorder %s35, %s36
    %p50 = scmp.eq.s32.totalorder %s16, 3
    %p51 = por %p49, %p50
    %p53 = scmp.ne.s32.totalorder %s36, %s52
    %p54 = scmp.eq.s32.totalorder %s16, 0
    %p55 = por %p53, %p54
    %s57 = sadd.s32 %s56, 1
    %p60 = scmp.eq.s32.totalorder %s10, 3
    %p61 = scmp.ne.s32.totalorder %s56, %s58
    %p62 = scmp.eq.s32.totalorder %s10, 0
    %p63 = por %p61, %p62
    %p64 = scmp.ne.s32.totalorder %s56, %s58
    %p65 = scmp.eq.s32.totalorder %s15, 3
    %p66 = por %p64, %p65
    %p67 = scmp.ne.s32.totalorder %s58, %s59
    %p68 = scmp.eq.s32.totalorder %s15, 0
    %p69 = por %p67, %p68
    %p70 = scmp.ne.s32.totalorder %s58, %s59
    %p71 = scmp.eq.s32.totalorder %s16, 3
    %p72 = por %p70, %p71
    %p74 = scmp.ne.s32.totalorder %s59, %s73
    %p75 = scmp.eq.s32.totalorder %s16, 0
    %p76 = por %p74, %p75
    %s78 = sadd.s32 %s77, 1
    %p81 = scmp.eq.s32.totalorder %s10, 3
    %p82 = scmp.ne.s32.totalorder %s77, %s79
    %p83 = scmp.eq.s32.totalorder %s10, 0
    %p84 = por %p82, %p83
    %p85 = scmp.ne.s32.totalorder %s77, %s79
    %p86 = scmp.eq.s32.totalorder %s15, 3
    %p87 = por %p85, %p86
    %p88 = scmp.ne.s32.totalorder %s79, %s80
    %p89 = scmp.eq.s32.totalorder %s15, 0
    %p90 = por %p88, %p89
    %p91 = scmp.ne.s32.totalorder %s79, %s80
    %p92 = scmp.eq.s32.totalorder %s16, 3
    %p93 = por %p91, %p92
    %p95 = scmp.ne.s32.totalorder %s80, %s94
    %p96 = scmp.eq.s32.totalorder %s16, 0
    %p97 = por %p95, %p96
    %s99 = sadd.s32 %s98, 1
    %p102 = scmp.eq.s32.totalorder %s10, 3
    %p103 = scmp.ne.s32.totalorder %s98, %s100
    %p104 = scmp.eq.s32.totalorder %s10, 0
    %p105 = por %p103, %p104
    %p106 = scmp.ne.s32.totalorder %s98, %s100
    %p107 = scmp.eq.s32.totalorder %s15, 3
    %p108 = por %p106, %p107
    %p109 = scmp.ne.s32.totalorder %s100, %s101
    %p110 = scmp.eq.s32.totalorder %s15, 0
    %p111 = por %p109, %p110
    %p112 = scmp.ne.s32.totalorder %s100, %s101
    %p113 = scmp.eq.s32.totalorder %s16, 3
    %p114 = por %p112, %p113
    %p116 = scmp.ne.s32.totalorder %s101, %s115
    %p117 = scmp.eq.s32.totalorder %s16, 0
    %p118 = por %p116, %p117
    %s119 = ssub.s32 %s17, %s29
    %s120 = ssub.s32 %s18, %s25
    %s121 = sor.u32 %s119, %s120
    %p122 = scmp.eq.s32.totalorder %s121, 0
    %s124 = sadd.s32 %s123, 1
    %s125 = scalar_select %p122, %s123, %s124
    %p128 = pneg %p122
    %p129 = scmp.eq.s32.totalorder %s10, 3
    %p130 = por %p128, %p129
    %p131 = scmp.ne.s32.totalorder %s123, %s126
    %p132 = scmp.eq.s32.totalorder %s10, 0
    %p133 = por %p131, %p132
    %p134 = scmp.ne.s32.totalorder %s123, %s126
    %p135 = scmp.eq.s32.totalorder %s15, 3
    %p136 = por %p134, %p135
    %p137 = scmp.ne.s32.totalorder %s126, %s127
    %p138 = scmp.eq.s32.totalorder %s15, 0
    %p139 = por %p137, %p138
    %p140 = scmp.ne.s32.totalorder %s126, %s127
    %p141 = scmp.eq.s32.totalorder %s16, 3
    %p142 = por %p140, %p141
    %p144 = scmp.ne.s32.totalorder %s127, %s143
    %p145 = scmp.eq.s32.totalorder %s16, 0
    %p146 = por %p144, %p145
    %p147 = scmp.le.s32.totalorder 1, %s10
    %p148 = scmp.lt.s32.totalorder %s10, 5
    %p149 = pnand %p147, %p148
    %p150 = pneg %p149
    // Predicated region
    $region9: #{bottleneck_forward.5} parent=5 // pred_check
      _
    $region10: #{bottleneck_forward.5} parent=5 // pred_check_branch
      %152 = sbr.rel (%p149) target = $region12
    $region11: #{bottleneck_forward.5} parent=5 // pred_region
      %s153 = ssub.s32 %s10, 1
      // Predicated region
      $region13: #{bottleneck_forward.5} parent=11 // pred_check
        %p154 = pneg %p69
      $region14: #{bottleneck_forward.5} parent=11 // pred_check_branch
        %156 = sbr.rel (%p154) target = $region16
      $region15: #{bottleneck_forward.5} parent=11 // pred_region
        _
      $region16: #{bottleneck_forward.5} parent=11 // pred_fallthru
        _
      // Predicated region
      $region17: #{bottleneck_forward.5} parent=11 // pred_check
        %p157 = pneg %p90
      $region18: #{bottleneck_forward.5} parent=11 // pred_check_branch
        %159 = sbr.rel (%p157) target = $region20
      $region19: #{bottleneck_forward.5} parent=11 // pred_region
        _
      $region20: #{bottleneck_forward.5} parent=11 // pred_fallthru
        _
      // Predicated region
      $region21: #{bottleneck_forward.5} parent=11 // pred_check
        %p160 = pneg %p111
      $region22: #{bottleneck_forward.5} parent=11 // pred_check_branch
        %162 = sbr.rel (%p160) target = $region24
      $region23: #{bottleneck_forward.5} parent=11 // pred_region
        _
      $region24: #{bottleneck_forward.5} parent=11 // pred_fallthru
        _
    $region12: #{bottleneck_forward.5} parent=5 // pred_fallthru
      _
    %p163 = scmp.lt.s32.totalorder %s10, 4
    // Predicated region
    $region25: #{bottleneck_forward.5} parent=5 // pred_check
      %p164 = pneg %p163
    $region26: #{bottleneck_forward.5} parent=5 // pred_check_branch
      %166 = sbr.rel (%p164) target = $region28
    $region27: #{bottleneck_forward.5} parent=5 // pred_region
      // Predicated region
      $region29: #{bottleneck_forward.5} parent=27 // pred_check
        %p167 = pneg %p42
      $region30: #{bottleneck_forward.5} parent=27 // pred_check_branch
        %169 = sbr.rel (%p167) target = $region32
      $region31: #{bottleneck_forward.5} parent=27 // pred_region
        %p170 = scmp.lt.s32.totalorder %s17, 1
        %s171 = scalar_select %p170, %s17, 1
        %s172 = smul.addr %s171, 41
        %s173 = smul.addr %s172, 4
        %s174 = scalar_lea.vmem %s0, %s173
      $region32: #{bottleneck_forward.5} parent=27 // pred_fallthru
        _
    $region28: #{bottleneck_forward.5} parent=5 // pred_fallthru
      _
    %p175 = scmp.le.s32.totalorder 1, %s10
    %p176 = scmp.lt.s32.totalorder %s10, 5
    %p177 = pnand %p175, %p176
    %p178 = pneg %p177
    // Predicated region
    $region33: #{bottleneck_forward.5} parent=5 // pred_check
      _
    $region34: #{bottleneck_forward.5} parent=5 // pred_check_branch
      %180 = sbr.rel (%p177) target = $region36
    $region35: #{bottleneck_forward.5} parent=5 // pred_region
      %s181 = ssub.s32 %s10, 1
      %p182 = scmp.lt.s32.totalorder %s19, 1
      %s183 = scalar_select %p182, %s19, 1
      %s184 = smul.addr %s183, 41
      %s185 = smul.addr %s184, 4
      %s186 = scalar_lea.vmem %s0, %s185
      %p187 = pneg %p48
      %p188 = pneg %p45
      %p189 = pneg %p69
      %p190 = pneg %p66
      %p191 = pneg %p90
      %p192 = pneg %p87
      %p193 = pneg %p111
      %p194 = pneg %p108
      %p195 = pneg %p139
      %p196 = pneg %p136
      %s197 = smul.u32 18, %s20
      %p198 = scmp.lt.s32.totalorder %s19, 1
      %s199 = scalar_select %p198, %s19, 1
      %p200 = scmp.lt.s32.totalorder %s197, 35
      %s201 = scalar_select %p200, %s197, 35
      %s202 = smul.addr %s199, 36
      %s203 = sadd.s32 %s201, %s202
      %s204 = smul.addr %s203, 4
      %s205 = scalar_lea.vmem %s4, %s204
      %p206 = scmp.lt.s32.totalorder %s19, 1
      %s207 = scalar_select %p206, %s19, 1
      %s208 = smul.addr %s207, 41
      %s209 = smul.addr %s208, 4
      %s210 = scalar_lea.vmem %s0, %s209
      %s211 = smul.u32 18, %s20
      %p212 = scmp.lt.s32.totalorder %s19, 1
      %s213 = scalar_select %p212, %s19, 1
      %p214 = scmp.lt.s32.totalorder %s211, 35
      %s215 = scalar_select %p214, %s211, 35
      %s216 = smul.addr %s213, 36
      %s217 = sadd.s32 %s215, %s216
      %s218 = smul.addr %s217, 4
      %s219 = scalar_lea.vmem %s4, %s218
      %s220 = smul.u32 18, %s20
      %s222 = smul.u32 %s20, 144
      %s223 = sshra.s32 %s222, 3
      %s224 = sand.u32 %s222, 7
      %s225 = smul.addr %s223, 4
      %s226 = scalar_lea.vmem %s210, %s225
      %v227 = vld [vmem:[%s226] sm:$0xf]
      %v228 = vld [vmem:[%s226 + $0x4] sm:$0xf]
      %v229 = vld [vmem:[%s226 + $0x8] sm:$0xf]
      %v230 = vld [vmem:[%s226 + $0xc] sm:$0xf]
      %v231 = vld [vmem:[%s226 + $0x10] sm:$0xf]
      %v232 = vld [vmem:[%s226 + $0x14] sm:$0xf]
      %v233 = vld [vmem:[%s226 + $0x18] sm:$0xf]
      %v234 = vld [vmem:[%s226 + $0x1c] sm:$0xf]
      %v235 = vld [vmem:[%s226 + $0x20] sm:$0xf]
      %v236 = vld [vmem:[%s226 + $0x24] sm:$0xf]
      %v237 = vld [vmem:[%s226 + $0x28] sm:$0xf]
      %v238 = vld [vmem:[%s226 + $0x2c] sm:$0xf]
      %v239 = vld [vmem:[%s226 + $0x30] sm:$0xf]
      %v240 = vld [vmem:[%s226 + $0x34] sm:$0xf]
      %v241 = vld [vmem:[%s226 + $0x38] sm:$0xf]
      %v242 = vld [vmem:[%s226 + $0x3c] sm:$0xf]
      %v243 = vld [vmem:[%s226 + $0x40] sm:$0xf]
      %v244 = vld [vmem:[%s226 + $0x44] sm:$0xf]
      %v245 = vld [vmem:[%s226 + $0x48] sm:$0xf]
      %v246 = vld [vmem:[%s226 + $0x4c] sm:$0xf]
      %v247 = vld [vmem:[%s226 + $0x50] sm:$0xf]
      %v248 = vld [vmem:[%s226 + $0x54] sm:$0xf]
      %v249 = vld [vmem:[%s226 + $0x58] sm:$0x7]
      %v250 = vld [vmem:[%s1] sm:$0xf]
      %v251 = vld [vmem:[%s1 + $0x4] sm:$0xf]
      %v252 = vld [vmem:[%s1 + $0x8] sm:$0xf]
      %v272 = vunpack.c.l.b16 %v227
      %v273 = vunpack.c.l.b16 %v228
      %v274 = vunpack.c.l.b16 %v229
      %v275 = vunpack.c.l.b16 %v230
      %v276 = vunpack.c.l.b16 %v231
      %v277 = vunpack.c.l.b16 %v232
      %v278 = vunpack.c.l.b16 %v233
      %v279 = vunpack.c.l.b16 %v234
      %v280 = vunpack.c.l.b16 %v235
      %v281 = vunpack.c.l.b16 %v236
      %v282 = vunpack.c.l.b16 %v237
      %v283 = vunpack.c.l.b16 %v238
      %v284 = vunpack.c.l.b16 %v239
      %v285 = vunpack.c.l.b16 %v240
      %v286 = vunpack.c.l.b16 %v241
      %v287 = vunpack.c.l.b16 %v242
      %v288 = vunpack.c.l.b16 %v243
      %v289 = vunpack.c.l.b16 %v244
      %v290 = vunpack.c.l.b16 %v245
      %v291 = vpack.c.b16 %v273, %v272
      %v292 = vpack.c.b16 %v275, %v274
      %v293 = vpack.c.b16 %v277, %v276
      %v294 = vpack.c.b16 %v279, %v278
      %v295 = vpack.c.b16 %v281, %v280
      %v296 = vpack.c.b16 %v283, %v282
      %v297 = vpack.c.b16 %v285, %v284
      %v298 = vpack.c.b16 %v287, %v286
      %v299 = vpack.c.b16 %v289, %v288
      %v300 = vpack.c.b16 %v290, %v290
      %vm301 = vsmask.f32 7424
      %v303 = vshrl.u32 %v291, 16
      %v305 = vshll.u32 %v291, 16
      %v307 = vrot.slane %v305, 1
      %v308 = vor.u32 %v303, %v307
      %v310 = vshll.u32 %v292, 16
      %v312 = vrot.slane %v310, 1
      %v313 = vsel %vm301, %v308, %v312
      %v314 = vshrl.u32 %v292, 16
      %v316 = vor.u32 %v314, %v312
      %v318 = vshll.u32 %v293, 16
      %v320 = vrot.slane %v318, 1
      %v321 = vsel %vm301, %v316, %v320
      %v322 = vshrl.u32 %v293, 16
      %v324 = vor.u32 %v322, %v320
      %v326 = vshll.u32 %v294, 16
      %v328 = vrot.slane %v326, 1
      %v329 = vsel %vm301, %v324, %v328
      %v330 = vshrl.u32 %v294, 16
      %v332 = vor.u32 %v330, %v328
      %v334 = vshll.u32 %v295, 16
      %v336 = vrot.slane %v334, 1
      %v337 = vsel %vm301, %v332, %v336
      %v338 = vshrl.u32 %v295, 16
      %v340 = vor.u32 %v338, %v336
      %v342 = vshll.u32 %v296, 16
      %v344 = vrot.slane %v342, 1
      %v345 = vsel %vm301, %v340, %v344
      %v346 = vshrl.u32 %v296, 16
      %v348 = vor.u32 %v346, %v344
      %v350 = vshll.u32 %v297, 16
      %v352 = vrot.slane %v350, 1
      %v353 = vsel %vm301, %v348, %v352
      %v354 = vshrl.u32 %v297, 16
      %v356 = vor.u32 %v354, %v352
      %v358 = vshll.u32 %v298, 16
      %v360 = vrot.slane %v358, 1
      %v361 = vsel %vm301, %v356, %v360
      %v362 = vshrl.u32 %v298, 16
      %v364 = vor.u32 %v362, %v360
      %v366 = vshll.u32 %v299, 16
      %v368 = vrot.slane %v366, 1
      %v369 = vsel %vm301, %v364, %v368
      %v370 = vshrl.u32 %v299, 16
      %v372 = vor.u32 %v370, %v368
      %v374 = vshll.u32 %v300, 16
      %v376 = vrot.slane %v374, 1
      %v377 = vsel %vm301, %v372, %v376
      %vm378 = vcmask 64512
      %v380 = vsel %vm378, %v313, 0
      %v383 = vsel %vm378, %v321, 0
      %v386 = vsel %vm378, %v329, 0
      %v389 = vsel %vm378, %v337, 0
      %v392 = vsel %vm378, %v345, 0
      %v395 = vsel %vm378, %v353, 0
      %v398 = vsel %vm378, %v361, 0
      %v401 = vsel %vm378, %v369, 0
      %v404 = vsel %vm378, %v377, 0
      %vm406 = vcmask 1043456
      %v408 = vsel %vm406, %v251, 0
      %410 = vmatpush.bf16.msra.mxu0 0
      %411 = vmatpush.bf16.msra.mxu0 0
      %412 = vmatpush.bf16.msra.mxu0 0
      %413 = vmatpush.bf16.msra.mxu0 0
      %414 = vmatpush.bf16.msra.mxu0 0
      %415 = vmatpush.bf16.msra.mxu0 0
      %416 = vmatpush.bf16.msra.mxu0 0
      %417 = vmatpush.bf16.msra.mxu0 %v408
      %418 = vmatmul.bf16.gmra.mxu0 %v380
      %v419 = vpop.f32.mrf.mxu0
      %v420 = vadd.f32 0.0, %v419
      %v421 = vpop.f32.mrf.mxu0
      %v422 = vadd.f32 0.0, %v421
      %423 = vmatmul.bf16.gmra.mxu0 %v383
      %v424 = vpop.f32.mrf.mxu0
      %v425 = vadd.f32 0.0, %v424
      %v426 = vpop.f32.mrf.mxu0
      %v427 = vadd.f32 0.0, %v426
      %428 = vmatmul.bf16.gmra.mxu0 %v386
      %v429 = vpop.f32.mrf.mxu0
      %v430 = vadd.f32 0.0, %v429
      %v431 = vpop.f32.mrf.mxu0
      %v432 = vadd.f32 0.0, %v431
      %433 = vmatmul.bf16.gmra.mxu0 %v389
      %v434 = vpop.f32.mrf.mxu0
      %v435 = vadd.f32 0.0, %v434
      %v436 = vpop.f32.mrf.mxu0
      %v437 = vadd.f32 0.0, %v436
      %438 = vmatmul.bf16.gmra.mxu0 %v392
      %v439 = vpop.f32.mrf.mxu0
      %v440 = vadd.f32 0.0, %v439
      %v441 = vpop.f32.mrf.mxu0
      %v442 = vadd.f32 0.0, %v441
      %443 = vmatmul.bf16.gmra.mxu0 %v395
      %v444 = vpop.f32.mrf.mxu0
      %v445 = vadd.f32 0.0, %v444
      %v446 = vpop.f32.mrf.mxu0
      %v447 = vadd.f32 0.0, %v446
      %448 = vmatmul.bf16.gmra.mxu0 %v398
      %v449 = vpop.f32.mrf.mxu0
      %v450 = vadd.f32 0.0, %v449
      %v451 = vpop.f32.mrf.mxu0
      %v452 = vadd.f32 0.0, %v451
      %453 = vmatmul.bf16.gmra.mxu0 %v401
      %v454 = vpop.f32.mrf.mxu0
      %v455 = vadd.f32 0.0, %v454
      %v456 = vpop.f32.mrf.mxu0
      %v457 = vadd.f32 0.0, %v456
      %458 = vmatmul.bf16.gmra.mxu0 %v404
      %v459 = vpop.f32.mrf.mxu0
      %v460 = vadd.f32 0.0, %v459
      %v461 = vpop.f32.mrf.mxu0
      %v462 = vadd.f32 0.0, %v461
      %463 = vdwg.mxu0
      %v464 = vsel %vm378, %v291, 0
      %v466 = vsel %vm378, %v292, 0
      %v468 = vsel %vm378, %v293, 0
      %v470 = vsel %vm378, %v294, 0
      %v472 = vsel %vm378, %v295, 0
      %v474 = vsel %vm378, %v296, 0
      %v476 = vsel %vm378, %v297, 0
      %v478 = vsel %vm378, %v298, 0
      %v480 = vsel %vm378, %v299, 0
      %v483 = vsel %vm406, %v250, 0
      %485 = vmatpush.bf16.msra.mxu0 0
      %486 = vmatpush.bf16.msra.mxu0 0
      %487 = vmatpush.bf16.msra.mxu0 0
      %488 = vmatpush.bf16.msra.mxu0 0
      %489 = vmatpush.bf16.msra.mxu0 0
      %490 = vmatpush.bf16.msra.mxu0 0
      %491 = vmatpush.bf16.msra.mxu0 0
      %492 = vmatpush.bf16.msra.mxu0 %v483
      %493 = vmatmul.bf16.gmra.mxu0 %v464
      %v494 = vpop.f32.mrf.mxu0
      %v495 = vadd.f32 %v420, %v494
      %v496 = vpop.f32.mrf.mxu0
      %v497 = vadd.f32 %v422, %v496
      %498 = vmatmul.bf16.gmra.mxu0 %v466
      %v499 = vpop.f32.mrf.mxu0
      %v500 = vadd.f32 %v425, %v499
      %v501 = vpop.f32.mrf.mxu0
      %v502 = vadd.f32 %v427, %v501
      %503 = vmatmul.bf16.gmra.mxu0 %v468
      %v504 = vpop.f32.mrf.mxu0
      %v505 = vadd.f32 %v430, %v504
      %v506 = vpop.f32.mrf.mxu0
      %v507 = vadd.f32 %v432, %v506
      %508 = vmatmul.bf16.gmra.mxu0 %v470
      %v509 = vpop.f32.mrf.mxu0
      %v510 = vadd.f32 %v435, %v509
      %v511 = vpop.f32.mrf.mxu0
      %v512 = vadd.f32 %v437, %v511
      %513 = vmatmul.bf16.gmra.mxu0 %v472
      %v514 = vpop.f32.mrf.mxu0
      %v515 = vadd.f32 %v440, %v514
      %v516 = vpop.f32.mrf.mxu0
      %v517 = vadd.f32 %v442, %v516
      %518 = vmatmul.bf16.gmra.mxu0 %v474
      %v519 = vpop.f32.mrf.mxu0
      %v520 = vadd.f32 %v445, %v519
      %v521 = vpop.f32.mrf.mxu0
      %v522 = vadd.f32 %v447, %v521
      %523 = vmatmul.bf16.gmra.mxu0 %v476
      %v524 = vpop.f32.mrf.mxu0
      %v525 = vadd.f32 %v450, %v524
      %v526 = vpop.f32.mrf.mxu0
      %v527 = vadd.f32 %v452, %v526
      %528 = vmatmul.bf16.gmra.mxu0 %v478
      %v529 = vpop.f32.mrf.mxu0
      %v530 = vadd.f32 %v455, %v529
      %v531 = vpop.f32.mrf.mxu0
      %v532 = vadd.f32 %v457, %v531
      %533 = vmatmul.bf16.gmra.mxu0 %v480
      %v534 = vpop.f32.mrf.mxu0
      %v535 = vadd.f32 %v460, %v534
      %v536 = vpop.f32.mrf.mxu0
      %v537 = vadd.f32 %v462, %v536
      %538 = vdwg.mxu0
      %vm539 = vcmask 1046528
      %v540 = vrot.slane %v291, 1
      %v541 = vrot.slane %v292, 1
      %v542 = vsel %vm539, %v540, %v541
      %v543 = vrot.slane %v293, 1
      %v544 = vsel %vm539, %v541, %v543
      %v545 = vrot.slane %v294, 1
      %v546 = vsel %vm539, %v543, %v545
      %v547 = vrot.slane %v295, 1
      %v548 = vsel %vm539, %v545, %v547
      %v549 = vrot.slane %v296, 1
      %v550 = vsel %vm539, %v547, %v549
      %v551 = vrot.slane %v297, 1
      %v552 = vsel %vm539, %v549, %v551
      %v553 = vrot.slane %v298, 1
      %v554 = vsel %vm539, %v551, %v553
      %v555 = vrot.slane %v299, 1
      %v556 = vsel %vm539, %v553, %v555
      %v557 = vrot.slane %v300, 1
      %v558 = vsel %vm539, %v555, %v557
      %v560 = vsel %vm378, %v542, 0
      %v563 = vsel %vm378, %v544, 0
      %v566 = vsel %vm378, %v546, 0
      %v569 = vsel %vm378, %v548, 0
      %v572 = vsel %vm378, %v550, 0
      %v575 = vsel %vm378, %v552, 0
      %v578 = vsel %vm378, %v554, 0
      %v581 = vsel %vm378, %v556, 0
      %v584 = vsel %vm378, %v558, 0
      %v587 = vsel %vm406, %v252, 0
      %589 = vmatpush.bf16.msra.mxu0 0
      %590 = vmatpush.bf16.msra.mxu0 0
      %591 = vmatpush.bf16.msra.mxu0 0
      %592 = vmatpush.bf16.msra.mxu0 0
      %593 = vmatpush.bf16.msra.mxu0 0
      %594 = vmatpush.bf16.msra.mxu0 0
      %595 = vmatpush.bf16.msra.mxu0 0
      %596 = vmatpush.bf16.msra.mxu0 %v587
      %597 = vmatmul.bf16.gmra.mxu0 %v560
      %v598 = vpop.f32.mrf.mxu0
      %v599 = vadd.f32 0.0, %v598
      %v600 = vpop.f32.mrf.mxu0
      %v601 = vadd.f32 0.0, %v600
      %602 = vmatmul.bf16.gmra.mxu0 %v563
      %v603 = vpop.f32.mrf.mxu0
      %v604 = vadd.f32 0.0, %v603
      %v605 = vpop.f32.mrf.mxu0
      %v606 = vadd.f32 0.0, %v605
      %607 = vmatmul.bf16.gmra.mxu0 %v566
      %v608 = vpop.f32.mrf.mxu0
      %v609 = vadd.f32 0.0, %v608
      %v610 = vpop.f32.mrf.mxu0
      %v611 = vadd.f32 0.0, %v610
      %612 = vmatmul.bf16.gmra.mxu0 %v569
      %v613 = vpop.f32.mrf.mxu0
      %v614 = vadd.f32 0.0, %v613
      %v615 = vpop.f32.mrf.mxu0
      %v616 = vadd.f32 0.0, %v615
      %617 = vmatmul.bf16.gmra.mxu0 %v572
      %v618 = vpop.f32.mrf.mxu0
      %v619 = vadd.f32 0.0, %v618
      %v620 = vpop.f32.mrf.mxu0
      %v621 = vadd.f32 0.0, %v620
      %622 = vmatmul.bf16.gmra.mxu0 %v575
      %v623 = vpop.f32.mrf.mxu0
      %v624 = vadd.f32 0.0, %v623
      %v625 = vpop.f32.mrf.mxu0
      %v626 = vadd.f32 0.0, %v625
      %627 = vmatmul.bf16.gmra.mxu0 %v578
      %v628 = vpop.f32.mrf.mxu0
      %v629 = vadd.f32 0.0, %v628
      %v630 = vpop.f32.mrf.mxu0
      %v631 = vadd.f32 0.0, %v630
      %632 = vmatmul.bf16.gmra.mxu0 %v581
      %v633 = vpop.f32.mrf.mxu0
      %v634 = vadd.f32 0.0, %v633
      %v635 = vpop.f32.mrf.mxu0
      %v636 = vadd.f32 0.0, %v635
      %637 = vmatmul.bf16.gmra.mxu0 %v584
      %v638 = vpop.f32.mrf.mxu0
      %v639 = vadd.f32 0.0, %v638
      %v640 = vpop.f32.mrf.mxu0
      %v641 = vadd.f32 0.0, %v640
      %642 = vdwg.mxu0
      %v643 = vadd.f32 %v495, %v599
      %v644 = vadd.f32 %v497, %v601
      %v645 = vadd.f32 %v500, %v604
      %v646 = vadd.f32 %v502, %v606
      %v647 = vadd.f32 %v505, %v609
      %v648 = vadd.f32 %v507, %v611
      %v649 = vadd.f32 %v510, %v614
      %v650 = vadd.f32 %v512, %v616
      %v651 = vadd.f32 %v515, %v619
      %v652 = vadd.f32 %v517, %v621
      %v653 = vadd.f32 %v520, %v624
      %v654 = vadd.f32 %v522, %v626
      %v655 = vadd.f32 %v525, %v629
      %v656 = vadd.f32 %v527, %v631
      %v657 = vadd.f32 %v530, %v634
      %v658 = vadd.f32 %v532, %v636
      %v659 = vadd.f32 %v535, %v639
      %v660 = vadd.f32 %v537, %v641
      %s661 = scalar_lea.vmem %s1, 12
      %v662 = vld [vmem:[%s661] sm:$0xf]
      %v663 = vld [vmem:[%s661 + $0x4] sm:$0xf]
      %v664 = vld [vmem:[%s661 + $0x8] sm:$0xf]
      %v667 = vunpack.c.l.b16 %v246
      %v668 = vunpack.c.l.b16 %v247
      %v669 = vpack.c.b16 %v667, %v290
      %v670 = vpack.c.b16 %v668, %v668
      %v671 = vrot.slane %v669, 1
      %v672 = vsel %vm539, %v555, %v671
      %v673 = vrot.slane %v670, 1
      %v674 = vsel %vm539, %v671, %v673
      %v676 = vsel %vm378, %v672, 0
      %v679 = vsel %vm378, %v674, 0
      %v682 = vsel %vm406, %v662, 0
      %684 = vmatpush.bf16.msra.mxu0 0
      %685 = vmatpush.bf16.msra.mxu0 0
      %686 = vmatpush.bf16.msra.mxu0 0
      %687 = vmatpush.bf16.msra.mxu0 0
      %688 = vmatpush.bf16.msra.mxu0 0
      %689 = vmatpush.bf16.msra.mxu0 0
      %690 = vmatpush.bf16.msra.mxu0 0
      %691 = vmatpush.bf16.msra.mxu0 %v682
      %692 = vmatmul.bf16.gmra.mxu0 %v563
      %v693 = vpop.f32.mrf.mxu0
      %v694 = vadd.f32 0.0, %v693
      %v695 = vpop.f32.mrf.mxu0
      %v696 = vadd.f32 0.0, %v695
      %697 = vmatmul.bf16.gmra.mxu0 %v566
      %v698 = vpop.f32.mrf.mxu0
      %v699 = vadd.f32 0.0, %v698
      %v700 = vpop.f32.mrf.mxu0
      %v701 = vadd.f32 0.0, %v700
      %702 = vmatmul.bf16.gmra.mxu0 %v569
      %v703 = vpop.f32.mrf.mxu0
      %v704 = vadd.f32 0.0, %v703
      %v705 = vpop.f32.mrf.mxu0
      %v706 = vadd.f32 0.0, %v705
      %707 = vmatmul.bf16.gmra.mxu0 %v572
      %v708 = vpop.f32.mrf.mxu0
      %v709 = vadd.f32 0.0, %v708
      %v710 = vpop.f32.mrf.mxu0
      %v711 = vadd.f32 0.0, %v710
      %712 = vmatmul.bf16.gmra.mxu0 %v575
      %v713 = vpop.f32.mrf.mxu0
      %v714 = vadd.f32 0.0, %v713
      %v715 = vpop.f32.mrf.mxu0
      %v716 = vadd.f32 0.0, %v715
      %717 = vmatmul.bf16.gmra.mxu0 %v578
      %v718 = vpop.f32.mrf.mxu0
      %v719 = vadd.f32 0.0, %v718
      %v720 = vpop.f32.mrf.mxu0
      %v721 = vadd.f32 0.0, %v720
      %722 = vmatmul.bf16.gmra.mxu0 %v581
      %v723 = vpop.f32.mrf.mxu0
      %v724 = vadd.f32 0.0, %v723
      %v725 = vpop.f32.mrf.mxu0
      %v726 = vadd.f32 0.0, %v725
      %727 = vmatmul.bf16.gmra.mxu0 %v676
      %v728 = vpop.f32.mrf.mxu0
      %v729 = vadd.f32 0.0, %v728
      %v730 = vpop.f32.mrf.mxu0
      %v731 = vadd.f32 0.0, %v730
      %732 = vmatmul.bf16.gmra.mxu0 %v679
      %v733 = vpop.f32.mrf.mxu0
      %v734 = vadd.f32 0.0, %v733
      %v735 = vpop.f32.mrf.mxu0
      %v736 = vadd.f32 0.0, %v735
      %737 = vdwg.mxu0
      %v738 = vadd.f32 %v643, %v694
      %v739 = vadd.f32 %v644, %v696
      %v740 = vadd.f32 %v645, %v699
      %v741 = vadd.f32 %v646, %v701
      %v742 = vadd.f32 %v647, %v704
      %v743 = vadd.f32 %v648, %v706
      %v744 = vadd.f32 %v649, %v709
      %v745 = vadd.f32 %v650, %v711
      %v746 = vadd.f32 %v651, %v714
      %v747 = vadd.f32 %v652, %v716
      %v748 = vadd.f32 %v653, %v719
      %v749 = vadd.f32 %v654, %v721
      %v750 = vadd.f32 %v655, %v724
      %v751 = vadd.f32 %v656, %v726
      %v752 = vadd.f32 %v657, %v729
      %v753 = vadd.f32 %v658, %v731
      %v754 = vadd.f32 %v659, %v734
      %v755 = vadd.f32 %v660, %v736
      %vm756 = vsmask.f32 6400
      %v757 = vrot.slane %v314, 1
      %v758 = vrot.slane %v310, 2
      %v759 = vor.u32 %v757, %v758
      %v760 = vrot.slane %v322, 1
      %v761 = vrot.slane %v318, 2
      %v762 = vor.u32 %v760, %v761
      %v763 = vsel %vm756, %v759, %v762
      %v764 = vrot.slane %v330, 1
      %v765 = vrot.slane %v326, 2
      %v766 = vor.u32 %v764, %v765
      %v767 = vsel %vm756, %v762, %v766
      %v768 = vrot.slane %v338, 1
      %v769 = vrot.slane %v334, 2
      %v770 = vor.u32 %v768, %v769
      %v771 = vsel %vm756, %v766, %v770
      %v772 = vrot.slane %v346, 1
      %v773 = vrot.slane %v342, 2
      %v774 = vor.u32 %v772, %v773
      %v775 = vsel %vm756, %v770, %v774
      %v776 = vrot.slane %v354, 1
      %v777 = vrot.slane %v350, 2
      %v778 = vor.u32 %v776, %v777
      %v779 = vsel %vm756, %v774, %v778
      %v780 = vrot.slane %v362, 1
      %v781 = vrot.slane %v358, 2
      %v782 = vor.u32 %v780, %v781
      %v783 = vsel %vm756, %v778, %v782
      %v784 = vrot.slane %v370, 1
      %v785 = vrot.slane %v366, 2
      %v786 = vor.u32 %v784, %v785
      %v787 = vsel %vm756, %v782, %v786
      %v789 = vshrl.u32 %v669, 16
      %v791 = vrot.slane %v789, 1
      %v792 = vshll.u32 %v669, 16
      %v794 = vrot.slane %v792, 2
      %v795 = vor.u32 %v791, %v794
      %v796 = vsel %vm756, %v786, %v795
      %v798 = vshrl.u32 %v670, 16
      %v800 = vrot.slane %v798, 1
      %v801 = vshll.u32 %v670, 16
      %v803 = vrot.slane %v801, 2
      %v804 = vor.u32 %v800, %v803
      %v805 = vsel %vm756, %v795, %v804
      %v807 = vsel %vm378, %v763, 0
      %v810 = vsel %vm378, %v767, 0
      %v813 = vsel %vm378, %v771, 0
      %v816 = vsel %vm378, %v775, 0
      %v819 = vsel %vm378, %v779, 0
      %v822 = vsel %vm378, %v783, 0
      %v825 = vsel %vm378, %v787, 0
      %v828 = vsel %vm378, %v796, 0
      %v831 = vsel %vm378, %v805, 0
      %v834 = vsel %vm406, %v663, 0
      %836 = vmatpush.bf16.msra.mxu0 0
      %837 = vmatpush.bf16.msra.mxu0 0
      %838 = vmatpush.bf16.msra.mxu0 0
      %839 = vmatpush.bf16.msra.mxu0 0
      %840 = vmatpush.bf16.msra.mxu0 0
      %841 = vmatpush.bf16.msra.mxu0 0
      %842 = vmatpush.bf16.msra.mxu0 0
      %843 = vmatpush.bf16.msra.mxu0 %v834
      %844 = vmatmul.bf16.gmra.mxu0 %v807
      %v845 = vpop.f32.mrf.mxu0
      %v846 = vadd.f32 0.0, %v845
      %v847 = vpop.f32.mrf.mxu0
      %v848 = vadd.f32 0.0, %v847
      %849 = vmatmul.bf16.gmra.mxu0 %v810
      %v850 = vpop.f32.mrf.mxu0
      %v851 = vadd.f32 0.0, %v850
      %v852 = vpop.f32.mrf.mxu0
      %v853 = vadd.f32 0.0, %v852
      %854 = vmatmul.bf16.gmra.mxu0 %v813
      %v855 = vpop.f32.mrf.mxu0
      %v856 = vadd.f32 0.0, %v855
      %v857 = vpop.f32.mrf.mxu0
      %v858 = vadd.f32 0.0, %v857
      %859 = vmatmul.bf16.gmra.mxu0 %v816
      %v860 = vpop.f32.mrf.mxu0
      %v861 = vadd.f32 0.0, %v860
      %v862 = vpop.f32.mrf.mxu0
      %v863 = vadd.f32 0.0, %v862
      %864 = vmatmul.bf16.gmra.mxu0 %v819
      %v865 = vpop.f32.mrf.mxu0
      %v866 = vadd.f32 0.0, %v865
      %v867 = vpop.f32.mrf.mxu0
      %v868 = vadd.f32 0.0, %v867
      %869 = vmatmul.bf16.gmra.mxu0 %v822
      %v870 = vpop.f32.mrf.mxu0
      %v871 = vadd.f32 0.0, %v870
      %v872 = vpop.f32.mrf.mxu0
      %v873 = vadd.f32 0.0, %v872
      %874 = vmatmul.bf16.gmra.mxu0 %v825
      %v875 = vpop.f32.mrf.mxu0
      %v876 = vadd.f32 0.0, %v875
      %v877 = vpop.f32.mrf.mxu0
      %v878 = vadd.f32 0.0, %v877
      %879 = vmatmul.bf16.gmra.mxu0 %v828
      %v880 = vpop.f32.mrf.mxu0
      %v881 = vadd.f32 0.0, %v880
      %v882 = vpop.f32.mrf.mxu0
      %v883 = vadd.f32 0.0, %v882
      %884 = vmatmul.bf16.gmra.mxu0 %v831
      %v885 = vpop.f32.mrf.mxu0
      %v886 = vadd.f32 0.0, %v885
      %v887 = vpop.f32.mrf.mxu0
      %v888 = vadd.f32 0.0, %v887
      %889 = vdwg.mxu0
      %v890 = vadd.f32 %v738, %v846
      %v891 = vadd.f32 %v739, %v848
      %v892 = vadd.f32 %v740, %v851
      %v893 = vadd.f32 %v741, %v853
      %v894 = vadd.f32 %v742, %v856
      %v895 = vadd.f32 %v743, %v858
      %v896 = vadd.f32 %v744, %v861
      %v897 = vadd.f32 %v745, %v863
      %v898 = vadd.f32 %v746, %v866
      %v899 = vadd.f32 %v747, %v868
      %v900 = vadd.f32 %v748, %v871
      %v901 = vadd.f32 %v749, %v873
      %v902 = vadd.f32 %v750, %v876
      %v903 = vadd.f32 %v751, %v878
      %v904 = vadd.f32 %v752, %v881
      %v905 = vadd.f32 %v753, %v883
      %v906 = vadd.f32 %v754, %v886
      %v907 = vadd.f32 %v755, %v888
      %vm908 = vcmask 1045504
      %v909 = vrot.slane %v292, 2
      %v910 = vrot.slane %v293, 2
      %v911 = vsel %vm908, %v909, %v910
      %v912 = vrot.slane %v294, 2
      %v913 = vsel %vm908, %v910, %v912
      %v914 = vrot.slane %v295, 2
      %v915 = vsel %vm908, %v912, %v914
      %v916 = vrot.slane %v296, 2
      %v917 = vsel %vm908, %v914, %v916
      %v918 = vrot.slane %v297, 2
      %v919 = vsel %vm908, %v916, %v918
      %v920 = vrot.slane %v298, 2
      %v921 = vsel %vm908, %v918, %v920
      %v922 = vrot.slane %v299, 2
      %v923 = vsel %vm908, %v920, %v922
      %v924 = vrot.slane %v669, 2
      %v925 = vsel %vm908, %v922, %v924
      %v926 = vrot.slane %v670, 2
      %v927 = vsel %vm908, %v924, %v926
      %v929 = vsel %vm378, %v911, 0
      %v932 = vsel %vm378, %v913, 0
      %v935 = vsel %vm378, %v915, 0
      %v938 = vsel %vm378, %v917, 0
      %v941 = vsel %vm378, %v919, 0
      %v944 = vsel %vm378, %v921, 0
      %v947 = vsel %vm378, %v923, 0
      %v950 = vsel %vm378, %v925, 0
      %v953 = vsel %vm378, %v927, 0
      %v956 = vsel %vm406, %v664, 0
      %958 = vmatpush.bf16.msra.mxu0 0
      %959 = vmatpush.bf16.msra.mxu0 0
      %960 = vmatpush.bf16.msra.mxu0 0
      %961 = vmatpush.bf16.msra.mxu0 0
      %962 = vmatpush.bf16.msra.mxu0 0
      %963 = vmatpush.bf16.msra.mxu0 0
      %964 = vmatpush.bf16.msra.mxu0 0
      %965 = vmatpush.bf16.msra.mxu0 %v956
      %966 = vmatmul.bf16.gmra.mxu0 %v929
      %v967 = vpop.f32.mrf.mxu0
      %v968 = vadd.f32 0.0, %v967
      %v969 = vpop.f32.mrf.mxu0
      %v970 = vadd.f32 0.0, %v969
      %971 = vmatmul.bf16.gmra.mxu0 %v932
      %v972 = vpop.f32.mrf.mxu0
      %v973 = vadd.f32 0.0, %v972
      %v974 = vpop.f32.mrf.mxu0
      %v975 = vadd.f32 0.0, %v974
      %976 = vmatmul.bf16.gmra.mxu0 %v935
      %v977 = vpop.f32.mrf.mxu0
      %v978 = vadd.f32 0.0, %v977
      %v979 = vpop.f32.mrf.mxu0
      %v980 = vadd.f32 0.0, %v979
      %981 = vmatmul.bf16.gmra.mxu0 %v938
      %v982 = vpop.f32.mrf.mxu0
      %v983 = vadd.f32 0.0, %v982
      %v984 = vpop.f32.mrf.mxu0
      %v985 = vadd.f32 0.0, %v984
      %986 = vmatmul.bf16.gmra.mxu0 %v941
      %v987 = vpop.f32.mrf.mxu0
      %v988 = vadd.f32 0.0, %v987
      %v989 = vpop.f32.mrf.mxu0
      %v990 = vadd.f32 0.0, %v989
      %991 = vmatmul.bf16.gmra.mxu0 %v944
      %v992 = vpop.f32.mrf.mxu0
      %v993 = vadd.f32 0.0, %v992
      %v994 = vpop.f32.mrf.mxu0
      %v995 = vadd.f32 0.0, %v994
      %996 = vmatmul.bf16.gmra.mxu0 %v947
      %v997 = vpop.f32.mrf.mxu0
      %v998 = vadd.f32 0.0, %v997
      %v999 = vpop.f32.mrf.mxu0
      %v1000 = vadd.f32 0.0, %v999
      %1001 = vmatmul.bf16.gmra.mxu0 %v950
      %v1002 = vpop.f32.mrf.mxu0
      %v1003 = vadd.f32 0.0, %v1002
      %v1004 = vpop.f32.mrf.mxu0
      %v1005 = vadd.f32 0.0, %v1004
      %1006 = vmatmul.bf16.gmra.mxu0 %v953
      %v1007 = vpop.f32.mrf.mxu0
      %v1008 = vadd.f32 0.0, %v1007
      %v1009 = vpop.f32.mrf.mxu0
      %v1010 = vadd.f32 0.0, %v1009
      %1011 = vdwg.mxu0
      %v1012 = vadd.f32 %v890, %v968
      %v1013 = vadd.f32 %v891, %v970
      %v1014 = vadd.f32 %v892, %v973
      %v1015 = vadd.f32 %v893, %v975
      %v1016 = vadd.f32 %v894, %v978
      %v1017 = vadd.f32 %v895, %v980
      %v1018 = vadd.f32 %v896, %v983
      %v1019 = vadd.f32 %v897, %v985
      %v1020 = vadd.f32 %v898, %v988
      %v1021 = vadd.f32 %v899, %v990
      %v1022 = vadd.f32 %v900, %v993
      %v1023 = vadd.f32 %v901, %v995
      %v1024 = vadd.f32 %v902, %v998
      %v1025 = vadd.f32 %v903, %v1000
      %v1026 = vadd.f32 %v904, %v1003
      %v1027 = vadd.f32 %v905, %v1005
      %v1028 = vadd.f32 %v906, %v1008
      %v1029 = vadd.f32 %v907, %v1010
      %s1030 = scalar_lea.vmem %s1, 24
      %v1031 = vld [vmem:[%s1030] sm:$0xf]
      %v1032 = vld [vmem:[%s1030 + $0x4] sm:$0xf]
      %v1033 = vld [vmem:[%s1030 + $0x8] sm:$0xf]
      %v1036 = vunpack.c.l.b16 %v248
      %v1037 = vunpack.c.l.b16 %v249
      %v1038 = vpack.c.b16 %v1036, %v668
      %v1039 = vpack.c.b16 %v1037, %v1037
      %v1040 = vrot.slane %v1038, 2
      %v1041 = vsel %vm908, %v924, %v1040
      %v1042 = vrot.slane %v1039, 2
      %v1043 = vsel %vm908, %v1040, %v1042
      %v1045 = vsel %vm378, %v1041, 0
      %v1048 = vsel %vm378, %v1043, 0
      %v1051 = vsel %vm406, %v1031, 0
      %1053 = vmatpush.bf16.msra.mxu0 0
      %1054 = vmatpush.bf16.msra.mxu0 0
      %1055 = vmatpush.bf16.msra.mxu0 0
      %1056 = vmatpush.bf16.msra.mxu0 0
      %1057 = vmatpush.bf16.msra.mxu0 0
      %1058 = vmatpush.bf16.msra.mxu0 0
      %1059 = vmatpush.bf16.msra.mxu0 0
      %1060 = vmatpush.bf16.msra.mxu0 %v1051
      %1061 = vmatmul.bf16.gmra.mxu0 %v932
      %v1062 = vpop.f32.mrf.mxu0
      %v1063 = vadd.f32 0.0, %v1062
      %v1064 = vpop.f32.mrf.mxu0
      %v1065 = vadd.f32 0.0, %v1064
      %1066 = vmatmul.bf16.gmra.mxu0 %v935
      %v1067 = vpop.f32.mrf.mxu0
      %v1068 = vadd.f32 0.0, %v1067
      %v1069 = vpop.f32.mrf.mxu0
      %v1070 = vadd.f32 0.0, %v1069
      %1071 = vmatmul.bf16.gmra.mxu0 %v938
      %v1072 = vpop.f32.mrf.mxu0
      %v1073 = vadd.f32 0.0, %v1072
      %v1074 = vpop.f32.mrf.mxu0
      %v1075 = vadd.f32 0.0, %v1074
      %1076 = vmatmul.bf16.gmra.mxu0 %v941
      %v1077 = vpop.f32.mrf.mxu0
      %v1078 = vadd.f32 0.0, %v1077
      %v1079 = vpop.f32.mrf.mxu0
      %v1080 = vadd.f32 0.0, %v1079
      %1081 = vmatmul.bf16.gmra.mxu0 %v944
      %v1082 = vpop.f32.mrf.mxu0
      %v1083 = vadd.f32 0.0, %v1082
      %v1084 = vpop.f32.mrf.mxu0
      %v1085 = vadd.f32 0.0, %v1084
      %1086 = vmatmul.bf16.gmra.mxu0 %v947
      %v1087 = vpop.f32.mrf.mxu0
      %v1088 = vadd.f32 0.0, %v1087
      %v1089 = vpop.f32.mrf.mxu0
      %v1090 = vadd.f32 0.0, %v1089
      %1091 = vmatmul.bf16.gmra.mxu0 %v950
      %v1092 = vpop.f32.mrf.mxu0
      %v1093 = vadd.f32 0.0, %v1092
      %v1094 = vpop.f32.mrf.mxu0
      %v1095 = vadd.f32 0.0, %v1094
      %1096 = vmatmul.bf16.gmra.mxu0 %v1045
      %v1097 = vpop.f32.mrf.mxu0
      %v1098 = vadd.f32 0.0, %v1097
      %v1099 = vpop.f32.mrf.mxu0
      %v1100 = vadd.f32 0.0, %v1099
      %1101 = vmatmul.bf16.gmra.mxu0 %v1048
      %v1102 = vpop.f32.mrf.mxu0
      %v1103 = vadd.f32 0.0, %v1102
      %v1104 = vpop.f32.mrf.mxu0
      %v1105 = vadd.f32 0.0, %v1104
      %1106 = vdwg.mxu0
      %v1107 = vadd.f32 %v1012, %v1063
      %v1108 = vadd.f32 %v1013, %v1065
      %v1109 = vadd.f32 %v1014, %v1068
      %v1110 = vadd.f32 %v1015, %v1070
      %v1111 = vadd.f32 %v1016, %v1073
      %v1112 = vadd.f32 %v1017, %v1075
      %v1113 = vadd.f32 %v1018, %v1078
      %v1114 = vadd.f32 %v1019, %v1080
      %v1115 = vadd.f32 %v1020, %v1083
      %v1116 = vadd.f32 %v1021, %v1085
      %v1117 = vadd.f32 %v1022, %v1088
      %v1118 = vadd.f32 %v1023, %v1090
      %v1119 = vadd.f32 %v1024, %v1093
      %v1120 = vadd.f32 %v1025, %v1095
      %v1121 = vadd.f32 %v1026, %v1098
      %v1122 = vadd.f32 %v1027, %v1100
      %v1123 = vadd.f32 %v1028, %v1103
      %v1124 = vadd.f32 %v1029, %v1105
      %vm1125 = vsmask.f32 5376
      %v1126 = vrot.slane %v322, 2
      %v1127 = vrot.slane %v318, 3
      %v1128 = vor.u32 %v1126, %v1127
      %v1129 = vrot.slane %v330, 2
      %v1130 = vrot.slane %v326, 3
      %v1131 = vor.u32 %v1129, %v1130
      %v1132 = vsel %vm1125, %v1128, %v1131
      %v1133 = vrot.slane %v338, 2
      %v1134 = vrot.slane %v334, 3
      %v1135 = vor.u32 %v1133, %v1134
      %v1136 = vsel %vm1125, %v1131, %v1135
      %v1137 = vrot.slane %v346, 2
      %v1138 = vrot.slane %v342, 3
      %v1139 = vor.u32 %v1137, %v1138
      %v1140 = vsel %vm1125, %v1135, %v1139
      %v1141 = vrot.slane %v354, 2
      %v1142 = vrot.slane %v350, 3
      %v1143 = vor.u32 %v1141, %v1142
      %v1144 = vsel %vm1125, %v1139, %v1143
      %v1145 = vrot.slane %v362, 2
      %v1146 = vrot.slane %v358, 3
      %v1147 = vor.u32 %v1145, %v1146
      %v1148 = vsel %vm1125, %v1143, %v1147
      %v1149 = vrot.slane %v370, 2
      %v1150 = vrot.slane %v366, 3
      %v1151 = vor.u32 %v1149, %v1150
      %v1152 = vsel %vm1125, %v1147, %v1151
      %v1153 = vrot.slane %v789, 2
      %v1154 = vrot.slane %v792, 3
      %v1155 = vor.u32 %v1153, %v1154
      %v1156 = vsel %vm1125, %v1151, %v1155
      %v1158 = vshrl.u32 %v1038, 16
      %v1160 = vrot.slane %v1158, 2
      %v1161 = vshll.u32 %v1038, 16
      %v1163 = vrot.slane %v1161, 3
      %v1164 = vor.u32 %v1160, %v1163
      %v1165 = vsel %vm1125, %v1155, %v1164
      %v1167 = vshrl.u32 %v1039, 16
      %v1169 = vrot.slane %v1167, 2
      %v1170 = vshll.u32 %v1039, 16
      %v1172 = vrot.slane %v1170, 3
      %v1173 = vor.u32 %v1169, %v1172
      %v1174 = vsel %vm1125, %v1164, %v1173
      %v1176 = vsel %vm378, %v1132, 0
      %v1179 = vsel %vm378, %v1136, 0
      %v1182 = vsel %vm378, %v1140, 0
      %v1185 = vsel %vm378, %v1144, 0
      %v1188 = vsel %vm378, %v1148, 0
      %v1191 = vsel %vm378, %v1152, 0
      %v1194 = vsel %vm378, %v1156, 0
      %v1197 = vsel %vm378, %v1165, 0
      %v1200 = vsel %vm378, %v1174, 0
      %v1203 = vsel %vm406, %v1032, 0
      %1205 = vmatpush.bf16.msra.mxu0 0
      %1206 = vmatpush.bf16.msra.mxu0 0
      %1207 = vmatpush.bf16.msra.mxu0 0
      %1208 = vmatpush.bf16.msra.mxu0 0
      %1209 = vmatpush.bf16.msra.mxu0 0
      %1210 = vmatpush.bf16.msra.mxu0 0
      %1211 = vmatpush.bf16.msra.mxu0 0
      %1212 = vmatpush.bf16.msra.mxu0 %v1203
      %1213 = vmatmul.bf16.gmra.mxu0 %v1176
      %v1214 = vpop.f32.mrf.mxu0
      %v1215 = vadd.f32 0.0, %v1214
      %v1216 = vpop.f32.mrf.mxu0
      %v1217 = vadd.f32 0.0, %v1216
      %1218 = vmatmul.bf16.gmra.mxu0 %v1179
      %v1219 = vpop.f32.mrf.mxu0
      %v1220 = vadd.f32 0.0, %v1219
      %v1221 = vpop.f32.mrf.mxu0
      %v1222 = vadd.f32 0.0, %v1221
      %1223 = vmatmul.bf16.gmra.mxu0 %v1182
      %v1224 = vpop.f32.mrf.mxu0
      %v1225 = vadd.f32 0.0, %v1224
      %v1226 = vpop.f32.mrf.mxu0
      %v1227 = vadd.f32 0.0, %v1226
      %1228 = vmatmul.bf16.gmra.mxu0 %v1185
      %v1229 = vpop.f32.mrf.mxu0
      %v1230 = vadd.f32 0.0, %v1229
      %v1231 = vpop.f32.mrf.mxu0
      %v1232 = vadd.f32 0.0, %v1231
      %1233 = vmatmul.bf16.gmra.mxu0 %v1188
      %v1234 = vpop.f32.mrf.mxu0
      %v1235 = vadd.f32 0.0, %v1234
      %v1236 = vpop.f32.mrf.mxu0
      %v1237 = vadd.f32 0.0, %v1236
      %1238 = vmatmul.bf16.gmra.mxu0 %v1191
      %v1239 = vpop.f32.mrf.mxu0
      %v1240 = vadd.f32 0.0, %v1239
      %v1241 = vpop.f32.mrf.mxu0
      %v1242 = vadd.f32 0.0, %v1241
      %1243 = vmatmul.bf16.gmra.mxu0 %v1194
      %v1244 = vpop.f32.mrf.mxu0
      %v1245 = vadd.f32 0.0, %v1244
      %v1246 = vpop.f32.mrf.mxu0
      %v1247 = vadd.f32 0.0, %v1246
      %1248 = vmatmul.bf16.gmra.mxu0 %v1197
      %v1249 = vpop.f32.mrf.mxu0
      %v1250 = vadd.f32 0.0, %v1249
      %v1251 = vpop.f32.mrf.mxu0
      %v1252 = vadd.f32 0.0, %v1251
      %1253 = vmatmul.bf16.gmra.mxu0 %v1200
      %v1254 = vpop.f32.mrf.mxu0
      %v1255 = vadd.f32 0.0, %v1254
      %v1256 = vpop.f32.mrf.mxu0
      %v1257 = vadd.f32 0.0, %v1256
      %1258 = vdwg.mxu0
      %v1259 = vadd.f32 %v1107, %v1215
      %v1260 = vadd.f32 %v1108, %v1217
      %v1261 = vadd.f32 %v1109, %v1220
      %v1262 = vadd.f32 %v1110, %v1222
      %v1263 = vadd.f32 %v1111, %v1225
      %v1264 = vadd.f32 %v1112, %v1227
      %v1265 = vadd.f32 %v1113, %v1230
      %v1266 = vadd.f32 %v1114, %v1232
      %v1267 = vadd.f32 %v1115, %v1235
      %v1268 = vadd.f32 %v1116, %v1237
      %v1269 = vadd.f32 %v1117, %v1240
      %v1270 = vadd.f32 %v1118, %v1242
      %v1271 = vadd.f32 %v1119, %v1245
      %v1272 = vadd.f32 %v1120, %v1247
      %v1273 = vadd.f32 %v1121, %v1250
      %v1274 = vadd.f32 %v1122, %v1252
      %v1275 = vadd.f32 %v1123, %v1255
      %v1276 = vadd.f32 %v1124, %v1257
      %vm1277 = vcmask 1044480
      %v1278 = vrot.slane %v293, 3
      %v1279 = vrot.slane %v294, 3
      %v1280 = vsel %vm1277, %v1278, %v1279
      %v1281 = vrot.slane %v295, 3
      %v1282 = vsel %vm1277, %v1279, %v1281
      %v1283 = vrot.slane %v296, 3
      %v1284 = vsel %vm1277, %v1281, %v1283
      %v1285 = vrot.slane %v297, 3
      %v1286 = vsel %vm1277, %v1283, %v1285
      %v1287 = vrot.slane %v298, 3
      %v1288 = vsel %vm1277, %v1285, %v1287
      %v1289 = vrot.slane %v299, 3
      %v1290 = vsel %vm1277, %v1287, %v1289
      %v1291 = vrot.slane %v669, 3
      %v1292 = vsel %vm1277, %v1289, %v1291
      %v1293 = vrot.slane %v1038, 3
      %v1294 = vsel %vm1277, %v1291, %v1293
      %v1295 = vrot.slane %v1039, 3
      %v1296 = vsel %vm1277, %v1293, %v1295
      %v1298 = vsel %vm378, %v1280, 0
      %v1301 = vsel %vm378, %v1282, 0
      %v1304 = vsel %vm378, %v1284, 0
      %v1307 = vsel %vm378, %v1286, 0
      %v1310 = vsel %vm378, %v1288, 0
      %v1313 = vsel %vm378, %v1290, 0
      %v1316 = vsel %vm378, %v1292, 0
      %v1319 = vsel %vm378, %v1294, 0
      %v1322 = vsel %vm378, %v1296, 0
      %v1325 = vsel %vm406, %v1033, 0
      %1327 = vmatpush.bf16.msra.mxu0 0
      %1328 = vmatpush.bf16.msra.mxu0 0
      %1329 = vmatpush.bf16.msra.mxu0 0
      %1330 = vmatpush.bf16.msra.mxu0 0
      %1331 = vmatpush.bf16.msra.mxu0 0
      %1332 = vmatpush.bf16.msra.mxu0 0
      %1333 = vmatpush.bf16.msra.mxu0 0
      %1334 = vmatpush.bf16.msra.mxu0 %v1325
      %1335 = vmatmul.bf16.gmra.mxu0 %v1298
      %v1336 = vpop.f32.mrf.mxu0
      %v1337 = vadd.f32 0.0, %v1336
      %v1338 = vpop.f32.mrf.mxu0
      %v1339 = vadd.f32 0.0, %v1338
      %1340 = vmatmul.bf16.gmra.mxu0 %v1301
      %v1341 = vpop.f32.mrf.mxu0
      %v1342 = vadd.f32 0.0, %v1341
      %v1343 = vpop.f32.mrf.mxu0
      %v1344 = vadd.f32 0.0, %v1343
      %1345 = vmatmul.bf16.gmra.mxu0 %v1304
      %v1346 = vpop.f32.mrf.mxu0
      %v1347 = vadd.f32 0.0, %v1346
      %v1348 = vpop.f32.mrf.mxu0
      %v1349 = vadd.f32 0.0, %v1348
      %1350 = vmatmul.bf16.gmra.mxu0 %v1307
      %v1351 = vpop.f32.mrf.mxu0
      %v1352 = vadd.f32 0.0, %v1351
      %v1353 = vpop.f32.mrf.mxu0
      %v1354 = vadd.f32 0.0, %v1353
      %1355 = vmatmul.bf16.gmra.mxu0 %v1310
      %v1356 = vpop.f32.mrf.mxu0
      %v1357 = vadd.f32 0.0, %v1356
      %v1358 = vpop.f32.mrf.mxu0
      %v1359 = vadd.f32 0.0, %v1358
      %1360 = vmatmul.bf16.gmra.mxu0 %v1313
      %v1361 = vpop.f32.mrf.mxu0
      %v1362 = vadd.f32 0.0, %v1361
      %v1363 = vpop.f32.mrf.mxu0
      %v1364 = vadd.f32 0.0, %v1363
      %1365 = vmatmul.bf16.gmra.mxu0 %v1316
      %v1366 = vpop.f32.mrf.mxu0
      %v1367 = vadd.f32 0.0, %v1366
      %v1368 = vpop.f32.mrf.mxu0
      %v1369 = vadd.f32 0.0, %v1368
      %1370 = vmatmul.bf16.gmra.mxu0 %v1319
      %v1371 = vpop.f32.mrf.mxu0
      %v1372 = vadd.f32 0.0, %v1371
      %v1373 = vpop.f32.mrf.mxu0
      %v1374 = vadd.f32 0.0, %v1373
      %1375 = vmatmul.bf16.gmra.mxu0 %v1322
      %v1376 = vpop.f32.mrf.mxu0
      %v1377 = vadd.f32 0.0, %v1376
      %v1378 = vpop.f32.mrf.mxu0
      %v1379 = vadd.f32 0.0, %v1378
      %1380 = vdwg.mxu0
      %v1381 = vadd.f32 %v1259, %v1337
      %v1382 = vadd.f32 %v1260, %v1339
      %v1383 = vadd.f32 %v1261, %v1342
      %v1384 = vadd.f32 %v1262, %v1344
      %v1385 = vadd.f32 %v1263, %v1347
      %v1386 = vadd.f32 %v1264, %v1349
      %v1387 = vadd.f32 %v1265, %v1352
      %v1388 = vadd.f32 %v1266, %v1354
      %v1389 = vadd.f32 %v1267, %v1357
      %v1390 = vadd.f32 %v1268, %v1359
      %v1391 = vadd.f32 %v1269, %v1362
      %v1392 = vadd.f32 %v1270, %v1364
      %v1393 = vadd.f32 %v1271, %v1367
      %v1394 = vadd.f32 %v1272, %v1369
      %v1395 = vadd.f32 %v1273, %v1372
      %v1396 = vadd.f32 %v1274, %v1374
      %v1397 = vadd.f32 %v1275, %v1377
      %v1398 = vadd.f32 %v1276, %v1379
      %v1399 = vld [vmem:[%s2] sm:$0x1]
      %v1401 = vperm.slane %v1399, 0
      %v1403 = vmul.f32 %v1381, %v1401
      %v1404 = vmul.f32 %v1382, %v1401
      %v1405 = vmul.f32 %v1383, %v1401
      %v1406 = vmul.f32 %v1384, %v1401
      %v1407 = vmul.f32 %v1385, %v1401
      %v1408 = vmul.f32 %v1386, %v1401
      %v1409 = vmul.f32 %v1387, %v1401
      %v1410 = vmul.f32 %v1388, %v1401
      %v1411 = vmul.f32 %v1389, %v1401
      %v1412 = vmul.f32 %v1390, %v1401
      %v1413 = vmul.f32 %v1391, %v1401
      %v1414 = vmul.f32 %v1392, %v1401
      %v1415 = vmul.f32 %v1393, %v1401
      %v1416 = vmul.f32 %v1394, %v1401
      %v1417 = vmul.f32 %v1395, %v1401
      %v1418 = vmul.f32 %v1396, %v1401
      %v1419 = vmul.f32 %v1397, %v1401
      %v1420 = vmul.f32 %v1398, %v1401
      %v1421 = vld [vmem:[%s3] sm:$0x1]
      %v1423 = vperm.slane %v1421, 0
      %v1425 = vadd.f32 %v1403, %v1423
      %v1426 = vadd.f32 %v1404, %v1423
      %v1427 = vadd.f32 %v1405, %v1423
      %v1428 = vadd.f32 %v1406, %v1423
      %v1429 = vadd.f32 %v1407, %v1423
      %v1430 = vadd.f32 %v1408, %v1423
      %v1431 = vadd.f32 %v1409, %v1423
      %v1432 = vadd.f32 %v1410, %v1423
      %v1433 = vadd.f32 %v1411, %v1423
      %v1434 = vadd.f32 %v1412, %v1423
      %v1435 = vadd.f32 %v1413, %v1423
      %v1436 = vadd.f32 %v1414, %v1423
      %v1437 = vadd.f32 %v1415, %v1423
      %v1438 = vadd.f32 %v1416, %v1423
      %v1439 = vadd.f32 %v1417, %v1423
      %v1440 = vadd.f32 %v1418, %v1423
      %v1441 = vadd.f32 %v1419, %v1423
      %v1442 = vadd.f32 %v1420, %v1423
      %v1443 = vmax.f32 %v1425, 0.0
      %v1444 = vmax.f32 %v1426, 0.0
      %v1445 = vmax.f32 %v1427, 0.0
      %v1446 = vmax.f32 %v1428, 0.0
      %v1447 = vmax.f32 %v1429, 0.0
      %v1448 = vmax.f32 %v1430, 0.0
      %v1449 = vmax.f32 %v1431, 0.0
      %v1450 = vmax.f32 %v1432, 0.0
      %v1451 = vmax.f32 %v1433, 0.0
      %v1452 = vmax.f32 %v1434, 0.0
      %v1453 = vmax.f32 %v1435, 0.0
      %v1454 = vmax.f32 %v1436, 0.0
      %v1455 = vmax.f32 %v1437, 0.0
      %v1456 = vmax.f32 %v1438, 0.0
      %v1457 = vmax.f32 %v1439, 0.0
      %v1458 = vmax.f32 %v1440, 0.0
      %v1459 = vmax.f32 %v1441, 0.0
      %v1460 = vmax.f32 %v1442, 0.0
      %v1461 = vpack.c.bf16 %v1443, %v1443
      %v1462 = vpack.c.bf16 %v1444, %v1444
      %v1463 = vpack.c.bf16 %v1445, %v1445
      %v1464 = vpack.c.bf16 %v1446, %v1446
      %v1465 = vpack.c.bf16 %v1447, %v1447
      %v1466 = vpack.c.bf16 %v1448, %v1448
      %v1467 = vpack.c.bf16 %v1449, %v1449
      %v1468 = vpack.c.bf16 %v1450, %v1450
      %v1469 = vpack.c.bf16 %v1451, %v1451
      %v1470 = vpack.c.bf16 %v1452, %v1452
      %v1471 = vpack.c.bf16 %v1453, %v1453
      %v1472 = vpack.c.bf16 %v1454, %v1454
      %v1473 = vpack.c.bf16 %v1455, %v1455
      %v1474 = vpack.c.bf16 %v1456, %v1456
      %v1475 = vpack.c.bf16 %v1457, %v1457
      %v1476 = vpack.c.bf16 %v1458, %v1458
      %v1477 = vpack.c.bf16 %v1459, %v1459
      %v1478 = vpack.c.bf16 %v1460, %v1460
      %vm1479 = vcmask 60416
      %1480 = vst.msk [vmem:[%s219] sm:$0xf] %vm1479, %v1461
      %1481 = vst.msk [vmem:[%s219 + $0x4] sm:$0xf] %vm1479, %v1462
      %1482 = vst.msk [vmem:[%s219 + $0x8] sm:$0xf] %vm1479, %v1463
      %1483 = vst.msk [vmem:[%s219 + $0xc] sm:$0xf] %vm1479, %v1464
      %1484 = vst.msk [vmem:[%s219 + $0x10] sm:$0xf] %vm1479, %v1465
      %1485 = vst.msk [vmem:[%s219 + $0x14] sm:$0xf] %vm1479, %v1466
      %1486 = vst.msk [vmem:[%s219 + $0x18] sm:$0xf] %vm1479, %v1467
      %1487 = vst.msk [vmem:[%s219 + $0x1c] sm:$0xf] %vm1479, %v1468
      %1488 = vst.msk [vmem:[%s219 + $0x20] sm:$0xf] %vm1479, %v1469
      %1489 = vst.msk [vmem:[%s219 + $0x24] sm:$0xf] %vm1479, %v1470
      %1490 = vst.msk [vmem:[%s219 + $0x28] sm:$0xf] %vm1479, %v1471
      %1491 = vst.msk [vmem:[%s219 + $0x2c] sm:$0xf] %vm1479, %v1472
      %1492 = vst.msk [vmem:[%s219 + $0x30] sm:$0xf] %vm1479, %v1473
      %1493 = vst.msk [vmem:[%s219 + $0x34] sm:$0xf] %vm1479, %v1474
      %1494 = vst.msk [vmem:[%s219 + $0x38] sm:$0xf] %vm1479, %v1475
      %1495 = vst.msk [vmem:[%s219 + $0x3c] sm:$0xf] %vm1479, %v1476
      %1496 = vst.msk [vmem:[%s219 + $0x40] sm:$0xf] %vm1479, %v1477
      %1497 = vst.msk [vmem:[%s219 + $0x44] sm:$0xf] %vm1479, %v1478
      %s1498 = smul.u32 18, %s20
      %p1499 = scmp.lt.s32.totalorder %s19, 1
      %s1500 = scalar_select %p1499, %s19, 1
      %p1501 = scmp.lt.s32.totalorder %s1498, 35
      %s1502 = scalar_select %p1501, %s1498, 35
      %s1503 = smul.addr %s1500, 36
      %s1504 = sadd.s32 %s1502, %s1503
      %s1505 = smul.addr %s1504, 4
      %s1506 = scalar_lea.vmem %s4, %s1505
      // Predicated region
      $region37: #{bottleneck_forward.5} parent=35 // pred_check
        %p1507 = pneg %p136
      $region38: #{bottleneck_forward.5} parent=35 // pred_check_branch
        %1509 = sbr.rel (%p1507) target = $region40
      $region39: #{bottleneck_forward.5} parent=35 // pred_region
        %s1510 = smul.u32 18, %s20
      $region40: #{bottleneck_forward.5} parent=35 // pred_fallthru
        _
    $region36: #{bottleneck_forward.5} parent=5 // pred_fallthru
      _
    %p1511 = scmp.le.s32.totalorder 2, %s10
    // Predicated region
    $region41: #{bottleneck_forward.5} parent=5 // pred_check
      %p1512 = pneg %p1511
    $region42: #{bottleneck_forward.5} parent=5 // pred_check_branch
      %1514 = sbr.rel (%p1512) target = $region44
    $region43: #{bottleneck_forward.5} parent=5 // pred_region
      %s1515 = ssub.s32 %s10, 2
      // Predicated region
      $region45: #{bottleneck_forward.5} parent=43 // pred_check
        %p1516 = pneg %p142
      $region46: #{bottleneck_forward.5} parent=43 // pred_check_branch
        %1518 = sbr.rel (%p1516) target = $region48
      $region47: #{bottleneck_forward.5} parent=43 // pred_region
        %s1519 = smul.u32 18, %s22
        %p1520 = scmp.lt.s32.totalorder %s21, 1
        %s1521 = scalar_select %p1520, %s21, 1
        %p1522 = scmp.lt.s32.totalorder %s1519, 35
        %s1523 = scalar_select %p1522, %s1519, 35
        %s1524 = smul.addr %s1521, 36
        %s1525 = sadd.s32 %s1523, %s1524
        %s1526 = smul.addr %s1525, 4
        %s1527 = scalar_lea.vmem %s4, %s1526
      $region48: #{bottleneck_forward.5} parent=43 // pred_fallthru
        _
    $region44: #{bottleneck_forward.5} parent=5 // pred_fallthru
      _
  $region6: #{bottleneck_forward.5} parent=0 // loop_footer
    %s14 = sadd.s32 1, %s10
  $region7: #{bottleneck_forward.5} parent=0 // loop_footer_branch
    %9 = sbr.rel target = $region3
  $region8: #{bottleneck_forward.5} parent=0 // loop_exit
    _

// kernel: bottleneck_forward.7
$region0: #{bottleneck_forward.7}
  #allocation0 [shape = 'u32[]', space=smem, size = 0x4, offset = 0x4, fixed_abs, tag = 'smem constant byte address 0x4 - core index']
  #allocation1 [shape = 'u32[72,128]{1,0:T(1,128)}', space=vmem, size = 0x9000, scoped, tag = 'internal scratch']
  %s0 = inlined_call_operand.vmem [shape: bf16[512,8], index: 0, kind: input, shape index: {}]
  %s1 = inlined_call_operand.vmem [shape: bf16[8,32], index: 1, kind: input, shape index: {}]
  %s2 = inlined_call_operand.vmem [shape: f32[1,32], index: 2, kind: input, shape index: {}]
  %s3 = inlined_call_operand.vmem [shape: f32[1,32], index: 3, kind: input, shape index: {}]
  %s4 = inlined_call_operand.vmem [shape: bf16[512,32], index: 4, kind: input, shape index: {}]
  %s5 = inlined_call_operand.vmem [shape: bf16[512,32], index: 5, kind: output, shape index: {}]
  %s6 = sld [smem:[#allocation0]]
  $region53: #{bottleneck_forward.7} parent=0
    _
  %s8 = ssub.s32 1, %s6
  %s9 = scalar_select 0, %s8, %s6
  loop: start=0, step=1, limit=4
  $region2: #{bottleneck_forward.7} parent=0 // loop_pre_header
    _
  $region3: #{bottleneck_forward.7} parent=0 // loop_header
    %s11 = sphi 0, %s15
    %p12 = scmp.ge.s32.totalorder %s11, 4
    %s18 = sphi 0, %s30
    %s19 = sphi 0, %s26
    %s20 = sphi 0, %s18
    %s21 = sphi 0, %s19
    %s22 = sphi 0, %s20
    %s23 = sphi 0, %s21
    %s33 = sphi 0, %s35
    %s36 = sphi 0, %s33
    %s37 = sphi 0, %s36
    %s53 = sphi 0, %s37
    %s59 = sphi 0, %s61
    %s62 = sphi 0, %s59
    %s63 = sphi 0, %s62
    %s79 = sphi 0, %s63
    %s85 = sphi 0, %s87
    %s88 = sphi 0, %s85
    %s89 = sphi 0, %s88
    %s105 = sphi 0, %s89
    %s111 = sphi 0, %s113
    %s114 = sphi 0, %s111
    %s115 = sphi 0, %s114
    %s131 = sphi 0, %s115
    %s139 = sphi 0, %s141
    %s142 = sphi 0, %s139
    %s143 = sphi 0, %s142
    %s159 = sphi 0, %s143
    %s167 = sphi 0, %s169
    %s170 = sphi 0, %s167
    %s171 = sphi 0, %s170
    %s187 = sphi 0, %s171
  $region4: #{bottleneck_forward.7} parent=0 // loop_header_branch
    %14 = sbr.rel (%p12) target = $region8
  $region5: #{bottleneck_forward.7} parent=0 // loop_body
    %s16 = ssub.s32 %s11, 1
    %s17 = ssub.s32 %s11, 2
    %s24 = sadd.s32 1, %s19
    %p25 = scmp.ge.s32.totalorder %s24, 1
    %s26 = scalar_select %p25, 0, %s24
    %s27 = sadd.s32 1, %s18
    %s28 = scalar_select %p25, %s27, %s18
    %p29 = scmp.ge.s32.totalorder %s28, 2
    %s30 = scalar_select %p29, 0, %s28
    %s31 = ssub.s32 %s18, %s30
    %p32 = scmp.eq.s32.totalorder %s31, 0
    %s34 = sadd.s32 %s33, 1
    %s35 = scalar_select %p32, %s33, %s34
    %p38 = pneg %p32
    %p39 = scmp.eq.s32.totalorder %s11, 1
    %p40 = por %p38, %p39
    %p41 = scmp.ne.s32.totalorder %s33, %s36
    %p42 = scmp.eq.s32.totalorder %s11, 0
    %p43 = por %p41, %p42
    %p44 = scmp.ne.s32.totalorder %s33, %s36
    %p45 = scmp.eq.s32.totalorder %s16, 1
    %p46 = por %p44, %p45
    %p47 = scmp.ne.s32.totalorder %s36, %s37
    %p48 = scmp.eq.s32.totalorder %s16, 0
    %p49 = por %p47, %p48
    %p50 = scmp.ne.s32.totalorder %s36, %s37
    %p51 = scmp.eq.s32.totalorder %s17, 1
    %p52 = por %p50, %p51
    %p54 = scmp.ne.s32.totalorder %s37, %s53
    %p55 = scmp.eq.s32.totalorder %s17, 0
    %p56 = por %p54, %p55
    %s57 = ssub.s32 %s19, %s26
    %p58 = scmp.eq.s32.totalorder %s57, 0
    %s60 = sadd.s32 %s59, 1
    %s61 = scalar_select %p58, %s59, %s60
    %p64 = pneg %p58
    %p65 = scmp.eq.s32.totalorder %s11, 1
    %p66 = por %p64, %p65
    %p67 = scmp.ne.s32.totalorder %s59, %s62
    %p68 = scmp.eq.s32.totalorder %s11, 0
    %p69 = por %p67, %p68
    %p70 = scmp.ne.s32.totalorder %s59, %s62
    %p71 = scmp.eq.s32.totalorder %s16, 1
    %p72 = por %p70, %p71
    %p73 = scmp.ne.s32.totalorder %s62, %s63
    %p74 = scmp.eq.s32.totalorder %s16, 0
    %p75 = por %p73, %p74
    %p76 = scmp.ne.s32.totalorder %s62, %s63
    %p77 = scmp.eq.s32.totalorder %s17, 1
    %p78 = por %p76, %p77
    %p80 = scmp.ne.s32.totalorder %s63, %s79
    %p81 = scmp.eq.s32.totalorder %s17, 0
    %p82 = por %p80, %p81
    %s83 = ssub.s32 %s19, %s26
    %p84 = scmp.eq.s32.totalorder %s83, 0
    %s86 = sadd.s32 %s85, 1
    %s87 = scalar_select %p84, %s85, %s86
    %p90 = pneg %p84
    %p91 = scmp.eq.s32.totalorder %s11, 1
    %p92 = por %p90, %p91
    %p93 = scmp.ne.s32.totalorder %s85, %s88
    %p94 = scmp.eq.s32.totalorder %s11, 0
    %p95 = por %p93, %p94
    %p96 = scmp.ne.s32.totalorder %s85, %s88
    %p97 = scmp.eq.s32.totalorder %s16, 1
    %p98 = por %p96, %p97
    %p99 = scmp.ne.s32.totalorder %s88, %s89
    %p100 = scmp.eq.s32.totalorder %s16, 0
    %p101 = por %p99, %p100
    %p102 = scmp.ne.s32.totalorder %s88, %s89
    %p103 = scmp.eq.s32.totalorder %s17, 1
    %p104 = por %p102, %p103
    %p106 = scmp.ne.s32.totalorder %s89, %s105
    %p107 = scmp.eq.s32.totalorder %s17, 0
    %p108 = por %p106, %p107
    %s109 = ssub.s32 %s19, %s26
    %p110 = scmp.eq.s32.totalorder %s109, 0
    %s112 = sadd.s32 %s111, 1
    %s113 = scalar_select %p110, %s111, %s112
    %p116 = pneg %p110
    %p117 = scmp.eq.s32.totalorder %s11, 1
    %p118 = por %p116, %p117
    %p119 = scmp.ne.s32.totalorder %s111, %s114
    %p120 = scmp.eq.s32.totalorder %s11, 0
    %p121 = por %p119, %p120
    %p122 = scmp.ne.s32.totalorder %s111, %s114
    %p123 = scmp.eq.s32.totalorder %s16, 1
    %p124 = por %p122, %p123
    %p125 = scmp.ne.s32.totalorder %s114, %s115
    %p126 = scmp.eq.s32.totalorder %s16, 0
    %p127 = por %p125, %p126
    %p128 = scmp.ne.s32.totalorder %s114, %s115
    %p129 = scmp.eq.s32.totalorder %s17, 1
    %p130 = por %p128, %p129
    %p132 = scmp.ne.s32.totalorder %s115, %s131
    %p133 = scmp.eq.s32.totalorder %s17, 0
    %p134 = por %p132, %p133
    %s135 = ssub.s32 %s18, %s30
    %s136 = ssub.s32 %s19, %s26
    %s137 = sor.u32 %s135, %s136
    %p138 = scmp.eq.s32.totalorder %s137, 0
    %s140 = sadd.s32 %s139, 1
    %s141 = scalar_select %p138, %s139, %s140
    %p144 = pneg %p138
    %p145 = scmp.eq.s32.totalorder %s11, 1
    %p146 = por %p144, %p145
    %p147 = scmp.ne.s32.totalorder %s139, %s142
    %p148 = scmp.eq.s32.totalorder %s11, 0
    %p149 = por %p147, %p148
    %p150 = scmp.ne.s32.totalorder %s139, %s142
    %p151 = scmp.eq.s32.totalorder %s16, 1
    %p152 = por %p150, %p151
    %p153 = scmp.ne.s32.totalorder %s142, %s143
    %p154 = scmp.eq.s32.totalorder %s16, 0
    %p155 = por %p153, %p154
    %p156 = scmp.ne.s32.totalorder %s142, %s143
    %p157 = scmp.eq.s32.totalorder %s17, 1
    %p158 = por %p156, %p157
    %p160 = scmp.ne.s32.totalorder %s143, %s159
    %p161 = scmp.eq.s32.totalorder %s17, 0
    %p162 = por %p160, %p161
    %s163 = ssub.s32 %s18, %s30
    %s164 = ssub.s32 %s19, %s26
    %s165 = sor.u32 %s163, %s164
    %p166 = scmp.eq.s32.totalorder %s165, 0
    %s168 = sadd.s32 %s167, 1
    %s169 = scalar_select %p166, %s167, %s168
    %p172 = pneg %p166
    %p173 = scmp.eq.s32.totalorder %s11, 1
    %p174 = por %p172, %p173
    %p175 = scmp.ne.s32.totalorder %s167, %s170
    %p176 = scmp.eq.s32.totalorder %s11, 0
    %p177 = por %p175, %p176
    %p178 = scmp.ne.s32.totalorder %s167, %s170
    %p179 = scmp.eq.s32.totalorder %s16, 1
    %p180 = por %p178, %p179
    %p181 = scmp.ne.s32.totalorder %s170, %s171
    %p182 = scmp.eq.s32.totalorder %s16, 0
    %p183 = por %p181, %p182
    %p184 = scmp.ne.s32.totalorder %s170, %s171
    %p185 = scmp.eq.s32.totalorder %s17, 1
    %p186 = por %p184, %p185
    %p188 = scmp.ne.s32.totalorder %s171, %s187
    %p189 = scmp.eq.s32.totalorder %s17, 0
    %p190 = por %p188, %p189
    %p191 = scmp.le.s32.totalorder 1, %s11
    %p192 = scmp.lt.s32.totalorder %s11, 3
    %p193 = pnand %p191, %p192
    %p194 = pneg %p193
    // Predicated region
    $region9: #{bottleneck_forward.7} parent=5 // pred_check
      _
    $region10: #{bottleneck_forward.7} parent=5 // pred_check_branch
      %196 = sbr.rel (%p193) target = $region12
    $region11: #{bottleneck_forward.7} parent=5 // pred_region
      %s197 = ssub.s32 %s11, 1
      // Predicated region
      $region13: #{bottleneck_forward.7} parent=11 // pred_check
        %p198 = pneg %p75
      $region14: #{bottleneck_forward.7} parent=11 // pred_check_branch
        %200 = sbr.rel (%p198) target = $region16
      $region15: #{bottleneck_forward.7} parent=11 // pred_region
        %p201 = scmp.lt.s32.totalorder %s21, 0
        %s202 = scalar_select %p201, %s21, 0
        %s203 = smul.addr %s202, 4
        %s204 = scalar_lea.vmem %s1, %s203
      $region16: #{bottleneck_forward.7} parent=11 // pred_fallthru
        _
      // Predicated region
      $region17: #{bottleneck_forward.7} parent=11 // pred_check
        %p205 = pneg %p101
      $region18: #{bottleneck_forward.7} parent=11 // pred_check_branch
        %207 = sbr.rel (%p205) target = $region20
      $region19: #{bottleneck_forward.7} parent=11 // pred_region
        %p208 = scmp.lt.s32.totalorder %s21, 0
        %s209 = scalar_select %p208, %s21, 0
        %s210 = scalar_lea.vmem %s2, %s209
      $region20: #{bottleneck_forward.7} parent=11 // pred_fallthru
        _
      // Predicated region
      $region21: #{bottleneck_forward.7} parent=11 // pred_check
        %p211 = pneg %p127
      $region22: #{bottleneck_forward.7} parent=11 // pred_check_branch
        %213 = sbr.rel (%p211) target = $region24
      $region23: #{bottleneck_forward.7} parent=11 // pred_region
        %p214 = scmp.lt.s32.totalorder %s21, 0
        %s215 = scalar_select %p214, %s21, 0
        %s216 = scalar_lea.vmem %s3, %s215
      $region24: #{bottleneck_forward.7} parent=11 // pred_fallthru
        _
    $region12: #{bottleneck_forward.7} parent=5 // pred_fallthru
      _
    %p217 = scmp.lt.s32.totalorder %s11, 2
    // Predicated region
    $region25: #{bottleneck_forward.7} parent=5 // pred_check
      %p218 = pneg %p217
    $region26: #{bottleneck_forward.7} parent=5 // pred_check_branch
      %220 = sbr.rel (%p218) target = $region28
    $region27: #{bottleneck_forward.7} parent=5 // pred_region
      // Predicated region
      $region29: #{bottleneck_forward.7} parent=27 // pred_check
        %p221 = pneg %p43
      $region30: #{bottleneck_forward.7} parent=27 // pred_check_branch
        %223 = sbr.rel (%p221) target = $region32
      $region31: #{bottleneck_forward.7} parent=27 // pred_region
        %s224 = smul.u32 32, %s18
        %p225 = scmp.lt.s32.totalorder %s224, 63
        %s226 = scalar_select %p225, %s224, 63
        %s227 = smul.addr %s226, 4
        %s228 = scalar_lea.vmem %s0, %s227
        %s229 = smul.u32 32, %s18
      $region32: #{bottleneck_forward.7} parent=27 // pred_fallthru
        _
      // Predicated region
      $region33: #{bottleneck_forward.7} parent=27 // pred_check
        %p230 = pneg %p149
      $region34: #{bottleneck_forward.7} parent=27 // pred_check_branch
        %232 = sbr.rel (%p230) target = $region36
      $region35: #{bottleneck_forward.7} parent=27 // pred_region
        %s233 = smul.u32 32, %s18
        %p234 = scmp.lt.s32.totalorder %s233, 63
        %s235 = scalar_select %p234, %s233, 63
        %p236 = scmp.lt.s32.totalorder %s19, 0
        %s237 = scalar_select %p236, %s19, 0
        %s238 = sadd.s32 %s237, %s235
        %s239 = smul.addr %s238, 4
        %s240 = scalar_lea.vmem %s4, %s239
        %s241 = smul.u32 32, %s18
      $region36: #{bottleneck_forward.7} parent=27 // pred_fallthru
        _
    $region28: #{bottleneck_forward.7} parent=5 // pred_fallthru
      _
    %p242 = scmp.le.s32.totalorder 1, %s11
    %p243 = scmp.lt.s32.totalorder %s11, 3
    %p244 = pnand %p242, %p243
    %p245 = pneg %p244
    // Predicated region
    $region37: #{bottleneck_forward.7} parent=5 // pred_check
      _
    $region38: #{bottleneck_forward.7} parent=5 // pred_check_branch
      %247 = sbr.rel (%p244) target = $region40
    $region39: #{bottleneck_forward.7} parent=5 // pred_region
      %s248 = ssub.s32 %s11, 1
      %s249 = smul.u32 32, %s20
      %p250 = scmp.lt.s32.totalorder %s249, 63
      %s251 = scalar_select %p250, %s249, 63
      %s252 = smul.addr %s251, 4
      %s253 = scalar_lea.vmem %s0, %s252
      %p254 = pneg %p49
      %p255 = pneg %p46
      %p256 = scmp.lt.s32.totalorder %s21, 0
      %s257 = scalar_select %p256, %s21, 0
      %s258 = smul.addr %s257, 4
      %s259 = scalar_lea.vmem %s1, %s258
      %p260 = pneg %p75
      %p261 = pneg %p72
      %p262 = scmp.lt.s32.totalorder %s21, 0
      %s263 = scalar_select %p262, %s21, 0
      %s264 = scalar_lea.vmem %s2, %s263
      %p265 = pneg %p101
      %p266 = pneg %p98
      %p267 = scmp.lt.s32.totalorder %s21, 0
      %s268 = scalar_select %p267, %s21, 0
      %s269 = scalar_lea.vmem %s3, %s268
      %p270 = pneg %p127
      %p271 = pneg %p124
      %s272 = smul.u32 32, %s20
      %p273 = scmp.lt.s32.totalorder %s272, 63
      %s274 = scalar_select %p273, %s272, 63
      %p275 = scmp.lt.s32.totalorder %s21, 0
      %s276 = scalar_select %p275, %s21, 0
      %s277 = sadd.s32 %s276, %s274
      %s278 = smul.addr %s277, 4
      %s279 = scalar_lea.vmem %s4, %s278
      %p280 = pneg %p155
      %p281 = pneg %p152
      %p282 = pneg %p183
      %p283 = pneg %p180
      %s284 = smul.u32 32, %s20
      %p285 = scmp.lt.s32.totalorder %s284, 63
      %s286 = scalar_select %p285, %s284, 63
      %p287 = scmp.lt.s32.totalorder %s21, 0
      %s288 = scalar_select %p287, %s21, 0
      %s289 = sadd.s32 %s288, %s286
      %s290 = smul.addr %s289, 4
      %s291 = scalar_lea.vmem %s5, %s290
      %s292 = smul.u32 32, %s20
      %p293 = scmp.lt.s32.totalorder %s292, 63
      %s294 = scalar_select %p293, %s292, 63
      %s295 = smul.addr %s294, 4
      %s296 = scalar_lea.vmem %s0, %s295
      %s297 = smul.u32 32, %s20
      %p298 = scmp.lt.s32.totalorder %s21, 0
      %s299 = scalar_select %p298, %s21, 0
      %s300 = smul.addr %s299, 4
      %s301 = scalar_lea.vmem %s1, %s300
      %p302 = scmp.lt.s32.totalorder %s21, 0
      %s303 = scalar_select %p302, %s21, 0
      %s304 = scalar_lea.vmem %s2, %s303
      %p305 = scmp.lt.s32.totalorder %s21, 0
      %s306 = scalar_select %p305, %s21, 0
      %s307 = scalar_lea.vmem %s3, %s306
      %s308 = smul.u32 32, %s20
      %p309 = scmp.lt.s32.totalorder %s308, 63
      %s310 = scalar_select %p309, %s308, 63
      %p311 = scmp.lt.s32.totalorder %s21, 0
      %s312 = scalar_select %p311, %s21, 0
      %s313 = sadd.s32 %s312, %s310
      %s314 = smul.addr %s313, 4
      %s315 = scalar_lea.vmem %s4, %s314
      %s316 = smul.u32 32, %s20
      %s317 = smul.u32 32, %s20
      %p318 = scmp.lt.s32.totalorder %s317, 63
      %s319 = scalar_select %p318, %s317, 63
      %p320 = scmp.lt.s32.totalorder %s21, 0
      %s321 = scalar_select %p320, %s21, 0
      %s322 = sadd.s32 %s321, %s319
      %s323 = smul.addr %s322, 4
      %s324 = scalar_lea.vmem %s5, %s323
      %s325 = smul.u32 32, %s20
      %v327 = vld [vmem:[%s296] sm:$0xf]
      %v328 = vld [vmem:[%s296 + $0x4] sm:$0xf]
      %v329 = vld [vmem:[%s296 + $0x8] sm:$0xf]
      %v330 = vld [vmem:[%s296 + $0xc] sm:$0xf]
      %v331 = vld [vmem:[%s296 + $0x10] sm:$0xf]
      %v332 = vld [vmem:[%s296 + $0x14] sm:$0xf]
      %v333 = vld [vmem:[%s296 + $0x18] sm:$0xf]
      %v334 = vld [vmem:[%s296 + $0x1c] sm:$0xf]
      %v335 = vld [vmem:[%s296 + $0x20] sm:$0xf]
      %v336 = vld [vmem:[%s296 + $0x24] sm:$0xf]
      %v337 = vld [vmem:[%s296 + $0x28] sm:$0xf]
      %v338 = vld [vmem:[%s296 + $0x2c] sm:$0xf]
      %v339 = vld [vmem:[%s296 + $0x30] sm:$0xf]
      %v340 = vld [vmem:[%s296 + $0x34] sm:$0xf]
      %v341 = vld [vmem:[%s296 + $0x38] sm:$0xf]
      %v342 = vld [vmem:[%s296 + $0x3c] sm:$0xf]
      %v343 = vld [vmem:[%s296 + $0x40] sm:$0xf]
      %v344 = vld [vmem:[%s296 + $0x44] sm:$0xf]
      %v345 = vld [vmem:[%s296 + $0x48] sm:$0xf]
      %v346 = vld [vmem:[%s296 + $0x4c] sm:$0xf]
      %v347 = vld [vmem:[%s296 + $0x50] sm:$0xf]
      %v348 = vld [vmem:[%s296 + $0x54] sm:$0xf]
      %v349 = vld [vmem:[%s296 + $0x58] sm:$0xf]
      %v350 = vld [vmem:[%s296 + $0x5c] sm:$0xf]
      %v351 = vld [vmem:[%s296 + $0x60] sm:$0xf]
      %v352 = vld [vmem:[%s296 + $0x64] sm:$0xf]
      %v353 = vld [vmem:[%s296 + $0x68] sm:$0xf]
      %v354 = vld [vmem:[%s296 + $0x6c] sm:$0xf]
      %v355 = vld [vmem:[%s296 + $0x70] sm:$0xf]
      %v356 = vld [vmem:[%s296 + $0x74] sm:$0xf]
      %v357 = vld [vmem:[%s296 + $0x78] sm:$0xf]
      %v358 = vld [vmem:[%s296 + $0x7c] sm:$0xf]
      %v359 = vld [vmem:[%s301] sm:$0xf]
      %v392 = vunpack.c.l.b16 %v327
      %v393 = vunpack.c.l.b16 %v328
      %v394 = vunpack.c.l.b16 %v329
      %v395 = vunpack.c.l.b16 %v330
      %v396 = vunpack.c.l.b16 %v331
      %v397 = vunpack.c.l.b16 %v332
      %v398 = vunpack.c.l.b16 %v333
      %v399 = vunpack.c.l.b16 %v334
      %v400 = vunpack.c.l.b16 %v335
      %v401 = vunpack.c.l.b16 %v336
      %v402 = vunpack.c.l.b16 %v337
      %v403 = vunpack.c.l.b16 %v338
      %v404 = vunpack.c.l.b16 %v339
      %v405 = vunpack.c.l.b16 %v340
      %v406 = vunpack.c.l.b16 %v341
      %v407 = vunpack.c.l.b16 %v342
      %v408 = vunpack.c.l.b16 %v343
      %v409 = vunpack.c.l.b16 %v344
      %v410 = vunpack.c.l.b16 %v345
      %v411 = vunpack.c.l.b16 %v346
      %v412 = vunpack.c.l.b16 %v347
      %v413 = vunpack.c.l.b16 %v348
      %v414 = vunpack.c.l.b16 %v349
      %v415 = vunpack.c.l.b16 %v350
      %v416 = vunpack.c.l.b16 %v351
      %v417 = vunpack.c.l.b16 %v352
      %v418 = vunpack.c.l.b16 %v353
      %v419 = vunpack.c.l.b16 %v354
      %v420 = vunpack.c.l.b16 %v355
      %v421 = vunpack.c.l.b16 %v356
      %v422 = vunpack.c.l.b16 %v357
      %v423 = vunpack.c.l.b16 %v358
      %v424 = vpack.c.b16 %v393, %v392
      %v425 = vpack.c.b16 %v395, %v394
      %v426 = vpack.c.b16 %v397, %v396
      %v427 = vpack.c.b16 %v399, %v398
      %v428 = vpack.c.b16 %v401, %v400
      %v429 = vpack.c.b16 %v403, %v402
      %v430 = vpack.c.b16 %v405, %v404
      %v431 = vpack.c.b16 %v407, %v406
      %v432 = vpack.c.b16 %v409, %v408
      %v433 = vpack.c.b16 %v411, %v410
      %v434 = vpack.c.b16 %v413, %v412
      %v435 = vpack.c.b16 %v415, %v414
      %v436 = vpack.c.b16 %v417, %v416
      %v437 = vpack.c.b16 %v419, %v418
      %v438 = vpack.c.b16 %v421, %v420
      %v439 = vpack.c.b16 %v423, %v422
      %vm440 = vcmask 64512
      %v442 = vsel %vm440, %v424, 0
      %v445 = vsel %vm440, %v425, 0
      %v448 = vsel %vm440, %v426, 0
      %v451 = vsel %vm440, %v427, 0
      %v454 = vsel %vm440, %v428, 0
      %v457 = vsel %vm440, %v429, 0
      %v460 = vsel %vm440, %v430, 0
      %v463 = vsel %vm440, %v431, 0
      %v466 = vsel %vm440, %v432, 0
      %v469 = vsel %vm440, %v433, 0
      %v472 = vsel %vm440, %v434, 0
      %v475 = vsel %vm440, %v435, 0
      %v478 = vsel %vm440, %v436, 0
      %v481 = vsel %vm440, %v437, 0
      %v484 = vsel %vm440, %v438, 0
      %v487 = vsel %vm440, %v439, 0
      %vm489 = vcmask 1043456
      %v491 = vsel %vm489, %v359, 0
      %493 = vmatpush.bf16.msra.mxu0 0
      %494 = vmatpush.bf16.msra.mxu0 0
      %495 = vmatpush.bf16.msra.mxu0 0
      %496 = vmatpush.bf16.msra.mxu0 0
      %497 = vmatpush.bf16.msra.mxu0 0
      %498 = vmatpush.bf16.msra.mxu0 0
      %499 = vmatpush.bf16.msra.mxu0 0
      %500 = vmatpush.bf16.msra.mxu0 %v491
      %501 = vmatmul.bf16.gmra.mxu0 %v442
      %v502 = vpop.f32.mrf.mxu0
      %v503 = vadd.f32 0.0, %v502
      %v504 = vpop.f32.mrf.mxu0
      %v505 = vadd.f32 0.0, %v504
      %506 = vmatmul.bf16.gmra.mxu0 %v445
      %v507 = vpop.f32.mrf.mxu0
      %v508 = vadd.f32 0.0, %v507
      %v509 = vpop.f32.mrf.mxu0
      %v510 = vadd.f32 0.0, %v509
      %511 = vmatmul.bf16.gmra.mxu0 %v448
      %v512 = vpop.f32.mrf.mxu0
      %v513 = vadd.f32 0.0, %v512
      %v514 = vpop.f32.mrf.mxu0
      %v515 = vadd.f32 0.0, %v514
      %516 = vmatmul.bf16.gmra.mxu0 %v451
      %v517 = vpop.f32.mrf.mxu0
      %v518 = vadd.f32 0.0, %v517
      %v519 = vpop.f32.mrf.mxu0
      %v520 = vadd.f32 0.0, %v519
      %521 = vmatmul.bf16.gmra.mxu0 %v454
      %v522 = vpop.f32.mrf.mxu0
      %v523 = vadd.f32 0.0, %v522
      %v524 = vpop.f32.mrf.mxu0
      %v525 = vadd.f32 0.0, %v524
      %526 = vmatmul.bf16.gmra.mxu0 %v457
      %v527 = vpop.f32.mrf.mxu0
      %v528 = vadd.f32 0.0, %v527
      %v529 = vpop.f32.mrf.mxu0
      %v530 = vadd.f32 0.0, %v529
      %531 = vmatmul.bf16.gmra.mxu0 %v460
      %v532 = vpop.f32.mrf.mxu0
      %v533 = vadd.f32 0.0, %v532
      %v534 = vpop.f32.mrf.mxu0
      %v535 = vadd.f32 0.0, %v534
      %536 = vmatmul.bf16.gmra.mxu0 %v463
      %v537 = vpop.f32.mrf.mxu0
      %v538 = vadd.f32 0.0, %v537
      %v539 = vpop.f32.mrf.mxu0
      %v540 = vadd.f32 0.0, %v539
      %541 = vmatmul.bf16.gmra.mxu0 %v466
      %v542 = vpop.f32.mrf.mxu0
      %v543 = vadd.f32 0.0, %v542
      %v544 = vpop.f32.mrf.mxu0
      %v545 = vadd.f32 0.0, %v544
      %546 = vmatmul.bf16.gmra.mxu0 %v469
      %v547 = vpop.f32.mrf.mxu0
      %v548 = vadd.f32 0.0, %v547
      %v549 = vpop.f32.mrf.mxu0
      %v550 = vadd.f32 0.0, %v549
      %551 = vmatmul.bf16.gmra.mxu0 %v472
      %v552 = vpop.f32.mrf.mxu0
      %v553 = vadd.f32 0.0, %v552
      %v554 = vpop.f32.mrf.mxu0
      %v555 = vadd.f32 0.0, %v554
      %556 = vmatmul.bf16.gmra.mxu0 %v475
      %v557 = vpop.f32.mrf.mxu0
      %v558 = vadd.f32 0.0, %v557
      %v559 = vpop.f32.mrf.mxu0
      %v560 = vadd.f32 0.0, %v559
      %561 = vmatmul.bf16.gmra.mxu0 %v478
      %v562 = vpop.f32.mrf.mxu0
      %v563 = vadd.f32 0.0, %v562
      %v564 = vpop.f32.mrf.mxu0
      %v565 = vadd.f32 0.0, %v564
      %566 = vmatmul.bf16.gmra.mxu0 %v481
      %v567 = vpop.f32.mrf.mxu0
      %v568 = vadd.f32 0.0, %v567
      %v569 = vpop.f32.mrf.mxu0
      %v570 = vadd.f32 0.0, %v569
      %571 = vmatmul.bf16.gmra.mxu0 %v484
      %v572 = vpop.f32.mrf.mxu0
      %v573 = vadd.f32 0.0, %v572
      %v574 = vpop.f32.mrf.mxu0
      %v575 = vadd.f32 0.0, %v574
      %576 = vmatmul.bf16.gmra.mxu0 %v487
      %v577 = vpop.f32.mrf.mxu0
      %v578 = vadd.f32 0.0, %v577
      %v579 = vpop.f32.mrf.mxu0
      %v580 = vadd.f32 0.0, %v579
      %581 = vdwg.mxu0
      %v582 = vld [vmem:[%s304] sm:$0x1]
      %v584 = vperm.slane %v582, 0
      %v586 = vmul.f32 %v503, %v584
      %v587 = vmul.f32 %v505, %v584
      %v588 = vmul.f32 %v508, %v584
      %v589 = vmul.f32 %v510, %v584
      %v590 = vmul.f32 %v513, %v584
      %v591 = vmul.f32 %v515, %v584
      %v592 = vmul.f32 %v518, %v584
      %v593 = vmul.f32 %v520, %v584
      %v594 = vmul.f32 %v523, %v584
      %v595 = vmul.f32 %v525, %v584
      %v596 = vmul.f32 %v528, %v584
      %v597 = vmul.f32 %v530, %v584
      %v598 = vmul.f32 %v533, %v584
      %v599 = vmul.f32 %v535, %v584
      %v600 = vmul.f32 %v538, %v584
      %v601 = vmul.f32 %v540, %v584
      %v602 = vmul.f32 %v543, %v584
      %v603 = vmul.f32 %v545, %v584
      %v604 = vmul.f32 %v548, %v584
      %v605 = vmul.f32 %v550, %v584
      %v606 = vmul.f32 %v553, %v584
      %v607 = vmul.f32 %v555, %v584
      %v608 = vmul.f32 %v558, %v584
      %v609 = vmul.f32 %v560, %v584
      %v610 = vmul.f32 %v563, %v584
      %v611 = vmul.f32 %v565, %v584
      %v612 = vmul.f32 %v568, %v584
      %v613 = vmul.f32 %v570, %v584
      %v614 = vmul.f32 %v573, %v584
      %v615 = vmul.f32 %v575, %v584
      %v616 = vmul.f32 %v578, %v584
      %v617 = vmul.f32 %v580, %v584
      %v618 = vld [vmem:[%s307] sm:$0x1]
      %v620 = vperm.slane %v618, 0
      %v622 = vadd.f32 %v586, %v620
      %v623 = vadd.f32 %v587, %v620
      %v624 = vadd.f32 %v588, %v620
      %v625 = vadd.f32 %v589, %v620
      %v626 = vadd.f32 %v590, %v620
      %v627 = vadd.f32 %v591, %v620
      %v628 = vadd.f32 %v592, %v620
      %v629 = vadd.f32 %v593, %v620
      %v630 = vadd.f32 %v594, %v620
      %v631 = vadd.f32 %v595, %v620
      %v632 = vadd.f32 %v596, %v620
      %v633 = vadd.f32 %v597, %v620
      %v634 = vadd.f32 %v598, %v620
      %v635 = vadd.f32 %v599, %v620
      %v636 = vadd.f32 %v600, %v620
      %v637 = vadd.f32 %v601, %v620
      %v638 = vadd.f32 %v602, %v620
      %v639 = vadd.f32 %v603, %v620
      %v640 = vadd.f32 %v604, %v620
      %v641 = vadd.f32 %v605, %v620
      %v642 = vadd.f32 %v606, %v620
      %v643 = vadd.f32 %v607, %v620
      %v644 = vadd.f32 %v608, %v620
      %v645 = vadd.f32 %v609, %v620
      %v646 = vadd.f32 %v610, %v620
      %v647 = vadd.f32 %v611, %v620
      %v648 = vadd.f32 %v612, %v620
      %v649 = vadd.f32 %v613, %v620
      %v650 = vadd.f32 %v614, %v620
      %v651 = vadd.f32 %v615, %v620
      %v652 = vadd.f32 %v616, %v620
      %v653 = vadd.f32 %v617, %v620
      %v654 = vld [vmem:[%s315] sm:$0xf]
      %v655 = vld [vmem:[%s315 + $0x4] sm:$0xf]
      %v656 = vld [vmem:[%s315 + $0x8] sm:$0xf]
      %v657 = vld [vmem:[%s315 + $0xc] sm:$0xf]
      %v658 = vld [vmem:[%s315 + $0x10] sm:$0xf]
      %v659 = vld [vmem:[%s315 + $0x14] sm:$0xf]
      %v660 = vld [vmem:[%s315 + $0x18] sm:$0xf]
      %v661 = vld [vmem:[%s315 + $0x1c] sm:$0xf]
      %v662 = vld [vmem:[%s315 + $0x20] sm:$0xf]
      %v663 = vld [vmem:[%s315 + $0x24] sm:$0xf]
      %v664 = vld [vmem:[%s315 + $0x28] sm:$0xf]
      %v665 = vld [vmem:[%s315 + $0x2c] sm:$0xf]
      %v666 = vld [vmem:[%s315 + $0x30] sm:$0xf]
      %v667 = vld [vmem:[%s315 + $0x34] sm:$0xf]
      %v668 = vld [vmem:[%s315 + $0x38] sm:$0xf]
      %v669 = vld [vmem:[%s315 + $0x3c] sm:$0xf]
      %v670 = vld [vmem:[%s315 + $0x40] sm:$0xf]
      %v671 = vld [vmem:[%s315 + $0x44] sm:$0xf]
      %v672 = vld [vmem:[%s315 + $0x48] sm:$0xf]
      %v673 = vld [vmem:[%s315 + $0x4c] sm:$0xf]
      %v674 = vld [vmem:[%s315 + $0x50] sm:$0xf]
      %v675 = vld [vmem:[%s315 + $0x54] sm:$0xf]
      %v676 = vld [vmem:[%s315 + $0x58] sm:$0xf]
      %v677 = vld [vmem:[%s315 + $0x5c] sm:$0xf]
      %v678 = vld [vmem:[%s315 + $0x60] sm:$0xf]
      %v679 = vld [vmem:[%s315 + $0x64] sm:$0xf]
      %v680 = vld [vmem:[%s315 + $0x68] sm:$0xf]
      %v681 = vld [vmem:[%s315 + $0x6c] sm:$0xf]
      %v682 = vld [vmem:[%s315 + $0x70] sm:$0xf]
      %v683 = vld [vmem:[%s315 + $0x74] sm:$0xf]
      %v684 = vld [vmem:[%s315 + $0x78] sm:$0xf]
      %v685 = vld [vmem:[%s315 + $0x7c] sm:$0xf]
      %v686 = vunpack.c.l.bf16 %v654
      %v687 = vunpack.c.l.bf16 %v655
      %v688 = vunpack.c.l.bf16 %v656
      %v689 = vunpack.c.l.bf16 %v657
      %v690 = vunpack.c.l.bf16 %v658
      %v691 = vunpack.c.l.bf16 %v659
      %v692 = vunpack.c.l.bf16 %v660
      %v693 = vunpack.c.l.bf16 %v661
      %v694 = vunpack.c.l.bf16 %v662
      %v695 = vunpack.c.l.bf16 %v663
      %v696 = vunpack.c.l.bf16 %v664
      %v697 = vunpack.c.l.bf16 %v665
      %v698 = vunpack.c.l.bf16 %v666
      %v699 = vunpack.c.l.bf16 %v667
      %v700 = vunpack.c.l.bf16 %v668
      %v701 = vunpack.c.l.bf16 %v669
      %v702 = vunpack.c.l.bf16 %v670
      %v703 = vunpack.c.l.bf16 %v671
      %v704 = vunpack.c.l.bf16 %v672
      %v705 = vunpack.c.l.bf16 %v673
      %v706 = vunpack.c.l.bf16 %v674
      %v707 = vunpack.c.l.bf16 %v675
      %v708 = vunpack.c.l.bf16 %v676
      %v709 = vunpack.c.l.bf16 %v677
      %v710 = vunpack.c.l.bf16 %v678
      %v711 = vunpack.c.l.bf16 %v679
      %v712 = vunpack.c.l.bf16 %v680
      %v713 = vunpack.c.l.bf16 %v681
      %v714 = vunpack.c.l.bf16 %v682
      %v715 = vunpack.c.l.bf16 %v683
      %v716 = vunpack.c.l.bf16 %v684
      %v717 = vunpack.c.l.bf16 %v685
      %v718 = vadd.f32 %v622, %v686
      %v719 = vadd.f32 %v623, %v687
      %v720 = vadd.f32 %v624, %v688
      %v721 = vadd.f32 %v625, %v689
      %v722 = vadd.f32 %v626, %v690
      %v723 = vadd.f32 %v627, %v691
      %v724 = vadd.f32 %v628, %v692
      %v725 = vadd.f32 %v629, %v693
      %v726 = vadd.f32 %v630, %v694
      %v727 = vadd.f32 %v631, %v695
      %v728 = vadd.f32 %v632, %v696
      %v729 = vadd.f32 %v633, %v697
      %v730 = vadd.f32 %v634, %v698
      %v731 = vadd.f32 %v635, %v699
      %v732 = vadd.f32 %v636, %v700
      %v733 = vadd.f32 %v637, %v701
      %v734 = vadd.f32 %v638, %v702
      %v735 = vadd.f32 %v639, %v703
      %v736 = vadd.f32 %v640, %v704
      %v737 = vadd.f32 %v641, %v705
      %v738 = vadd.f32 %v642, %v706
      %v739 = vadd.f32 %v643, %v707
      %v740 = vadd.f32 %v644, %v708
      %v741 = vadd.f32 %v645, %v709
      %v742 = vadd.f32 %v646, %v710
      %v743 = vadd.f32 %v647, %v711
      %v744 = vadd.f32 %v648, %v712
      %v745 = vadd.f32 %v649, %v713
      %v746 = vadd.f32 %v650, %v714
      %v747 = vadd.f32 %v651, %v715
      %v748 = vadd.f32 %v652, %v716
      %v749 = vadd.f32 %v653, %v717
      %v750 = vmax.f32 %v718, 0.0
      %v751 = vmax.f32 %v719, 0.0
      %v752 = vmax.f32 %v720, 0.0
      %v753 = vmax.f32 %v721, 0.0
      %v754 = vmax.f32 %v722, 0.0
      %v755 = vmax.f32 %v723, 0.0
      %v756 = vmax.f32 %v724, 0.0
      %v757 = vmax.f32 %v725, 0.0
      %v758 = vmax.f32 %v726, 0.0
      %v759 = vmax.f32 %v727, 0.0
      %v760 = vmax.f32 %v728, 0.0
      %v761 = vmax.f32 %v729, 0.0
      %v762 = vmax.f32 %v730, 0.0
      %v763 = vmax.f32 %v731, 0.0
      %v764 = vmax.f32 %v732, 0.0
      %v765 = vmax.f32 %v733, 0.0
      %v766 = vmax.f32 %v734, 0.0
      %v767 = vmax.f32 %v735, 0.0
      %v768 = vmax.f32 %v736, 0.0
      %v769 = vmax.f32 %v737, 0.0
      %v770 = vmax.f32 %v738, 0.0
      %v771 = vmax.f32 %v739, 0.0
      %v772 = vmax.f32 %v740, 0.0
      %v773 = vmax.f32 %v741, 0.0
      %v774 = vmax.f32 %v742, 0.0
      %v775 = vmax.f32 %v743, 0.0
      %v776 = vmax.f32 %v744, 0.0
      %v777 = vmax.f32 %v745, 0.0
      %v778 = vmax.f32 %v746, 0.0
      %v779 = vmax.f32 %v747, 0.0
      %v780 = vmax.f32 %v748, 0.0
      %v781 = vmax.f32 %v749, 0.0
      %v782 = vpack.c.bf16 %v750, %v750
      %v783 = vpack.c.bf16 %v751, %v751
      %v784 = vpack.c.bf16 %v752, %v752
      %v785 = vpack.c.bf16 %v753, %v753
      %v786 = vpack.c.bf16 %v754, %v754
      %v787 = vpack.c.bf16 %v755, %v755
      %v788 = vpack.c.bf16 %v756, %v756
      %v789 = vpack.c.bf16 %v757, %v757
      %v790 = vpack.c.bf16 %v758, %v758
      %v791 = vpack.c.bf16 %v759, %v759
      %v792 = vpack.c.bf16 %v760, %v760
      %v793 = vpack.c.bf16 %v761, %v761
      %v794 = vpack.c.bf16 %v762, %v762
      %v795 = vpack.c.bf16 %v763, %v763
      %v796 = vpack.c.bf16 %v764, %v764
      %v797 = vpack.c.bf16 %v765, %v765
      %v798 = vpack.c.bf16 %v766, %v766
      %v799 = vpack.c.bf16 %v767, %v767
      %v800 = vpack.c.bf16 %v768, %v768
      %v801 = vpack.c.bf16 %v769, %v769
      %v802 = vpack.c.bf16 %v770, %v770
      %v803 = vpack.c.bf16 %v771, %v771
      %v804 = vpack.c.bf16 %v772, %v772
      %v805 = vpack.c.bf16 %v773, %v773
      %v806 = vpack.c.bf16 %v774, %v774
      %v807 = vpack.c.bf16 %v775, %v775
      %v808 = vpack.c.bf16 %v776, %v776
      %v809 = vpack.c.bf16 %v777, %v777
      %v810 = vpack.c.bf16 %v778, %v778
      %v811 = vpack.c.bf16 %v779, %v779
      %v812 = vpack.c.bf16 %v780, %v780
      %v813 = vpack.c.bf16 %v781, %v781
      %vm814 = vcmask 257024
      %815 = vst.msk [vmem:[%s324] sm:$0xf] %vm814, %v782
      %816 = vst.msk [vmem:[%s324 + $0x4] sm:$0xf] %vm814, %v783
      %817 = vst.msk [vmem:[%s324 + $0x8] sm:$0xf] %vm814, %v784
      %818 = vst.msk [vmem:[%s324 + $0xc] sm:$0xf] %vm814, %v785
      %819 = vst.msk [vmem:[%s324 + $0x10] sm:$0xf] %vm814, %v786
      %820 = vst.msk [vmem:[%s324 + $0x14] sm:$0xf] %vm814, %v787
      %821 = vst.msk [vmem:[%s324 + $0x18] sm:$0xf] %vm814, %v788
      %822 = vst.msk [vmem:[%s324 + $0x1c] sm:$0xf] %vm814, %v789
      %823 = vst.msk [vmem:[%s324 + $0x20] sm:$0xf] %vm814, %v790
      %824 = vst.msk [vmem:[%s324 + $0x24] sm:$0xf] %vm814, %v791
      %825 = vst.msk [vmem:[%s324 + $0x28] sm:$0xf] %vm814, %v792
      %826 = vst.msk [vmem:[%s324 + $0x2c] sm:$0xf] %vm814, %v793
      %827 = vst.msk [vmem:[%s324 + $0x30] sm:$0xf] %vm814, %v794
      %828 = vst.msk [vmem:[%s324 + $0x34] sm:$0xf] %vm814, %v795
      %829 = vst.msk [vmem:[%s324 + $0x38] sm:$0xf] %vm814, %v796
      %830 = vst.msk [vmem:[%s324 + $0x3c] sm:$0xf] %vm814, %v797
      %831 = vst.msk [vmem:[%s324 + $0x40] sm:$0xf] %vm814, %v798
      %832 = vst.msk [vmem:[%s324 + $0x44] sm:$0xf] %vm814, %v799
      %833 = vst.msk [vmem:[%s324 + $0x48] sm:$0xf] %vm814, %v800
      %834 = vst.msk [vmem:[%s324 + $0x4c] sm:$0xf] %vm814, %v801
      %835 = vst.msk [vmem:[%s324 + $0x50] sm:$0xf] %vm814, %v802
      %836 = vst.msk [vmem:[%s324 + $0x54] sm:$0xf] %vm814, %v803
      %837 = vst.msk [vmem:[%s324 + $0x58] sm:$0xf] %vm814, %v804
      %838 = vst.msk [vmem:[%s324 + $0x5c] sm:$0xf] %vm814, %v805
      %839 = vst.msk [vmem:[%s324 + $0x60] sm:$0xf] %vm814, %v806
      %840 = vst.msk [vmem:[%s324 + $0x64] sm:$0xf] %vm814, %v807
      %841 = vst.msk [vmem:[%s324 + $0x68] sm:$0xf] %vm814, %v808
      %842 = vst.msk [vmem:[%s324 + $0x6c] sm:$0xf] %vm814, %v809
      %843 = vst.msk [vmem:[%s324 + $0x70] sm:$0xf] %vm814, %v810
      %844 = vst.msk [vmem:[%s324 + $0x74] sm:$0xf] %vm814, %v811
      %845 = vst.msk [vmem:[%s324 + $0x78] sm:$0xf] %vm814, %v812
      %846 = vst.msk [vmem:[%s324 + $0x7c] sm:$0xf] %vm814, %v813
      %s847 = smul.u32 32, %s20
      %p848 = scmp.lt.s32.totalorder %s847, 63
      %s849 = scalar_select %p848, %s847, 63
      %p850 = scmp.lt.s32.totalorder %s21, 0
      %s851 = scalar_select %p850, %s21, 0
      %s852 = sadd.s32 %s851, %s849
      %s853 = smul.addr %s852, 4
      %s854 = scalar_lea.vmem %s5, %s853
      // Predicated region
      $region41: #{bottleneck_forward.7} parent=39 // pred_check
        %p855 = pneg %p180
      $region42: #{bottleneck_forward.7} parent=39 // pred_check_branch
        %857 = sbr.rel (%p855) target = $region44
      $region43: #{bottleneck_forward.7} parent=39 // pred_region
        %s858 = smul.u32 32, %s20
      $region44: #{bottleneck_forward.7} parent=39 // pred_fallthru
        _
    $region40: #{bottleneck_forward.7} parent=5 // pred_fallthru
      _
    %p859 = scmp.le.s32.totalorder 2, %s11
    // Predicated region
    $region45: #{bottleneck_forward.7} parent=5 // pred_check
      %p860 = pneg %p859
    $region46: #{bottleneck_forward.7} parent=5 // pred_check_branch
      %862 = sbr.rel (%p860) target = $region48
    $region47: #{bottleneck_forward.7} parent=5 // pred_region
      %s863 = ssub.s32 %s11, 2
      // Predicated region
      $region49: #{bottleneck_forward.7} parent=47 // pred_check
        %p864 = pneg %p186
      $region50: #{bottleneck_forward.7} parent=47 // pred_check_branch
        %866 = sbr.rel (%p864) target = $region52
      $region51: #{bottleneck_forward.7} parent=47 // pred_region
        %s867 = smul.u32 32, %s22
        %p868 = scmp.lt.s32.totalorder %s867, 63
        %s869 = scalar_select %p868, %s867, 63
        %p870 = scmp.lt.s32.totalorder %s23, 0
        %s871 = scalar_select %p870, %s23, 0
        %s872 = sadd.s32 %s871, %s869
        %s873 = smul.addr %s872, 4
        %s874 = scalar_lea.vmem %s5, %s873
      $region52: #{bottleneck_forward.7} parent=47 // pred_fallthru
        _
    $region48: #{bottleneck_forward.7} parent=5 // pred_fallthru
      _
  $region6: #{bottleneck_forward.7} parent=0 // loop_footer
    %s15 = sadd.s32 1, %s11
  $region7: #{bottleneck_forward.7} parent=0 // loop_footer_branch
    %10 = sbr.rel target = $region3
  $region8: #{bottleneck_forward.7} parent=0 // loop_exit
    _

</llo_original>
